<compile_context>
chip_gen: v6e
topology: v6e:2x2x1
jax: 0.10.0
libtpu: 0.0.40
codegen_flags: <defaults>
</compile_context>

<pallas_src>
import jax
import jax.numpy as jnp
import numpy as np
from jax.experimental import pallas as pl
from jax.experimental.pallas import tpu as pltpu

# ---- module hyper-params (match GroupedQueryAttention defaults, small dim) ----
DIM = 32           # model dim D
NUM_HEADS = 8
NUM_KV_HEADS = 2
HEAD_DIM = 64
SCALE = HEAD_DIM ** (-0.5)
B = 2
L = 8              # sequence length


def rotary_emb_table(seq_len, head_dim):
    """RotaryEmbedding.forward: emb = cat(freqs, freqs), shape (L, head_dim).

    The PyTorch module takes (emb.real, emb.imag) of a *real* tensor: .real is
    emb itself and .imag is zero.
    TODO(synk): keep the zero interpretation (cos = emb, sin = 0), matching the
    previously validated reference semantics.
    """
    inv_freq = 1.0 / (10000.0 ** (jnp.arange(0, head_dim, 2, dtype=jnp.float32) / head_dim))
    t = jnp.arange(seq_len, dtype=jnp.float32)
    freqs = jnp.einsum('i,j->ij', t, inv_freq)
    emb = jnp.concatenate([freqs, freqs], axis=-1)
    return emb, jnp.zeros_like(emb)


def gqa_kernel(x_ref, w_qkv_ref, wo_ref, cos_ref, o_ref):
    H, G, HD, D = NUM_HEADS, NUM_KV_HEADS, HEAD_DIM, DIM
    rep = H // G
    C = H + 2 * G
    N = B * L                        # all batches' rows folded onto the sublane axis

    x2 = x_ref[...]                  # (N, D)
    cos = cos_ref[...]               # (N, HD), row-matched to x2

    # Fused QKV projection: one batched contraction against the stacked
    # (H+2G, D, HD) weight slab (attention scale pre-folded into the q slices).
    # A single explicit broadcast of the tiny (N, D) activation is kept because
    # rank-mismatched implicit-broadcast einsums are not a supported Mosaic
    # dot_general pattern; it is ~C copies of a 2 KiB tile.
    xb = jnp.broadcast_to(x2[None], (C, N, D))
    qkv = jnp.einsum('cnd,cdk->cnk', xb, w_qkv_ref[...],
                     preferred_element_type=jnp.float32)        # (C, N, HD)

    # Rotary embedding with sin == 0: q*cos + rotate_half(q)*sin reduces to a
    # single cos multiply, applied to the q and k slices of the slab at once.
    qk = qkv[:H + G] * cos[None]                                # (H+G, N, HD)
    q = qk[:H]                                                  # (H, N, HD)
    k = qk[H:]                                                  # (G, N, HD)
    v = qkv[H + G:]                                             # (G, N, HD)

    # repeat_interleave of K/V groups to H heads along the leading axis
    # (tile copies only, no lane movement).
    k = jnp.broadcast_to(k[:, None], (G, rep, N, HD)).reshape(H, N, HD)
    v = jnp.broadcast_to(v[:, None], (G, rep, N, HD)).reshape(H, N, HD)

    # Split batch back out of the row axis (contiguous leading-dim reshape).
    Z = H * B
    q = q.reshape(Z, L, HD)
    k = k.reshape(Z, L, HD)
    v = v.reshape(Z, L, HD)

    # Scaled dot-product attention (scale already folded into q), batched over
    # Z = heads * batch (attention_mask=None path).
    s = jnp.einsum('zqd,zkd->zqk', q, k,
                   preferred_element_type=jnp.float32)          # (Z, L, L)
    s = s - jnp.max(s, axis=-1, keepdims=True)
    p = jnp.exp(s)
    attn = p * pl.reciprocal(jnp.sum(p, axis=-1, keepdims=True), approx=True)
    # TODO(synk): nn.Dropout(0.1) on attn -- identity in eval mode; training
    # parity would need pltpu.prng_seed / prng_random_bits.
    o = jnp.einsum('zqk,zkd->zqd', attn, v,
                   preferred_element_type=jnp.float32)          # (Z, L, HD)

    # Output projection: heads are laid lane-adjacent (N, H*HD) and the head
    # reduction is contracted as the K dimension of a single 2-D MXU matmul --
    # no (H, N, D) intermediate, no leading-axis VPU head sum.
    o = o.reshape(H, N, HD)
    o_cat = jnp.concatenate([o[h] for h in range(H)], axis=-1)  # (N, H*HD)
    o_ref[...] = jnp.dot(o_cat, wo_ref[...],
                         preferred_element_type=jnp.float32)    # (N, D)


def gqa_forward(x, wq, wk, wv, wo):
    Bn, Ln, Dn = x.shape
    N = Bn * Ln
    C = NUM_HEADS + 2 * NUM_KV_HEADS
    cos, _sin = rotary_emb_table(Ln, HEAD_DIM)      # sin is identically zero
    cos_full = jnp.tile(cos, (Bn, 1))               # (B*L, HD), row-matched to x2
    x2 = x.reshape(N, Dn)

    # One-time weight prep (done once per model in practice):
    #  * heads / kv-groups stacked on one leading axis -> single fused QKV einsum
    #  * attention scale folded into the q slices (commutes with the cos multiply)
    #  * wo kept as the flat (H*hd, D) slab so the head sum is the matmul K dim.
    wq_h = (wq * SCALE).reshape(Dn, NUM_HEADS, HEAD_DIM).transpose(1, 0, 2)   # (H, D, hd)
    wk_h = wk.reshape(Dn, NUM_KV_HEADS, HEAD_DIM).transpose(1, 0, 2)          # (G, D, hd)
    wv_h = wv.reshape(Dn, NUM_KV_HEADS, HEAD_DIM).transpose(1, 0, 2)          # (G, D, hd)
    w_qkv = jnp.concatenate([wq_h, wk_h, wv_h], axis=0)                       # (C, D, hd)

    out2 = pl.pallas_call(
        gqa_kernel,
        out_shape=jax.ShapeDtypeStruct((N, Dn), jnp.float32),
        grid=(1,),
        in_specs=[
            pl.BlockSpec((N, Dn), lambda i: (0, 0)),
            pl.BlockSpec((C, Dn, HEAD_DIM), lambda i: (0, 0, 0)),
            pl.BlockSpec((NUM_HEADS * HEAD_DIM, Dn), lambda i: (0, 0)),
            pl.BlockSpec((N, HEAD_DIM), lambda i: (0, 0)),
        ],
        out_specs=pl.BlockSpec((N, Dn), lambda i: (0, 0)),
        compiler_params=pltpu.CompilerParams(dimension_semantics=("arbitrary",)),
    )(x2, w_qkv, wo, cos_full)
    return out2.reshape(Bn, Ln, Dn)


def gqa_reference(x, wq, wk, wv, wo):
    """Pure-JAX mirror of the PyTorch forward (same .real/.imag interpretation)."""
    Bn, Ln, Dn = x.shape
    cos, sin = rotary_emb_table(Ln, HEAD_DIM)
    cos = cos[None, :, None, :]
    sin = sin[None, :, None, :]
    q = (x @ wq).reshape(Bn, Ln, NUM_HEADS, HEAD_DIM)
    k = (x @ wk).reshape(Bn, Ln, NUM_KV_HEADS, HEAD_DIM)
    v = (x @ wv).reshape(Bn, Ln, NUM_KV_HEADS, HEAD_DIM)

    def rot_half(t):
        h = t.shape[-1] // 2
        return jnp.concatenate([-t[..., h:], t[..., :h]], axis=-1)

    q = q * cos + rot_half(q) * sin
    k = k * cos + rot_half(k) * sin
    rep = NUM_HEADS // NUM_KV_HEADS
    k = jnp.repeat(k, rep, axis=2)
    v = jnp.repeat(v, rep, axis=2)
    qh = jnp.transpose(q, (0, 2, 1, 3))
    kh = jnp.transpose(k, (0, 2, 1, 3))
    vh = jnp.transpose(v, (0, 2, 1, 3))
    attn = jnp.einsum('bhqd,bhkd->bhqk', qh, kh) * SCALE
    attn = jax.nn.softmax(attn, axis=-1)
    out = jnp.einsum('bhqk,bhkd->bhqd', attn, vh)
    out = jnp.transpose(out, (0, 2, 1, 3)).reshape(Bn, Ln, NUM_HEADS * HEAD_DIM)
    return out @ wo


if __name__ == "__main__":
    key = jax.random.PRNGKey(0)
    kx, kq, kk, kv, ko = jax.random.split(key, 5)
    x = jax.random.normal(kx, (B, L, DIM), dtype=jnp.float32)
    # Deterministic synthetic weights (nn.Linear with bias=False), stored (in, out)
    wq = 0.02 * jax.random.normal(kq, (DIM, NUM_HEADS * HEAD_DIM), dtype=jnp.float32)
    wk = 0.02 * jax.random.normal(kk, (DIM, NUM_KV_HEADS * HEAD_DIM), dtype=jnp.float32)
    wv = 0.02 * jax.random.normal(kv, (DIM, NUM_KV_HEADS * HEAD_DIM), dtype=jnp.float32)
    wo = 0.02 * jax.random.normal(ko, (NUM_HEADS * HEAD_DIM, DIM), dtype=jnp.float32)

    out = gqa_forward(x, wq, wk, wv, wo)
    out = jax.block_until_ready(out)

    ref = gqa_reference(x, wq, wk, wv, wo)
    np.testing.assert_allclose(np.asarray(out), np.asarray(ref), rtol=2e-2, atol=2e-3)
    print("KERNEL_OK")
</pallas_src>

<mosaic_0001>
module attributes {stable_mosaic.version = 11 : i64} {
  func.func @gqa_kernel(%arg0: i32, %arg1: memref<16x32xf32, #tpu.memory_space<vmem>>, %arg2: memref<12x32x64xf32, #tpu.memory_space<vmem>>, %arg3: memref<512x32xf32, #tpu.memory_space<vmem>>, %arg4: memref<16x64xf32, #tpu.memory_space<vmem>>, %arg5: memref<16x32xf32, #tpu.memory_space<vmem>>) attributes {dimension_semantics = [#tpu.dimension_semantics<arbitrary>], iteration_bounds = array<i64: 1>, scalar_prefetch = 0 : i64, scratch_operands = 0 : i64, tpu.core_type = #tpu.core_type<tc>, window_params = [{pipeline_mode = #tpu.pipeline_mode<synchronous>, transform_indices = @transform_0, window_bounds = array<i64: 16, 32>}, {pipeline_mode = #tpu.pipeline_mode<synchronous>, transform_indices = @transform_1, window_bounds = array<i64: 12, 32, 64>}, {pipeline_mode = #tpu.pipeline_mode<synchronous>, transform_indices = @transform_2, window_bounds = array<i64: 512, 32>}, {pipeline_mode = #tpu.pipeline_mode<synchronous>, transform_indices = @transform_3, window_bounds = array<i64: 16, 64>}, {pipeline_mode = #tpu.pipeline_mode<synchronous>, transform_indices = @transform_4, window_bounds = array<i64: 16, 32>}]} {
    %c0 = arith.constant 0 : index
    %c0_0 = arith.constant 0 : index
    %0 = vector.load %arg1[%c0, %c0_0] : memref<16x32xf32, #tpu.memory_space<vmem>>, vector<16x32xf32>
    %c0_1 = arith.constant 0 : index
    %c0_2 = arith.constant 0 : index
    %1 = vector.load %arg4[%c0_1, %c0_2] : memref<16x64xf32, #tpu.memory_space<vmem>>, vector<16x64xf32>
    %2 = vector.shape_cast %0 : vector<16x32xf32> to vector<1x16x32xf32>
    %3 = vector.shape_cast %2 : vector<1x16x32xf32> to vector<1x16x32xf32>
    %4 = vector.broadcast %3 : vector<1x16x32xf32> to vector<12x16x32xf32>
    %c0_3 = arith.constant 0 : index
    %c0_4 = arith.constant 0 : index
    %c0_5 = arith.constant 0 : index
    %5 = vector.load %arg2[%c0_3, %c0_4, %c0_5] : memref<12x32x64xf32, #tpu.memory_space<vmem>>, vector<12x32x64xf32>
    "tpu.trace_start"() <{level = 10 : i32, message = "cnd,cdk->cnk"}> : () -> ()
    %cst = arith.constant dense<0.000000e+00> : vector<12x16x64xf32>
    %6 = tpu.matmul %4, %5, %cst {dimension_numbers = #tpu.dot_dimension_numbers<[2], [1], [1], [2], [0, 0, 0, 1, 1, 2], [0], [0]>} : vector<12x16x32xf32>, vector<12x32x64xf32>, vector<12x16x64xf32> -> vector<12x16x64xf32>
    "tpu.trace_stop"() : () -> ()
    %7 = vector.extract_strided_slice %6 {offsets = [0, 0, 0], sizes = [10, 16, 64], strides = [1, 1, 1]} : vector<12x16x64xf32> to vector<10x16x64xf32>
    %8 = vector.shape_cast %1 : vector<16x64xf32> to vector<1x16x64xf32>
    %9 = vector.broadcast %8 : vector<1x16x64xf32> to vector<10x16x64xf32>
    %10 = arith.mulf %7, %9 : vector<10x16x64xf32>
    %11 = vector.extract_strided_slice %10 {offsets = [0, 0, 0], sizes = [8, 16, 64], strides = [1, 1, 1]} : vector<10x16x64xf32> to vector<8x16x64xf32>
    %12 = vector.extract_strided_slice %10 {offsets = [8, 0, 0], sizes = [2, 16, 64], strides = [1, 1, 1]} : vector<10x16x64xf32> to vector<2x16x64xf32>
    %13 = vector.extract_strided_slice %6 {offsets = [10, 0, 0], sizes = [2, 16, 64], strides = [1, 1, 1]} : vector<12x16x64xf32> to vector<2x16x64xf32>
    %14 = vector.shape_cast %12 : vector<2x16x64xf32> to vector<2x1x16x64xf32>
    %15 = vector.shape_cast %14 : vector<2x1x16x64xf32> to vector<2x1x16x64xf32>
    %16 = vector.broadcast %15 : vector<2x1x16x64xf32> to vector<2x4x16x64xf32>
    %17 = vector.shape_cast %16 : vector<2x4x16x64xf32> to vector<8x16x64xf32>
    %18 = vector.shape_cast %13 : vector<2x16x64xf32> to vector<2x1x16x64xf32>
    %19 = vector.shape_cast %18 : vector<2x1x16x64xf32> to vector<2x1x16x64xf32>
    %20 = vector.broadcast %19 : vector<2x1x16x64xf32> to vector<2x4x16x64xf32>
    %21 = vector.shape_cast %20 : vector<2x4x16x64xf32> to vector<8x16x64xf32>
    %22 = vector.shape_cast %11 : vector<8x16x64xf32> to vector<16x8x64xf32>
    %23 = vector.shape_cast %17 : vector<8x16x64xf32> to vector<16x8x64xf32>
    %24 = vector.shape_cast %21 : vector<8x16x64xf32> to vector<16x8x64xf32>
    "tpu.trace_start"() <{level = 10 : i32, message = "zqd,zkd->zqk"}> : () -> ()
    %cst_6 = arith.constant dense<0.000000e+00> : vector<16x8x8xf32>
    %25 = tpu.matmul %22, %23, %cst_6 {dimension_numbers = #tpu.dot_dimension_numbers<[2], [2], [1], [1], [0, 0, 0, 1, 1, 1], [0], [0]>} : vector<16x8x64xf32>, vector<16x8x64xf32>, vector<16x8x8xf32> -> vector<16x8x8xf32>
    "tpu.trace_stop"() : () -> ()
    %cst_7 = arith.constant dense<0xFF800000> : vector<16x8xf32>
    %26 = vector.multi_reduction <maximumf>, %25, %cst_7 [2] : vector<16x8x8xf32> to vector<16x8xf32>
    %27 = vector.shape_cast %26 : vector<16x8xf32> to vector<16x8x1xf32>
    %28 = vector.broadcast %27 : vector<16x8x1xf32> to vector<16x8x8xf32>
    %29 = arith.subf %25, %28 : vector<16x8x8xf32>
    %30 = math.exp %29 : vector<16x8x8xf32>
    %cst_8 = arith.constant dense<0.000000e+00> : vector<16x8xf32>
    %31 = vector.multi_reduction <add>, %30, %cst_8 [2] : vector<16x8x8xf32> to vector<16x8xf32>
    %32 = vector.shape_cast %31 : vector<16x8xf32> to vector<16x8x1xf32>
    %33 = tpu.reciprocal %32 {approx = true} : vector<16x8x1xf32> -> vector<16x8x1xf32>
    %34 = vector.broadcast %33 : vector<16x8x1xf32> to vector<16x8x8xf32>
    %35 = arith.mulf %30, %34 : vector<16x8x8xf32>
    "tpu.trace_start"() <{level = 10 : i32, message = "zqk,zkd->zqd"}> : () -> ()
    %cst_9 = arith.constant dense<0.000000e+00> : vector<16x8x64xf32>
    %36 = tpu.matmul %35, %24, %cst_9 {dimension_numbers = #tpu.dot_dimension_numbers<[2], [1], [1], [2], [0, 0, 0, 1, 1, 2], [0], [0]>} : vector<16x8x8xf32>, vector<16x8x64xf32>, vector<16x8x64xf32> -> vector<16x8x64xf32>
    "tpu.trace_stop"() : () -> ()
    %37 = vector.shape_cast %36 : vector<16x8x64xf32> to vector<8x16x64xf32>
    %38 = vector.extract_strided_slice %37 {offsets = [0, 0, 0], sizes = [1, 16, 64], strides = [1, 1, 1]} : vector<8x16x64xf32> to vector<1x16x64xf32>
    %39 = vector.shape_cast %38 : vector<1x16x64xf32> to vector<16x64xf32>
    %40 = vector.extract_strided_slice %37 {offsets = [1, 0, 0], sizes = [1, 16, 64], strides = [1, 1, 1]} : vector<8x16x64xf32> to vector<1x16x64xf32>
    %41 = vector.shape_cast %40 : vector<1x16x64xf32> to vector<16x64xf32>
    %42 = vector.extract_strided_slice %37 {offsets = [2, 0, 0], sizes = [1, 16, 64], strides = [1, 1, 1]} : vector<8x16x64xf32> to vector<1x16x64xf32>
    %43 = vector.shape_cast %42 : vector<1x16x64xf32> to vector<16x64xf32>
    %44 = vector.extract_strided_slice %37 {offsets = [3, 0, 0], sizes = [1, 16, 64], strides = [1, 1, 1]} : vector<8x16x64xf32> to vector<1x16x64xf32>
    %45 = vector.shape_cast %44 : vector<1x16x64xf32> to vector<16x64xf32>
    %46 = vector.extract_strided_slice %37 {offsets = [4, 0, 0], sizes = [1, 16, 64], strides = [1, 1, 1]} : vector<8x16x64xf32> to vector<1x16x64xf32>
    %47 = vector.shape_cast %46 : vector<1x16x64xf32> to vector<16x64xf32>
    %48 = vector.extract_strided_slice %37 {offsets = [5, 0, 0], sizes = [1, 16, 64], strides = [1, 1, 1]} : vector<8x16x64xf32> to vector<1x16x64xf32>
    %49 = vector.shape_cast %48 : vector<1x16x64xf32> to vector<16x64xf32>
    %50 = vector.extract_strided_slice %37 {offsets = [6, 0, 0], sizes = [1, 16, 64], strides = [1, 1, 1]} : vector<8x16x64xf32> to vector<1x16x64xf32>
    %51 = vector.shape_cast %50 : vector<1x16x64xf32> to vector<16x64xf32>
    %52 = vector.extract_strided_slice %37 {offsets = [7, 0, 0], sizes = [1, 16, 64], strides = [1, 1, 1]} : vector<8x16x64xf32> to vector<1x16x64xf32>
    %53 = vector.shape_cast %52 : vector<1x16x64xf32> to vector<16x64xf32>
    %54 = tpu.concatenate %39, %41, %43, %45, %47, %49, %51, %53 in 1 : vector<16x64xf32>, vector<16x64xf32>, vector<16x64xf32>, vector<16x64xf32>, vector<16x64xf32>, vector<16x64xf32>, vector<16x64xf32>, vector<16x64xf32> -> vector<16x512xf32>
    %c0_10 = arith.constant 0 : index
    %c0_11 = arith.constant 0 : index
    %55 = vector.load %arg3[%c0_10, %c0_11] : memref<512x32xf32, #tpu.memory_space<vmem>>, vector<512x32xf32>
    %cst_12 = arith.constant dense<0.000000e+00> : vector<16x32xf32>
    %56 = tpu.matmul %54, %55, %cst_12 {dimension_numbers = #tpu.dot_dimension_numbers<[1], [0], [0], [1], [0, 0, 1, 1], [], []>} : vector<16x512xf32>, vector<512x32xf32>, vector<16x32xf32> -> vector<16x32xf32>
    %c0_13 = arith.constant 0 : index
    %c0_14 = arith.constant 0 : index
    %57 = vector.load %arg5[%c0_13, %c0_14] : memref<16x32xf32, #tpu.memory_space<vmem>>, vector<16x32xf32>
    tpu.vector_store %arg5[%c0_13, %c0_14], %56 {strides = array<i32>} : memref<16x32xf32, #tpu.memory_space<vmem>>, vector<16x32xf32>,
    return
  }
  func.func @transform_0(%arg0: i32) -> (i32, i32) {
    %c0_i32 = arith.constant 0 : i32
    %c0_i32_0 = arith.constant 0 : i32
    %c0_i32_1 = arith.constant 0 : i32
    return %c0_i32, %c0_i32_0 : i32, i32
  }
  func.func @transform_1(%arg0: i32) -> (i32, i32, i32) {
    %c0_i32 = arith.constant 0 : i32
    %c0_i32_0 = arith.constant 0 : i32
    %c0_i32_1 = arith.constant 0 : i32
    %c0_i32_2 = arith.constant 0 : i32
    return %c0_i32, %c0_i32_0, %c0_i32_1 : i32, i32, i32
  }
  func.func @transform_2(%arg0: i32) -> (i32, i32) {
    %c0_i32 = arith.constant 0 : i32
    %c0_i32_0 = arith.constant 0 : i32
    %c0_i32_1 = arith.constant 0 : i32
    return %c0_i32, %c0_i32_0 : i32, i32
  }
  func.func @transform_3(%arg0: i32) -> (i32, i32) {
    %c0_i32 = arith.constant 0 : i32
    %c0_i32_0 = arith.constant 0 : i32
    %c0_i32_1 = arith.constant 0 : i32
    return %c0_i32, %c0_i32_0 : i32, i32
  }
  func.func @transform_4(%arg0: i32) -> (i32, i32) {
    %c0_i32 = arith.constant 0 : i32
    %c0_i32_0 = arith.constant 0 : i32
    %c0_i32_1 = arith.constant 0 : i32
    return %c0_i32, %c0_i32_0 : i32, i32
  }
}

</mosaic_0001>

<llo_original>
// kernel: tpu_custom_call.1
$region0: #{tpu_custom_call.1}
  #allocation0 [shape = 'u32[]', space=smem, size = 0x4, offset = 0x4, fixed_abs, tag = 'smem constant byte address 0x4 - core index']
  #allocation1 [shape = 'u32[144,128]{1,0:T(1,128)}', space=vmem, size = 0x12000, scoped, tag = 'internal scratch']
  %s0 = inlined_call_operand.vmem [shape: f32[16,32], index: 0, kind: input, shape index: {}]
  %s1 = inlined_call_operand.vmem [shape: f32[12,32,64], index: 1, kind: input, shape index: {}]
  %s2 = inlined_call_operand.vmem [shape: f32[512,32], index: 2, kind: input, shape index: {}]
  %s3 = inlined_call_operand.vmem [shape: f32[16,64], index: 3, kind: input, shape index: {}]
  %s4 = inlined_call_operand.hbm [shape: f32[16,32], index: 4, kind: output, shape index: {}]
  %s5 = sld [smem:[#allocation0]]
  $region26: #{tpu_custom_call.1} parent=0
    _
  %s7 = ssub.s32 1, %s5
  %s8 = scalar_select 0, %s7, %s5
  $region1: #{tpu_custom_call.1} parent=0
    #allocation2 [shape = 'u8[8192]{0}', space=vmem, size = 0x2000, scoped, tag = 'output window, operand 0, single buffered']
    #allocation3 [shape = 's32[1]{0}', space=sflag, size = 0x4, scoped, tag = 'scoped memory for tpu_custom_call.1']
    %9 = vsyncpa [#allocation3], 0
    // Predicated region
    $region2: #{tpu_custom_call.1} parent=1 // pred_check
      _
    $region3: #{tpu_custom_call.1} parent=1 // pred_check_branch
      %11 = sbr.rel (0) target = $region5
    $region4: #{tpu_custom_call.1} parent=1 // pred_region
      _
    $region5: #{tpu_custom_call.1} parent=1 // pred_fallthru
      _
    // Predicated region
    $region6: #{tpu_custom_call.1} parent=1 // pred_check
      _
    $region7: #{tpu_custom_call.1} parent=1 // pred_check_branch
      %13 = sbr.rel (0) target = $region9
    $region8: #{tpu_custom_call.1} parent=1 // pred_region
      _
    $region9: #{tpu_custom_call.1} parent=1 // pred_fallthru
      _
    // Predicated region
    $region10: #{tpu_custom_call.1} parent=1 // pred_check
      _
    $region11: #{tpu_custom_call.1} parent=1 // pred_check_branch
      %15 = sbr.rel (0) target = $region13
    $region12: #{tpu_custom_call.1} parent=1 // pred_region
      _
    $region13: #{tpu_custom_call.1} parent=1 // pred_fallthru
      _
    // Predicated region
    $region14: #{tpu_custom_call.1} parent=1 // pred_check
      _
    $region15: #{tpu_custom_call.1} parent=1 // pred_check_branch
      %17 = sbr.rel (0) target = $region17
    $region16: #{tpu_custom_call.1} parent=1 // pred_region
      _
    $region17: #{tpu_custom_call.1} parent=1 // pred_fallthru
      _
    %v18 = vld [vmem:[%s0] sm:$0xff]
    %v19 = vld [vmem:[%s0 + $0x8] sm:$0xff]
    %v20 = vld [vmem:[%s3] sm:$0xff]
    %v21 = vld [vmem:[%s3 + $0x8] sm:$0xff]
    %v22 = vld [vmem:[%s1] sm:$0xff]
    %v23 = vld [vmem:[%s1 + $0x8] sm:$0xff]
    %v24 = vld [vmem:[%s1 + $0x10] sm:$0xff]
    %v25 = vld [vmem:[%s1 + $0x18] sm:$0xff]
    %v26 = vld [vmem:[%s1 + $0x20] sm:$0xff]
    %v27 = vld [vmem:[%s1 + $0x28] sm:$0xff]
    %v28 = vld [vmem:[%s1 + $0x30] sm:$0xff]
    %v29 = vld [vmem:[%s1 + $0x38] sm:$0xff]
    %v30 = vld [vmem:[%s1 + $0x40] sm:$0xff]
    %v31 = vld [vmem:[%s1 + $0x48] sm:$0xff]
    %v32 = vld [vmem:[%s1 + $0x50] sm:$0xff]
    %v33 = vld [vmem:[%s1 + $0x58] sm:$0xff]
    %v34 = vld [vmem:[%s1 + $0x60] sm:$0xff]
    %v35 = vld [vmem:[%s1 + $0x68] sm:$0xff]
    %v36 = vld [vmem:[%s1 + $0x70] sm:$0xff]
    %v37 = vld [vmem:[%s1 + $0x78] sm:$0xff]
    %v38 = vld [vmem:[%s1 + $0x80] sm:$0xff]
    %v39 = vld [vmem:[%s1 + $0x88] sm:$0xff]
    %v40 = vld [vmem:[%s1 + $0x90] sm:$0xff]
    %v41 = vld [vmem:[%s1 + $0x98] sm:$0xff]
    %v42 = vld [vmem:[%s1 + $0xa0] sm:$0xff]
    %v43 = vld [vmem:[%s1 + $0xa8] sm:$0xff]
    %v44 = vld [vmem:[%s1 + $0xb0] sm:$0xff]
    %v45 = vld [vmem:[%s1 + $0xb8] sm:$0xff]
    %v46 = vld [vmem:[%s1 + $0xc0] sm:$0xff]
    %v47 = vld [vmem:[%s1 + $0xc8] sm:$0xff]
    %v48 = vld [vmem:[%s1 + $0xd0] sm:$0xff]
    %v49 = vld [vmem:[%s1 + $0xd8] sm:$0xff]
    %v50 = vld [vmem:[%s1 + $0xe0] sm:$0xff]
    %v51 = vld [vmem:[%s1 + $0xe8] sm:$0xff]
    %v52 = vld [vmem:[%s1 + $0xf0] sm:$0xff]
    %v53 = vld [vmem:[%s1 + $0xf8] sm:$0xff]
    %v54 = vld [vmem:[%s1 + $0x100] sm:$0xff]
    %v55 = vld [vmem:[%s1 + $0x108] sm:$0xff]
    %v56 = vld [vmem:[%s1 + $0x110] sm:$0xff]
    %v57 = vld [vmem:[%s1 + $0x118] sm:$0xff]
    %v58 = vld [vmem:[%s1 + $0x120] sm:$0xff]
    %v59 = vld [vmem:[%s1 + $0x128] sm:$0xff]
    %v60 = vld [vmem:[%s1 + $0x130] sm:$0xff]
    %v61 = vld [vmem:[%s1 + $0x138] sm:$0xff]
    %v62 = vld [vmem:[%s1 + $0x140] sm:$0xff]
    %v63 = vld [vmem:[%s1 + $0x148] sm:$0xff]
    %v64 = vld [vmem:[%s1 + $0x150] sm:$0xff]
    %v65 = vld [vmem:[%s1 + $0x158] sm:$0xff]
    %v66 = vld [vmem:[%s1 + $0x160] sm:$0xff]
    %v67 = vld [vmem:[%s1 + $0x168] sm:$0xff]
    %v68 = vld [vmem:[%s1 + $0x170] sm:$0xff]
    %v69 = vld [vmem:[%s1 + $0x178] sm:$0xff]
    %vm70 = vcmask 261120
    %v72 = vsel %vm70, %v18, 0
    %v75 = vsel %vm70, %v19, 0
    %77 = vmatprep.subr.mxu0 0.0
    %78 = vmatpush1.msra.mxu0 0.0
    %79 = vmatprep.subr.mxu0 0.0
    %80 = vmatpush1.msra.mxu0 0.0
    %81 = vmatprep.subr.mxu0 0.0
    %82 = vmatpush1.msra.mxu0 0.0
    %83 = vmatprep.subr.mxu0 0.0
    %84 = vmatpush1.msra.mxu0 0.0
    %85 = vmatprep.subr.mxu0 0.0
    %86 = vmatpush1.msra.mxu0 0.0
    %87 = vmatprep.subr.mxu0 0.0
    %88 = vmatpush1.msra.mxu0 0.0
    %89 = vmatprep.subr.mxu0 0.0
    %90 = vmatpush1.msra.mxu0 0.0
    %91 = vmatprep.subr.mxu0 0.0
    %92 = vmatpush1.msra.mxu0 0.0
    %93 = vmatprep.subr.mxu0 0.0
    %94 = vmatpush1.msra.mxu0 0.0
    %95 = vmatprep.subr.mxu0 0.0
    %96 = vmatpush1.msra.mxu0 0.0
    %97 = vmatprep.subr.mxu0 0.0
    %98 = vmatpush1.msra.mxu0 0.0
    %99 = vmatprep.subr.mxu0 0.0
    %100 = vmatpush1.msra.mxu0 0.0
    %101 = vmatprep.subr.mxu0 0.0
    %102 = vmatpush1.msra.mxu0 %v25
    %103 = vmatprep.subr.mxu0 0.0
    %104 = vmatpush1.msra.mxu0 %v24
    %105 = vmatprep.subr.mxu0 0.0
    %106 = vmatpush1.msra.mxu0 %v23
    %107 = vmatprep.subr.mxu0 0.0
    %108 = vmatpush1.msra.mxu0 %v22
    %109 = vmatprep.subr.mxu0 0.0
    %110 = vmatpush2.msra.mxu0 0.0
    %111 = vmatprep.subr.mxu0 0.0
    %112 = vmatpush2.msra.mxu0 0.0
    %113 = vmatprep.subr.mxu0 0.0
    %114 = vmatpush2.msra.mxu0 0.0
    %115 = vmatprep.subr.mxu0 0.0
    %116 = vmatpush2.msra.mxu0 0.0
    %117 = vmatprep.subr.mxu0 0.0
    %118 = vmatpush2.msra.mxu0 0.0
    %119 = vmatprep.subr.mxu0 0.0
    %120 = vmatpush2.msra.mxu0 0.0
    %121 = vmatprep.subr.mxu0 0.0
    %122 = vmatpush2.msra.mxu0 0.0
    %123 = vmatprep.subr.mxu0 0.0
    %124 = vmatpush2.msra.mxu0 0.0
    %125 = vmatprep.subr.mxu0 0.0
    %126 = vmatpush2.msra.mxu0 0.0
    %127 = vmatprep.subr.mxu0 0.0
    %128 = vmatpush2.msra.mxu0 0.0
    %129 = vmatprep.subr.mxu0 0.0
    %130 = vmatpush2.msra.mxu0 0.0
    %131 = vmatprep.subr.mxu0 0.0
    %132 = vmatpush2.msra.mxu0 0.0
    %133 = vmatprep.subr.mxu0 0.0
    %134 = vmatpush2.msra.mxu0 0.0
    %135 = vmatprep.subr.mxu0 0.0
    %136 = vmatpush2.msra.mxu0 0.0
    %137 = vmatprep.subr.mxu0 0.0
    %138 = vmatpush2.msra.mxu0 0.0
    %139 = vmatprep.subr.mxu0 0.0
    %140 = vmatpush2.msra.mxu0 0.0
    %141 = vmatprep.mubr.f32.mxu0 0.0
    %142 = vmatmul.mubr.f32.gmra.mxu0 %v72
    %v143 = vpop.f32.mrf.mxu0
    %v144 = vadd.f32 0.0, %v143
    %v145 = vpop.f32.mrf.mxu0
    %146 = vmatprep.mubr.f32.mxu0 0.0
    %147 = vmatmul.mubr.f32.gmra.mxu0 %v75
    %v148 = vpop.f32.mrf.mxu0
    %v149 = vadd.f32 0.0, %v148
    %v150 = vpop.f32.mrf.mxu0
    %151 = vdwg.mxu0
    %152 = vmatprep.subr.mxu0 0.0
    %153 = vmatpush1.msra.mxu0 0.0
    %154 = vmatprep.subr.mxu0 0.0
    %155 = vmatpush1.msra.mxu0 0.0
    %156 = vmatprep.subr.mxu0 0.0
    %157 = vmatpush1.msra.mxu0 0.0
    %158 = vmatprep.subr.mxu0 0.0
    %159 = vmatpush1.msra.mxu0 0.0
    %160 = vmatprep.subr.mxu0 0.0
    %161 = vmatpush1.msra.mxu0 0.0
    %162 = vmatprep.subr.mxu0 0.0
    %163 = vmatpush1.msra.mxu0 0.0
    %164 = vmatprep.subr.mxu0 0.0
    %165 = vmatpush1.msra.mxu0 0.0
    %166 = vmatprep.subr.mxu0 0.0
    %167 = vmatpush1.msra.mxu0 0.0
    %168 = vmatprep.subr.mxu0 0.0
    %169 = vmatpush1.msra.mxu0 0.0
    %170 = vmatprep.subr.mxu0 0.0
    %171 = vmatpush1.msra.mxu0 0.0
    %172 = vmatprep.subr.mxu0 0.0
    %173 = vmatpush1.msra.mxu0 0.0
    %174 = vmatprep.subr.mxu0 0.0
    %175 = vmatpush1.msra.mxu0 0.0
    %176 = vmatprep.subr.mxu0 0.0
    %177 = vmatpush1.msra.mxu0 %v29
    %178 = vmatprep.subr.mxu0 0.0
    %179 = vmatpush1.msra.mxu0 %v28
    %180 = vmatprep.subr.mxu0 0.0
    %181 = vmatpush1.msra.mxu0 %v27
    %182 = vmatprep.subr.mxu0 0.0
    %183 = vmatpush1.msra.mxu0 %v26
    %184 = vmatprep.subr.mxu0 0.0
    %185 = vmatpush2.msra.mxu0 0.0
    %186 = vmatprep.subr.mxu0 0.0
    %187 = vmatpush2.msra.mxu0 0.0
    %188 = vmatprep.subr.mxu0 0.0
    %189 = vmatpush2.msra.mxu0 0.0
    %190 = vmatprep.subr.mxu0 0.0
    %191 = vmatpush2.msra.mxu0 0.0
    %192 = vmatprep.subr.mxu0 0.0
    %193 = vmatpush2.msra.mxu0 0.0
    %194 = vmatprep.subr.mxu0 0.0
    %195 = vmatpush2.msra.mxu0 0.0
    %196 = vmatprep.subr.mxu0 0.0
    %197 = vmatpush2.msra.mxu0 0.0
    %198 = vmatprep.subr.mxu0 0.0
    %199 = vmatpush2.msra.mxu0 0.0
    %200 = vmatprep.subr.mxu0 0.0
    %201 = vmatpush2.msra.mxu0 0.0
    %202 = vmatprep.subr.mxu0 0.0
    %203 = vmatpush2.msra.mxu0 0.0
    %204 = vmatprep.subr.mxu0 0.0
    %205 = vmatpush2.msra.mxu0 0.0
    %206 = vmatprep.subr.mxu0 0.0
    %207 = vmatpush2.msra.mxu0 0.0
    %208 = vmatprep.subr.mxu0 0.0
    %209 = vmatpush2.msra.mxu0 0.0
    %210 = vmatprep.subr.mxu0 0.0
    %211 = vmatpush2.msra.mxu0 0.0
    %212 = vmatprep.subr.mxu0 0.0
    %213 = vmatpush2.msra.mxu0 0.0
    %214 = vmatprep.subr.mxu0 0.0
    %215 = vmatpush2.msra.mxu0 0.0
    %216 = vmatprep.mubr.f32.mxu0 0.0
    %217 = vmatmul.mubr.f32.gmra.mxu0 %v72
    %v218 = vpop.f32.mrf.mxu0
    %v219 = vadd.f32 0.0, %v218
    %v220 = vpop.f32.mrf.mxu0
    %221 = vmatprep.mubr.f32.mxu0 0.0
    %222 = vmatmul.mubr.f32.gmra.mxu0 %v75
    %v223 = vpop.f32.mrf.mxu0
    %v224 = vadd.f32 0.0, %v223
    %v225 = vpop.f32.mrf.mxu0
    %226 = vdwg.mxu0
    %227 = vmatprep.subr.mxu0 0.0
    %228 = vmatpush1.msra.mxu0 0.0
    %229 = vmatprep.subr.mxu0 0.0
    %230 = vmatpush1.msra.mxu0 0.0
    %231 = vmatprep.subr.mxu0 0.0
    %232 = vmatpush1.msra.mxu0 0.0
    %233 = vmatprep.subr.mxu0 0.0
    %234 = vmatpush1.msra.mxu0 0.0
    %235 = vmatprep.subr.mxu0 0.0
    %236 = vmatpush1.msra.mxu0 0.0
    %237 = vmatprep.subr.mxu0 0.0
    %238 = vmatpush1.msra.mxu0 0.0
    %239 = vmatprep.subr.mxu0 0.0
    %240 = vmatpush1.msra.mxu0 0.0
    %241 = vmatprep.subr.mxu0 0.0
    %242 = vmatpush1.msra.mxu0 0.0
    %243 = vmatprep.subr.mxu0 0.0
    %244 = vmatpush1.msra.mxu0 0.0
    %245 = vmatprep.subr.mxu0 0.0
    %246 = vmatpush1.msra.mxu0 0.0
    %247 = vmatprep.subr.mxu0 0.0
    %248 = vmatpush1.msra.mxu0 0.0
    %249 = vmatprep.subr.mxu0 0.0
    %250 = vmatpush1.msra.mxu0 0.0
    %251 = vmatprep.subr.mxu0 0.0
    %252 = vmatpush1.msra.mxu0 %v33
    %253 = vmatprep.subr.mxu0 0.0
    %254 = vmatpush1.msra.mxu0 %v32
    %255 = vmatprep.subr.mxu0 0.0
    %256 = vmatpush1.msra.mxu0 %v31
    %257 = vmatprep.subr.mxu0 0.0
    %258 = vmatpush1.msra.mxu0 %v30
    %259 = vmatprep.subr.mxu0 0.0
    %260 = vmatpush2.msra.mxu0 0.0
    %261 = vmatprep.subr.mxu0 0.0
    %262 = vmatpush2.msra.mxu0 0.0
    %263 = vmatprep.subr.mxu0 0.0
    %264 = vmatpush2.msra.mxu0 0.0
    %265 = vmatprep.subr.mxu0 0.0
    %266 = vmatpush2.msra.mxu0 0.0
    %267 = vmatprep.subr.mxu0 0.0
    %268 = vmatpush2.msra.mxu0 0.0
    %269 = vmatprep.subr.mxu0 0.0
    %270 = vmatpush2.msra.mxu0 0.0
    %271 = vmatprep.subr.mxu0 0.0
    %272 = vmatpush2.msra.mxu0 0.0
    %273 = vmatprep.subr.mxu0 0.0
    %274 = vmatpush2.msra.mxu0 0.0
    %275 = vmatprep.subr.mxu0 0.0
    %276 = vmatpush2.msra.mxu0 0.0
    %277 = vmatprep.subr.mxu0 0.0
    %278 = vmatpush2.msra.mxu0 0.0
    %279 = vmatprep.subr.mxu0 0.0
    %280 = vmatpush2.msra.mxu0 0.0
    %281 = vmatprep.subr.mxu0 0.0
    %282 = vmatpush2.msra.mxu0 0.0
    %283 = vmatprep.subr.mxu0 0.0
    %284 = vmatpush2.msra.mxu0 0.0
    %285 = vmatprep.subr.mxu0 0.0
    %286 = vmatpush2.msra.mxu0 0.0
    %287 = vmatprep.subr.mxu0 0.0
    %288 = vmatpush2.msra.mxu0 0.0
    %289 = vmatprep.subr.mxu0 0.0
    %290 = vmatpush2.msra.mxu0 0.0
    %291 = vmatprep.mubr.f32.mxu0 0.0
    %292 = vmatmul.mubr.f32.gmra.mxu0 %v72
    %v293 = vpop.f32.mrf.mxu0
    %v294 = vadd.f32 0.0, %v293
    %v295 = vpop.f32.mrf.mxu0
    %296 = vmatprep.mubr.f32.mxu0 0.0
    %297 = vmatmul.mubr.f32.gmra.mxu0 %v75
    %v298 = vpop.f32.mrf.mxu0
    %v299 = vadd.f32 0.0, %v298
    %v300 = vpop.f32.mrf.mxu0
    %301 = vdwg.mxu0
    %302 = vmatprep.subr.mxu0 0.0
    %303 = vmatpush1.msra.mxu0 0.0
    %304 = vmatprep.subr.mxu0 0.0
    %305 = vmatpush1.msra.mxu0 0.0
    %306 = vmatprep.subr.mxu0 0.0
    %307 = vmatpush1.msra.mxu0 0.0
    %308 = vmatprep.subr.mxu0 0.0
    %309 = vmatpush1.msra.mxu0 0.0
    %310 = vmatprep.subr.mxu0 0.0
    %311 = vmatpush1.msra.mxu0 0.0
    %312 = vmatprep.subr.mxu0 0.0
    %313 = vmatpush1.msra.mxu0 0.0
    %314 = vmatprep.subr.mxu0 0.0
    %315 = vmatpush1.msra.mxu0 0.0
    %316 = vmatprep.subr.mxu0 0.0
    %317 = vmatpush1.msra.mxu0 0.0
    %318 = vmatprep.subr.mxu0 0.0
    %319 = vmatpush1.msra.mxu0 0.0
    %320 = vmatprep.subr.mxu0 0.0
    %321 = vmatpush1.msra.mxu0 0.0
    %322 = vmatprep.subr.mxu0 0.0
    %323 = vmatpush1.msra.mxu0 0.0
    %324 = vmatprep.subr.mxu0 0.0
    %325 = vmatpush1.msra.mxu0 0.0
    %326 = vmatprep.subr.mxu0 0.0
    %327 = vmatpush1.msra.mxu0 %v37
    %328 = vmatprep.subr.mxu0 0.0
    %329 = vmatpush1.msra.mxu0 %v36
    %330 = vmatprep.subr.mxu0 0.0
    %331 = vmatpush1.msra.mxu0 %v35
    %332 = vmatprep.subr.mxu0 0.0
    %333 = vmatpush1.msra.mxu0 %v34
    %334 = vmatprep.subr.mxu0 0.0
    %335 = vmatpush2.msra.mxu0 0.0
    %336 = vmatprep.subr.mxu0 0.0
    %337 = vmatpush2.msra.mxu0 0.0
    %338 = vmatprep.subr.mxu0 0.0
    %339 = vmatpush2.msra.mxu0 0.0
    %340 = vmatprep.subr.mxu0 0.0
    %341 = vmatpush2.msra.mxu0 0.0
    %342 = vmatprep.subr.mxu0 0.0
    %343 = vmatpush2.msra.mxu0 0.0
    %344 = vmatprep.subr.mxu0 0.0
    %345 = vmatpush2.msra.mxu0 0.0
    %346 = vmatprep.subr.mxu0 0.0
    %347 = vmatpush2.msra.mxu0 0.0
    %348 = vmatprep.subr.mxu0 0.0
    %349 = vmatpush2.msra.mxu0 0.0
    %350 = vmatprep.subr.mxu0 0.0
    %351 = vmatpush2.msra.mxu0 0.0
    %352 = vmatprep.subr.mxu0 0.0
    %353 = vmatpush2.msra.mxu0 0.0
    %354 = vmatprep.subr.mxu0 0.0
    %355 = vmatpush2.msra.mxu0 0.0
    %356 = vmatprep.subr.mxu0 0.0
    %357 = vmatpush2.msra.mxu0 0.0
    %358 = vmatprep.subr.mxu0 0.0
    %359 = vmatpush2.msra.mxu0 0.0
    %360 = vmatprep.subr.mxu0 0.0
    %361 = vmatpush2.msra.mxu0 0.0
    %362 = vmatprep.subr.mxu0 0.0
    %363 = vmatpush2.msra.mxu0 0.0
    %364 = vmatprep.subr.mxu0 0.0
    %365 = vmatpush2.msra.mxu0 0.0
    %366 = vmatprep.mubr.f32.mxu0 0.0
    %367 = vmatmul.mubr.f32.gmra.mxu0 %v72
    %v368 = vpop.f32.mrf.mxu0
    %v369 = vadd.f32 0.0, %v368
    %v370 = vpop.f32.mrf.mxu0
    %371 = vmatprep.mubr.f32.mxu0 0.0
    %372 = vmatmul.mubr.f32.gmra.mxu0 %v75
    %v373 = vpop.f32.mrf.mxu0
    %v374 = vadd.f32 0.0, %v373
    %v375 = vpop.f32.mrf.mxu0
    %376 = vdwg.mxu0
    %377 = vmatprep.subr.mxu0 0.0
    %378 = vmatpush1.msra.mxu0 0.0
    %379 = vmatprep.subr.mxu0 0.0
    %380 = vmatpush1.msra.mxu0 0.0
    %381 = vmatprep.subr.mxu0 0.0
    %382 = vmatpush1.msra.mxu0 0.0
    %383 = vmatprep.subr.mxu0 0.0
    %384 = vmatpush1.msra.mxu0 0.0
    %385 = vmatprep.subr.mxu0 0.0
    %386 = vmatpush1.msra.mxu0 0.0
    %387 = vmatprep.subr.mxu0 0.0
    %388 = vmatpush1.msra.mxu0 0.0
    %389 = vmatprep.subr.mxu0 0.0
    %390 = vmatpush1.msra.mxu0 0.0
    %391 = vmatprep.subr.mxu0 0.0
    %392 = vmatpush1.msra.mxu0 0.0
    %393 = vmatprep.subr.mxu0 0.0
    %394 = vmatpush1.msra.mxu0 0.0
    %395 = vmatprep.subr.mxu0 0.0
    %396 = vmatpush1.msra.mxu0 0.0
    %397 = vmatprep.subr.mxu0 0.0
    %398 = vmatpush1.msra.mxu0 0.0
    %399 = vmatprep.subr.mxu0 0.0
    %400 = vmatpush1.msra.mxu0 0.0
    %401 = vmatprep.subr.mxu0 0.0
    %402 = vmatpush1.msra.mxu0 %v41
    %403 = vmatprep.subr.mxu0 0.0
    %404 = vmatpush1.msra.mxu0 %v40
    %405 = vmatprep.subr.mxu0 0.0
    %406 = vmatpush1.msra.mxu0 %v39
    %407 = vmatprep.subr.mxu0 0.0
    %408 = vmatpush1.msra.mxu0 %v38
    %409 = vmatprep.subr.mxu0 0.0
    %410 = vmatpush2.msra.mxu0 0.0
    %411 = vmatprep.subr.mxu0 0.0
    %412 = vmatpush2.msra.mxu0 0.0
    %413 = vmatprep.subr.mxu0 0.0
    %414 = vmatpush2.msra.mxu0 0.0
    %415 = vmatprep.subr.mxu0 0.0
    %416 = vmatpush2.msra.mxu0 0.0
    %417 = vmatprep.subr.mxu0 0.0
    %418 = vmatpush2.msra.mxu0 0.0
    %419 = vmatprep.subr.mxu0 0.0
    %420 = vmatpush2.msra.mxu0 0.0
    %421 = vmatprep.subr.mxu0 0.0
    %422 = vmatpush2.msra.mxu0 0.0
    %423 = vmatprep.subr.mxu0 0.0
    %424 = vmatpush2.msra.mxu0 0.0
    %425 = vmatprep.subr.mxu0 0.0
    %426 = vmatpush2.msra.mxu0 0.0
    %427 = vmatprep.subr.mxu0 0.0
    %428 = vmatpush2.msra.mxu0 0.0
    %429 = vmatprep.subr.mxu0 0.0
    %430 = vmatpush2.msra.mxu0 0.0
    %431 = vmatprep.subr.mxu0 0.0
    %432 = vmatpush2.msra.mxu0 0.0
    %433 = vmatprep.subr.mxu0 0.0
    %434 = vmatpush2.msra.mxu0 0.0
    %435 = vmatprep.subr.mxu0 0.0
    %436 = vmatpush2.msra.mxu0 0.0
    %437 = vmatprep.subr.mxu0 0.0
    %438 = vmatpush2.msra.mxu0 0.0
    %439 = vmatprep.subr.mxu0 0.0
    %440 = vmatpush2.msra.mxu0 0.0
    %441 = vmatprep.mubr.f32.mxu0 0.0
    %442 = vmatmul.mubr.f32.gmra.mxu0 %v72
    %v443 = vpop.f32.mrf.mxu0
    %v444 = vadd.f32 0.0, %v443
    %v445 = vpop.f32.mrf.mxu0
    %446 = vmatprep.mubr.f32.mxu0 0.0
    %447 = vmatmul.mubr.f32.gmra.mxu0 %v75
    %v448 = vpop.f32.mrf.mxu0
    %v449 = vadd.f32 0.0, %v448
    %v450 = vpop.f32.mrf.mxu0
    %451 = vdwg.mxu0
    %452 = vmatprep.subr.mxu0 0.0
    %453 = vmatpush1.msra.mxu0 0.0
    %454 = vmatprep.subr.mxu0 0.0
    %455 = vmatpush1.msra.mxu0 0.0
    %456 = vmatprep.subr.mxu0 0.0
    %457 = vmatpush1.msra.mxu0 0.0
    %458 = vmatprep.subr.mxu0 0.0
    %459 = vmatpush1.msra.mxu0 0.0
    %460 = vmatprep.subr.mxu0 0.0
    %461 = vmatpush1.msra.mxu0 0.0
    %462 = vmatprep.subr.mxu0 0.0
    %463 = vmatpush1.msra.mxu0 0.0
    %464 = vmatprep.subr.mxu0 0.0
    %465 = vmatpush1.msra.mxu0 0.0
    %466 = vmatprep.subr.mxu0 0.0
    %467 = vmatpush1.msra.mxu0 0.0
    %468 = vmatprep.subr.mxu0 0.0
    %469 = vmatpush1.msra.mxu0 0.0
    %470 = vmatprep.subr.mxu0 0.0
    %471 = vmatpush1.msra.mxu0 0.0
    %472 = vmatprep.subr.mxu0 0.0
    %473 = vmatpush1.msra.mxu0 0.0
    %474 = vmatprep.subr.mxu0 0.0
    %475 = vmatpush1.msra.mxu0 0.0
    %476 = vmatprep.subr.mxu0 0.0
    %477 = vmatpush1.msra.mxu0 %v45
    %478 = vmatprep.subr.mxu0 0.0
    %479 = vmatpush1.msra.mxu0 %v44
    %480 = vmatprep.subr.mxu0 0.0
    %481 = vmatpush1.msra.mxu0 %v43
    %482 = vmatprep.subr.mxu0 0.0
    %483 = vmatpush1.msra.mxu0 %v42
    %484 = vmatprep.subr.mxu0 0.0
    %485 = vmatpush2.msra.mxu0 0.0
    %486 = vmatprep.subr.mxu0 0.0
    %487 = vmatpush2.msra.mxu0 0.0
    %488 = vmatprep.subr.mxu0 0.0
    %489 = vmatpush2.msra.mxu0 0.0
    %490 = vmatprep.subr.mxu0 0.0
    %491 = vmatpush2.msra.mxu0 0.0
    %492 = vmatprep.subr.mxu0 0.0
    %493 = vmatpush2.msra.mxu0 0.0
    %494 = vmatprep.subr.mxu0 0.0
    %495 = vmatpush2.msra.mxu0 0.0
    %496 = vmatprep.subr.mxu0 0.0
    %497 = vmatpush2.msra.mxu0 0.0
    %498 = vmatprep.subr.mxu0 0.0
    %499 = vmatpush2.msra.mxu0 0.0
    %500 = vmatprep.subr.mxu0 0.0
    %501 = vmatpush2.msra.mxu0 0.0
    %502 = vmatprep.subr.mxu0 0.0
    %503 = vmatpush2.msra.mxu0 0.0
    %504 = vmatprep.subr.mxu0 0.0
    %505 = vmatpush2.msra.mxu0 0.0
    %506 = vmatprep.subr.mxu0 0.0
    %507 = vmatpush2.msra.mxu0 0.0
    %508 = vmatprep.subr.mxu0 0.0
    %509 = vmatpush2.msra.mxu0 0.0
    %510 = vmatprep.subr.mxu0 0.0
    %511 = vmatpush2.msra.mxu0 0.0
    %512 = vmatprep.subr.mxu0 0.0
    %513 = vmatpush2.msra.mxu0 0.0
    %514 = vmatprep.subr.mxu0 0.0
    %515 = vmatpush2.msra.mxu0 0.0
    %516 = vmatprep.mubr.f32.mxu0 0.0
    %517 = vmatmul.mubr.f32.gmra.mxu0 %v72
    %v518 = vpop.f32.mrf.mxu0
    %v519 = vadd.f32 0.0, %v518
    %v520 = vpop.f32.mrf.mxu0
    %521 = vmatprep.mubr.f32.mxu0 0.0
    %522 = vmatmul.mubr.f32.gmra.mxu0 %v75
    %v523 = vpop.f32.mrf.mxu0
    %v524 = vadd.f32 0.0, %v523
    %v525 = vpop.f32.mrf.mxu0
    %526 = vdwg.mxu0
    %527 = vmatprep.subr.mxu0 0.0
    %528 = vmatpush1.msra.mxu0 0.0
    %529 = vmatprep.subr.mxu0 0.0
    %530 = vmatpush1.msra.mxu0 0.0
    %531 = vmatprep.subr.mxu0 0.0
    %532 = vmatpush1.msra.mxu0 0.0
    %533 = vmatprep.subr.mxu0 0.0
    %534 = vmatpush1.msra.mxu0 0.0
    %535 = vmatprep.subr.mxu0 0.0
    %536 = vmatpush1.msra.mxu0 0.0
    %537 = vmatprep.subr.mxu0 0.0
    %538 = vmatpush1.msra.mxu0 0.0
    %539 = vmatprep.subr.mxu0 0.0
    %540 = vmatpush1.msra.mxu0 0.0
    %541 = vmatprep.subr.mxu0 0.0
    %542 = vmatpush1.msra.mxu0 0.0
    %543 = vmatprep.subr.mxu0 0.0
    %544 = vmatpush1.msra.mxu0 0.0
    %545 = vmatprep.subr.mxu0 0.0
    %546 = vmatpush1.msra.mxu0 0.0
    %547 = vmatprep.subr.mxu0 0.0
    %548 = vmatpush1.msra.mxu0 0.0
    %549 = vmatprep.subr.mxu0 0.0
    %550 = vmatpush1.msra.mxu0 0.0
    %551 = vmatprep.subr.mxu0 0.0
    %552 = vmatpush1.msra.mxu0 %v49
    %553 = vmatprep.subr.mxu0 0.0
    %554 = vmatpush1.msra.mxu0 %v48
    %555 = vmatprep.subr.mxu0 0.0
    %556 = vmatpush1.msra.mxu0 %v47
    %557 = vmatprep.subr.mxu0 0.0
    %558 = vmatpush1.msra.mxu0 %v46
    %559 = vmatprep.subr.mxu0 0.0
    %560 = vmatpush2.msra.mxu0 0.0
    %561 = vmatprep.subr.mxu0 0.0
    %562 = vmatpush2.msra.mxu0 0.0
    %563 = vmatprep.subr.mxu0 0.0
    %564 = vmatpush2.msra.mxu0 0.0
    %565 = vmatprep.subr.mxu0 0.0
    %566 = vmatpush2.msra.mxu0 0.0
    %567 = vmatprep.subr.mxu0 0.0
    %568 = vmatpush2.msra.mxu0 0.0
    %569 = vmatprep.subr.mxu0 0.0
    %570 = vmatpush2.msra.mxu0 0.0
    %571 = vmatprep.subr.mxu0 0.0
    %572 = vmatpush2.msra.mxu0 0.0
    %573 = vmatprep.subr.mxu0 0.0
    %574 = vmatpush2.msra.mxu0 0.0
    %575 = vmatprep.subr.mxu0 0.0
    %576 = vmatpush2.msra.mxu0 0.0
    %577 = vmatprep.subr.mxu0 0.0
    %578 = vmatpush2.msra.mxu0 0.0
    %579 = vmatprep.subr.mxu0 0.0
    %580 = vmatpush2.msra.mxu0 0.0
    %581 = vmatprep.subr.mxu0 0.0
    %582 = vmatpush2.msra.mxu0 0.0
    %583 = vmatprep.subr.mxu0 0.0
    %584 = vmatpush2.msra.mxu0 0.0
    %585 = vmatprep.subr.mxu0 0.0
    %586 = vmatpush2.msra.mxu0 0.0
    %587 = vmatprep.subr.mxu0 0.0
    %588 = vmatpush2.msra.mxu0 0.0
    %589 = vmatprep.subr.mxu0 0.0
    %590 = vmatpush2.msra.mxu0 0.0
    %591 = vmatprep.mubr.f32.mxu0 0.0
    %592 = vmatmul.mubr.f32.gmra.mxu0 %v72
    %v593 = vpop.f32.mrf.mxu0
    %v594 = vadd.f32 0.0, %v593
    %v595 = vpop.f32.mrf.mxu0
    %596 = vmatprep.mubr.f32.mxu0 0.0
    %597 = vmatmul.mubr.f32.gmra.mxu0 %v75
    %v598 = vpop.f32.mrf.mxu0
    %v599 = vadd.f32 0.0, %v598
    %v600 = vpop.f32.mrf.mxu0
    %601 = vdwg.mxu0
    %602 = vmatprep.subr.mxu0 0.0
    %603 = vmatpush1.msra.mxu0 0.0
    %604 = vmatprep.subr.mxu0 0.0
    %605 = vmatpush1.msra.mxu0 0.0
    %606 = vmatprep.subr.mxu0 0.0
    %607 = vmatpush1.msra.mxu0 0.0
    %608 = vmatprep.subr.mxu0 0.0
    %609 = vmatpush1.msra.mxu0 0.0
    %610 = vmatprep.subr.mxu0 0.0
    %611 = vmatpush1.msra.mxu0 0.0
    %612 = vmatprep.subr.mxu0 0.0
    %613 = vmatpush1.msra.mxu0 0.0
    %614 = vmatprep.subr.mxu0 0.0
    %615 = vmatpush1.msra.mxu0 0.0
    %616 = vmatprep.subr.mxu0 0.0
    %617 = vmatpush1.msra.mxu0 0.0
    %618 = vmatprep.subr.mxu0 0.0
    %619 = vmatpush1.msra.mxu0 0.0
    %620 = vmatprep.subr.mxu0 0.0
    %621 = vmatpush1.msra.mxu0 0.0
    %622 = vmatprep.subr.mxu0 0.0
    %623 = vmatpush1.msra.mxu0 0.0
    %624 = vmatprep.subr.mxu0 0.0
    %625 = vmatpush1.msra.mxu0 0.0
    %626 = vmatprep.subr.mxu0 0.0
    %627 = vmatpush1.msra.mxu0 %v53
    %628 = vmatprep.subr.mxu0 0.0
    %629 = vmatpush1.msra.mxu0 %v52
    %630 = vmatprep.subr.mxu0 0.0
    %631 = vmatpush1.msra.mxu0 %v51
    %632 = vmatprep.subr.mxu0 0.0
    %633 = vmatpush1.msra.mxu0 %v50
    %634 = vmatprep.subr.mxu0 0.0
    %635 = vmatpush2.msra.mxu0 0.0
    %636 = vmatprep.subr.mxu0 0.0
    %637 = vmatpush2.msra.mxu0 0.0
    %638 = vmatprep.subr.mxu0 0.0
    %639 = vmatpush2.msra.mxu0 0.0
    %640 = vmatprep.subr.mxu0 0.0
    %641 = vmatpush2.msra.mxu0 0.0
    %642 = vmatprep.subr.mxu0 0.0
    %643 = vmatpush2.msra.mxu0 0.0
    %644 = vmatprep.subr.mxu0 0.0
    %645 = vmatpush2.msra.mxu0 0.0
    %646 = vmatprep.subr.mxu0 0.0
    %647 = vmatpush2.msra.mxu0 0.0
    %648 = vmatprep.subr.mxu0 0.0
    %649 = vmatpush2.msra.mxu0 0.0
    %650 = vmatprep.subr.mxu0 0.0
    %651 = vmatpush2.msra.mxu0 0.0
    %652 = vmatprep.subr.mxu0 0.0
    %653 = vmatpush2.msra.mxu0 0.0
    %654 = vmatprep.subr.mxu0 0.0
    %655 = vmatpush2.msra.mxu0 0.0
    %656 = vmatprep.subr.mxu0 0.0
    %657 = vmatpush2.msra.mxu0 0.0
    %658 = vmatprep.subr.mxu0 0.0
    %659 = vmatpush2.msra.mxu0 0.0
    %660 = vmatprep.subr.mxu0 0.0
    %661 = vmatpush2.msra.mxu0 0.0
    %662 = vmatprep.subr.mxu0 0.0
    %663 = vmatpush2.msra.mxu0 0.0
    %664 = vmatprep.subr.mxu0 0.0
    %665 = vmatpush2.msra.mxu0 0.0
    %666 = vmatprep.mubr.f32.mxu0 0.0
    %667 = vmatmul.mubr.f32.gmra.mxu0 %v72
    %v668 = vpop.f32.mrf.mxu0
    %v669 = vadd.f32 0.0, %v668
    %v670 = vpop.f32.mrf.mxu0
    %671 = vmatprep.mubr.f32.mxu0 0.0
    %672 = vmatmul.mubr.f32.gmra.mxu0 %v75
    %v673 = vpop.f32.mrf.mxu0
    %v674 = vadd.f32 0.0, %v673
    %v675 = vpop.f32.mrf.mxu0
    %676 = vdwg.mxu0
    %677 = vmatprep.subr.mxu0 0.0
    %678 = vmatpush1.msra.mxu0 0.0
    %679 = vmatprep.subr.mxu0 0.0
    %680 = vmatpush1.msra.mxu0 0.0
    %681 = vmatprep.subr.mxu0 0.0
    %682 = vmatpush1.msra.mxu0 0.0
    %683 = vmatprep.subr.mxu0 0.0
    %684 = vmatpush1.msra.mxu0 0.0
    %685 = vmatprep.subr.mxu0 0.0
    %686 = vmatpush1.msra.mxu0 0.0
    %687 = vmatprep.subr.mxu0 0.0
    %688 = vmatpush1.msra.mxu0 0.0
    %689 = vmatprep.subr.mxu0 0.0
    %690 = vmatpush1.msra.mxu0 0.0
    %691 = vmatprep.subr.mxu0 0.0
    %692 = vmatpush1.msra.mxu0 0.0
    %693 = vmatprep.subr.mxu0 0.0
    %694 = vmatpush1.msra.mxu0 0.0
    %695 = vmatprep.subr.mxu0 0.0
    %696 = vmatpush1.msra.mxu0 0.0
    %697 = vmatprep.subr.mxu0 0.0
    %698 = vmatpush1.msra.mxu0 0.0
    %699 = vmatprep.subr.mxu0 0.0
    %700 = vmatpush1.msra.mxu0 0.0
    %701 = vmatprep.subr.mxu0 0.0
    %702 = vmatpush1.msra.mxu0 %v57
    %703 = vmatprep.subr.mxu0 0.0
    %704 = vmatpush1.msra.mxu0 %v56
    %705 = vmatprep.subr.mxu0 0.0
    %706 = vmatpush1.msra.mxu0 %v55
    %707 = vmatprep.subr.mxu0 0.0
    %708 = vmatpush1.msra.mxu0 %v54
    %709 = vmatprep.subr.mxu0 0.0
    %710 = vmatpush2.msra.mxu0 0.0
    %711 = vmatprep.subr.mxu0 0.0
    %712 = vmatpush2.msra.mxu0 0.0
    %713 = vmatprep.subr.mxu0 0.0
    %714 = vmatpush2.msra.mxu0 0.0
    %715 = vmatprep.subr.mxu0 0.0
    %716 = vmatpush2.msra.mxu0 0.0
    %717 = vmatprep.subr.mxu0 0.0
    %718 = vmatpush2.msra.mxu0 0.0
    %719 = vmatprep.subr.mxu0 0.0
    %720 = vmatpush2.msra.mxu0 0.0
    %721 = vmatprep.subr.mxu0 0.0
    %722 = vmatpush2.msra.mxu0 0.0
    %723 = vmatprep.subr.mxu0 0.0
    %724 = vmatpush2.msra.mxu0 0.0
    %725 = vmatprep.subr.mxu0 0.0
    %726 = vmatpush2.msra.mxu0 0.0
    %727 = vmatprep.subr.mxu0 0.0
    %728 = vmatpush2.msra.mxu0 0.0
    %729 = vmatprep.subr.mxu0 0.0
    %730 = vmatpush2.msra.mxu0 0.0
    %731 = vmatprep.subr.mxu0 0.0
    %732 = vmatpush2.msra.mxu0 0.0
    %733 = vmatprep.subr.mxu0 0.0
    %734 = vmatpush2.msra.mxu0 0.0
    %735 = vmatprep.subr.mxu0 0.0
    %736 = vmatpush2.msra.mxu0 0.0
    %737 = vmatprep.subr.mxu0 0.0
    %738 = vmatpush2.msra.mxu0 0.0
    %739 = vmatprep.subr.mxu0 0.0
    %740 = vmatpush2.msra.mxu0 0.0
    %741 = vmatprep.mubr.f32.mxu0 0.0
    %742 = vmatmul.mubr.f32.gmra.mxu0 %v72
    %v743 = vpop.f32.mrf.mxu0
    %v744 = vadd.f32 0.0, %v743
    %v745 = vpop.f32.mrf.mxu0
    %746 = vmatprep.mubr.f32.mxu0 0.0
    %747 = vmatmul.mubr.f32.gmra.mxu0 %v75
    %v748 = vpop.f32.mrf.mxu0
    %v749 = vadd.f32 0.0, %v748
    %v750 = vpop.f32.mrf.mxu0
    %751 = vdwg.mxu0
    %752 = vmatprep.subr.mxu0 0.0
    %753 = vmatpush1.msra.mxu0 0.0
    %754 = vmatprep.subr.mxu0 0.0
    %755 = vmatpush1.msra.mxu0 0.0
    %756 = vmatprep.subr.mxu0 0.0
    %757 = vmatpush1.msra.mxu0 0.0
    %758 = vmatprep.subr.mxu0 0.0
    %759 = vmatpush1.msra.mxu0 0.0
    %760 = vmatprep.subr.mxu0 0.0
    %761 = vmatpush1.msra.mxu0 0.0
    %762 = vmatprep.subr.mxu0 0.0
    %763 = vmatpush1.msra.mxu0 0.0
    %764 = vmatprep.subr.mxu0 0.0
    %765 = vmatpush1.msra.mxu0 0.0
    %766 = vmatprep.subr.mxu0 0.0
    %767 = vmatpush1.msra.mxu0 0.0
    %768 = vmatprep.subr.mxu0 0.0
    %769 = vmatpush1.msra.mxu0 0.0
    %770 = vmatprep.subr.mxu0 0.0
    %771 = vmatpush1.msra.mxu0 0.0
    %772 = vmatprep.subr.mxu0 0.0
    %773 = vmatpush1.msra.mxu0 0.0
    %774 = vmatprep.subr.mxu0 0.0
    %775 = vmatpush1.msra.mxu0 0.0
    %776 = vmatprep.subr.mxu0 0.0
    %777 = vmatpush1.msra.mxu0 %v61
    %778 = vmatprep.subr.mxu0 0.0
    %779 = vmatpush1.msra.mxu0 %v60
    %780 = vmatprep.subr.mxu0 0.0
    %781 = vmatpush1.msra.mxu0 %v59
    %782 = vmatprep.subr.mxu0 0.0
    %783 = vmatpush1.msra.mxu0 %v58
    %784 = vmatprep.subr.mxu0 0.0
    %785 = vmatpush2.msra.mxu0 0.0
    %786 = vmatprep.subr.mxu0 0.0
    %787 = vmatpush2.msra.mxu0 0.0
    %788 = vmatprep.subr.mxu0 0.0
    %789 = vmatpush2.msra.mxu0 0.0
    %790 = vmatprep.subr.mxu0 0.0
    %791 = vmatpush2.msra.mxu0 0.0
    %792 = vmatprep.subr.mxu0 0.0
    %793 = vmatpush2.msra.mxu0 0.0
    %794 = vmatprep.subr.mxu0 0.0
    %795 = vmatpush2.msra.mxu0 0.0
    %796 = vmatprep.subr.mxu0 0.0
    %797 = vmatpush2.msra.mxu0 0.0
    %798 = vmatprep.subr.mxu0 0.0
    %799 = vmatpush2.msra.mxu0 0.0
    %800 = vmatprep.subr.mxu0 0.0
    %801 = vmatpush2.msra.mxu0 0.0
    %802 = vmatprep.subr.mxu0 0.0
    %803 = vmatpush2.msra.mxu0 0.0
    %804 = vmatprep.subr.mxu0 0.0
    %805 = vmatpush2.msra.mxu0 0.0
    %806 = vmatprep.subr.mxu0 0.0
    %807 = vmatpush2.msra.mxu0 0.0
    %808 = vmatprep.subr.mxu0 0.0
    %809 = vmatpush2.msra.mxu0 0.0
    %810 = vmatprep.subr.mxu0 0.0
    %811 = vmatpush2.msra.mxu0 0.0
    %812 = vmatprep.subr.mxu0 0.0
    %813 = vmatpush2.msra.mxu0 0.0
    %814 = vmatprep.subr.mxu0 0.0
    %815 = vmatpush2.msra.mxu0 0.0
    %816 = vmatprep.mubr.f32.mxu0 0.0
    %817 = vmatmul.mubr.f32.gmra.mxu0 %v72
    %v818 = vpop.f32.mrf.mxu0
    %v819 = vadd.f32 0.0, %v818
    %v820 = vpop.f32.mrf.mxu0
    %821 = vmatprep.mubr.f32.mxu0 0.0
    %822 = vmatmul.mubr.f32.gmra.mxu0 %v75
    %v823 = vpop.f32.mrf.mxu0
    %v824 = vadd.f32 0.0, %v823
    %v825 = vpop.f32.mrf.mxu0
    %826 = vdwg.mxu0
    %827 = vmatprep.subr.mxu0 0.0
    %828 = vmatpush1.msra.mxu0 0.0
    %829 = vmatprep.subr.mxu0 0.0
    %830 = vmatpush1.msra.mxu0 0.0
    %831 = vmatprep.subr.mxu0 0.0
    %832 = vmatpush1.msra.mxu0 0.0
    %833 = vmatprep.subr.mxu0 0.0
    %834 = vmatpush1.msra.mxu0 0.0
    %835 = vmatprep.subr.mxu0 0.0
    %836 = vmatpush1.msra.mxu0 0.0
    %837 = vmatprep.subr.mxu0 0.0
    %838 = vmatpush1.msra.mxu0 0.0
    %839 = vmatprep.subr.mxu0 0.0
    %840 = vmatpush1.msra.mxu0 0.0
    %841 = vmatprep.subr.mxu0 0.0
    %842 = vmatpush1.msra.mxu0 0.0
    %843 = vmatprep.subr.mxu0 0.0
    %844 = vmatpush1.msra.mxu0 0.0
    %845 = vmatprep.subr.mxu0 0.0
    %846 = vmatpush1.msra.mxu0 0.0
    %847 = vmatprep.subr.mxu0 0.0
    %848 = vmatpush1.msra.mxu0 0.0
    %849 = vmatprep.subr.mxu0 0.0
    %850 = vmatpush1.msra.mxu0 0.0
    %851 = vmatprep.subr.mxu0 0.0
    %852 = vmatpush1.msra.mxu0 %v65
    %853 = vmatprep.subr.mxu0 0.0
    %854 = vmatpush1.msra.mxu0 %v64
    %855 = vmatprep.subr.mxu0 0.0
    %856 = vmatpush1.msra.mxu0 %v63
    %857 = vmatprep.subr.mxu0 0.0
    %858 = vmatpush1.msra.mxu0 %v62
    %859 = vmatprep.subr.mxu0 0.0
    %860 = vmatpush2.msra.mxu0 0.0
    %861 = vmatprep.subr.mxu0 0.0
    %862 = vmatpush2.msra.mxu0 0.0
    %863 = vmatprep.subr.mxu0 0.0
    %864 = vmatpush2.msra.mxu0 0.0
    %865 = vmatprep.subr.mxu0 0.0
    %866 = vmatpush2.msra.mxu0 0.0
    %867 = vmatprep.subr.mxu0 0.0
    %868 = vmatpush2.msra.mxu0 0.0
    %869 = vmatprep.subr.mxu0 0.0
    %870 = vmatpush2.msra.mxu0 0.0
    %871 = vmatprep.subr.mxu0 0.0
    %872 = vmatpush2.msra.mxu0 0.0
    %873 = vmatprep.subr.mxu0 0.0
    %874 = vmatpush2.msra.mxu0 0.0
    %875 = vmatprep.subr.mxu0 0.0
    %876 = vmatpush2.msra.mxu0 0.0
    %877 = vmatprep.subr.mxu0 0.0
    %878 = vmatpush2.msra.mxu0 0.0
    %879 = vmatprep.subr.mxu0 0.0
    %880 = vmatpush2.msra.mxu0 0.0
    %881 = vmatprep.subr.mxu0 0.0
    %882 = vmatpush2.msra.mxu0 0.0
    %883 = vmatprep.subr.mxu0 0.0
    %884 = vmatpush2.msra.mxu0 0.0
    %885 = vmatprep.subr.mxu0 0.0
    %886 = vmatpush2.msra.mxu0 0.0
    %887 = vmatprep.subr.mxu0 0.0
    %888 = vmatpush2.msra.mxu0 0.0
    %889 = vmatprep.subr.mxu0 0.0
    %890 = vmatpush2.msra.mxu0 0.0
    %891 = vmatprep.mubr.f32.mxu0 0.0
    %892 = vmatmul.mubr.f32.gmra.mxu0 %v72
    %v893 = vpop.f32.mrf.mxu0
    %v894 = vadd.f32 0.0, %v893
    %v895 = vpop.f32.mrf.mxu0
    %896 = vmatprep.mubr.f32.mxu0 0.0
    %897 = vmatmul.mubr.f32.gmra.mxu0 %v75
    %v898 = vpop.f32.mrf.mxu0
    %v899 = vadd.f32 0.0, %v898
    %v900 = vpop.f32.mrf.mxu0
    %901 = vdwg.mxu0
    %902 = vmatprep.subr.mxu0 0.0
    %903 = vmatpush1.msra.mxu0 0.0
    %904 = vmatprep.subr.mxu0 0.0
    %905 = vmatpush1.msra.mxu0 0.0
    %906 = vmatprep.subr.mxu0 0.0
    %907 = vmatpush1.msra.mxu0 0.0
    %908 = vmatprep.subr.mxu0 0.0
    %909 = vmatpush1.msra.mxu0 0.0
    %910 = vmatprep.subr.mxu0 0.0
    %911 = vmatpush1.msra.mxu0 0.0
    %912 = vmatprep.subr.mxu0 0.0
    %913 = vmatpush1.msra.mxu0 0.0
    %914 = vmatprep.subr.mxu0 0.0
    %915 = vmatpush1.msra.mxu0 0.0
    %916 = vmatprep.subr.mxu0 0.0
    %917 = vmatpush1.msra.mxu0 0.0
    %918 = vmatprep.subr.mxu0 0.0
    %919 = vmatpush1.msra.mxu0 0.0
    %920 = vmatprep.subr.mxu0 0.0
    %921 = vmatpush1.msra.mxu0 0.0
    %922 = vmatprep.subr.mxu0 0.0
    %923 = vmatpush1.msra.mxu0 0.0
    %924 = vmatprep.subr.mxu0 0.0
    %925 = vmatpush1.msra.mxu0 0.0
    %926 = vmatprep.subr.mxu0 0.0
    %927 = vmatpush1.msra.mxu0 %v69
    %928 = vmatprep.subr.mxu0 0.0
    %929 = vmatpush1.msra.mxu0 %v68
    %930 = vmatprep.subr.mxu0 0.0
    %931 = vmatpush1.msra.mxu0 %v67
    %932 = vmatprep.subr.mxu0 0.0
    %933 = vmatpush1.msra.mxu0 %v66
    %934 = vmatprep.subr.mxu0 0.0
    %935 = vmatpush2.msra.mxu0 0.0
    %936 = vmatprep.subr.mxu0 0.0
    %937 = vmatpush2.msra.mxu0 0.0
    %938 = vmatprep.subr.mxu0 0.0
    %939 = vmatpush2.msra.mxu0 0.0
    %940 = vmatprep.subr.mxu0 0.0
    %941 = vmatpush2.msra.mxu0 0.0
    %942 = vmatprep.subr.mxu0 0.0
    %943 = vmatpush2.msra.mxu0 0.0
    %944 = vmatprep.subr.mxu0 0.0
    %945 = vmatpush2.msra.mxu0 0.0
    %946 = vmatprep.subr.mxu0 0.0
    %947 = vmatpush2.msra.mxu0 0.0
    %948 = vmatprep.subr.mxu0 0.0
    %949 = vmatpush2.msra.mxu0 0.0
    %950 = vmatprep.subr.mxu0 0.0
    %951 = vmatpush2.msra.mxu0 0.0
    %952 = vmatprep.subr.mxu0 0.0
    %953 = vmatpush2.msra.mxu0 0.0
    %954 = vmatprep.subr.mxu0 0.0
    %955 = vmatpush2.msra.mxu0 0.0
    %956 = vmatprep.subr.mxu0 0.0
    %957 = vmatpush2.msra.mxu0 0.0
    %958 = vmatprep.subr.mxu0 0.0
    %959 = vmatpush2.msra.mxu0 0.0
    %960 = vmatprep.subr.mxu0 0.0
    %961 = vmatpush2.msra.mxu0 0.0
    %962 = vmatprep.subr.mxu0 0.0
    %963 = vmatpush2.msra.mxu0 0.0
    %964 = vmatprep.subr.mxu0 0.0
    %965 = vmatpush2.msra.mxu0 0.0
    %966 = vmatprep.mubr.f32.mxu0 0.0
    %967 = vmatmul.mubr.f32.gmra.mxu0 %v72
    %v968 = vpop.f32.mrf.mxu0
    %v969 = vadd.f32 0.0, %v968
    %v970 = vpop.f32.mrf.mxu0
    %971 = vmatprep.mubr.f32.mxu0 0.0
    %972 = vmatmul.mubr.f32.gmra.mxu0 %v75
    %v973 = vpop.f32.mrf.mxu0
    %v974 = vadd.f32 0.0, %v973
    %v975 = vpop.f32.mrf.mxu0
    %976 = vdwg.mxu0
    %v977 = vmul.f32 %v144, %v20
    %v978 = vmul.f32 %v149, %v21
    %v979 = vmul.f32 %v219, %v20
    %v980 = vmul.f32 %v224, %v21
    %v981 = vmul.f32 %v294, %v20
    %v982 = vmul.f32 %v299, %v21
    %v983 = vmul.f32 %v369, %v20
    %v984 = vmul.f32 %v374, %v21
    %v985 = vmul.f32 %v444, %v20
    %v986 = vmul.f32 %v449, %v21
    %v987 = vmul.f32 %v519, %v20
    %v988 = vmul.f32 %v524, %v21
    %v989 = vmul.f32 %v594, %v20
    %v990 = vmul.f32 %v599, %v21
    %v991 = vmul.f32 %v669, %v20
    %v992 = vmul.f32 %v674, %v21
    %v993 = vmul.f32 %v744, %v20
    %v994 = vmul.f32 %v749, %v21
    %v995 = vmul.f32 %v819, %v20
    %v996 = vmul.f32 %v824, %v21
    %vm997 = vcmask 523264
    %v999 = vsel %vm997, %v977, 0
    %v1002 = vsel %vm997, %v993, 0
    %1004 = vmatprep.subr.mxu0 0.0
    %1005 = vmatpush1.xpose.msra.mxu0 0.0
    %1006 = vmatprep.subr.mxu0 0.0
    %1007 = vmatpush1.xpose.msra.mxu0 0.0
    %1008 = vmatprep.subr.mxu0 0.0
    %1009 = vmatpush1.xpose.msra.mxu0 0.0
    %1010 = vmatprep.subr.mxu0 0.0
    %1011 = vmatpush1.xpose.msra.mxu0 0.0
    %1012 = vmatprep.subr.mxu0 0.0
    %1013 = vmatpush1.xpose.msra.mxu0 0.0
    %1014 = vmatprep.subr.mxu0 0.0
    %1015 = vmatpush1.xpose.msra.mxu0 0.0
    %1016 = vmatprep.subr.mxu0 0.0
    %1017 = vmatpush1.xpose.msra.mxu0 0.0
    %1018 = vmatprep.subr.mxu0 0.0
    %1019 = vmatpush1.xpose.msra.mxu0 0.0
    %1020 = vmatprep.subr.mxu0 0.0
    %1021 = vmatpush1.xpose.msra.mxu0 0.0
    %1022 = vmatprep.subr.mxu0 0.0
    %1023 = vmatpush1.xpose.msra.mxu0 0.0
    %1024 = vmatprep.subr.mxu0 0.0
    %1025 = vmatpush1.xpose.msra.mxu0 0.0
    %1026 = vmatprep.subr.mxu0 0.0
    %1027 = vmatpush1.xpose.msra.mxu0 0.0
    %1028 = vmatprep.subr.mxu0 0.0
    %1029 = vmatpush1.xpose.msra.mxu0 0.0
    %1030 = vmatprep.subr.mxu0 0.0
    %1031 = vmatpush1.xpose.msra.mxu0 0.0
    %1032 = vmatprep.subr.mxu0 0.0
    %1033 = vmatpush1.xpose.msra.mxu0 0.0
    %1034 = vmatprep.subr.mxu0 0.0
    %1035 = vmatpush1.xpose.msra.mxu0 %v1002
    %1036 = vmatprep.subr.mxu0 0.0
    %1037 = vmatpush2.xpose.msra.mxu0 0.0
    %1038 = vmatprep.subr.mxu0 0.0
    %1039 = vmatpush2.xpose.msra.mxu0 0.0
    %1040 = vmatprep.subr.mxu0 0.0
    %1041 = vmatpush2.xpose.msra.mxu0 0.0
    %1042 = vmatprep.subr.mxu0 0.0
    %1043 = vmatpush2.xpose.msra.mxu0 0.0
    %1044 = vmatprep.subr.mxu0 0.0
    %1045 = vmatpush2.xpose.msra.mxu0 0.0
    %1046 = vmatprep.subr.mxu0 0.0
    %1047 = vmatpush2.xpose.msra.mxu0 0.0
    %1048 = vmatprep.subr.mxu0 0.0
    %1049 = vmatpush2.xpose.msra.mxu0 0.0
    %1050 = vmatprep.subr.mxu0 0.0
    %1051 = vmatpush2.xpose.msra.mxu0 0.0
    %1052 = vmatprep.subr.mxu0 0.0
    %1053 = vmatpush2.xpose.msra.mxu0 0.0
    %1054 = vmatprep.subr.mxu0 0.0
    %1055 = vmatpush2.xpose.msra.mxu0 0.0
    %1056 = vmatprep.subr.mxu0 0.0
    %1057 = vmatpush2.xpose.msra.mxu0 0.0
    %1058 = vmatprep.subr.mxu0 0.0
    %1059 = vmatpush2.xpose.msra.mxu0 0.0
    %1060 = vmatprep.subr.mxu0 0.0
    %1061 = vmatpush2.xpose.msra.mxu0 0.0
    %1062 = vmatprep.subr.mxu0 0.0
    %1063 = vmatpush2.xpose.msra.mxu0 0.0
    %1064 = vmatprep.subr.mxu0 0.0
    %1065 = vmatpush2.xpose.msra.mxu0 0.0
    %1066 = vmatprep.subr.mxu0 0.0
    %1067 = vmatpush2.xpose.msra.mxu0 0.0
    %1068 = vmatprep.mubr.f32.mxu0 0.0
    %1069 = vmatmul.mubr.f32.gmra.mxu0 %v999
    %v1070 = vpop.f32.mrf.mxu0
    %v1071 = vadd.f32 0.0, %v1070
    %v1072 = vpop.f32.mrf.mxu0
    %1073 = vdwg.mxu0
    %v1075 = vsel %vm997, %v978, 0
    %v1078 = vsel %vm997, %v994, 0
    %1080 = vmatprep.subr.mxu0 0.0
    %1081 = vmatpush1.xpose.msra.mxu0 0.0
    %1082 = vmatprep.subr.mxu0 0.0
    %1083 = vmatpush1.xpose.msra.mxu0 0.0
    %1084 = vmatprep.subr.mxu0 0.0
    %1085 = vmatpush1.xpose.msra.mxu0 0.0
    %1086 = vmatprep.subr.mxu0 0.0
    %1087 = vmatpush1.xpose.msra.mxu0 0.0
    %1088 = vmatprep.subr.mxu0 0.0
    %1089 = vmatpush1.xpose.msra.mxu0 0.0
    %1090 = vmatprep.subr.mxu0 0.0
    %1091 = vmatpush1.xpose.msra.mxu0 0.0
    %1092 = vmatprep.subr.mxu0 0.0
    %1093 = vmatpush1.xpose.msra.mxu0 0.0
    %1094 = vmatprep.subr.mxu0 0.0
    %1095 = vmatpush1.xpose.msra.mxu0 0.0
    %1096 = vmatprep.subr.mxu0 0.0
    %1097 = vmatpush1.xpose.msra.mxu0 0.0
    %1098 = vmatprep.subr.mxu0 0.0
    %1099 = vmatpush1.xpose.msra.mxu0 0.0
    %1100 = vmatprep.subr.mxu0 0.0
    %1101 = vmatpush1.xpose.msra.mxu0 0.0
    %1102 = vmatprep.subr.mxu0 0.0
    %1103 = vmatpush1.xpose.msra.mxu0 0.0
    %1104 = vmatprep.subr.mxu0 0.0
    %1105 = vmatpush1.xpose.msra.mxu0 0.0
    %1106 = vmatprep.subr.mxu0 0.0
    %1107 = vmatpush1.xpose.msra.mxu0 0.0
    %1108 = vmatprep.subr.mxu0 0.0
    %1109 = vmatpush1.xpose.msra.mxu0 0.0
    %1110 = vmatprep.subr.mxu0 0.0
    %1111 = vmatpush1.xpose.msra.mxu0 %v1078
    %1112 = vmatprep.subr.mxu0 0.0
    %1113 = vmatpush2.xpose.msra.mxu0 0.0
    %1114 = vmatprep.subr.mxu0 0.0
    %1115 = vmatpush2.xpose.msra.mxu0 0.0
    %1116 = vmatprep.subr.mxu0 0.0
    %1117 = vmatpush2.xpose.msra.mxu0 0.0
    %1118 = vmatprep.subr.mxu0 0.0
    %1119 = vmatpush2.xpose.msra.mxu0 0.0
    %1120 = vmatprep.subr.mxu0 0.0
    %1121 = vmatpush2.xpose.msra.mxu0 0.0
    %1122 = vmatprep.subr.mxu0 0.0
    %1123 = vmatpush2.xpose.msra.mxu0 0.0
    %1124 = vmatprep.subr.mxu0 0.0
    %1125 = vmatpush2.xpose.msra.mxu0 0.0
    %1126 = vmatprep.subr.mxu0 0.0
    %1127 = vmatpush2.xpose.msra.mxu0 0.0
    %1128 = vmatprep.subr.mxu0 0.0
    %1129 = vmatpush2.xpose.msra.mxu0 0.0
    %1130 = vmatprep.subr.mxu0 0.0
    %1131 = vmatpush2.xpose.msra.mxu0 0.0
    %1132 = vmatprep.subr.mxu0 0.0
    %1133 = vmatpush2.xpose.msra.mxu0 0.0
    %1134 = vmatprep.subr.mxu0 0.0
    %1135 = vmatpush2.xpose.msra.mxu0 0.0
    %1136 = vmatprep.subr.mxu0 0.0
    %1137 = vmatpush2.xpose.msra.mxu0 0.0
    %1138 = vmatprep.subr.mxu0 0.0
    %1139 = vmatpush2.xpose.msra.mxu0 0.0
    %1140 = vmatprep.subr.mxu0 0.0
    %1141 = vmatpush2.xpose.msra.mxu0 0.0
    %1142 = vmatprep.subr.mxu0 0.0
    %1143 = vmatpush2.xpose.msra.mxu0 0.0
    %1144 = vmatprep.mubr.f32.mxu0 0.0
    %1145 = vmatmul.mubr.f32.gmra.mxu0 %v1075
    %v1146 = vpop.f32.mrf.mxu0
    %v1147 = vadd.f32 0.0, %v1146
    %v1148 = vpop.f32.mrf.mxu0
    %1149 = vdwg.mxu0
    %v1151 = vsel %vm997, %v979, 0
    %1153 = vmatprep.subr.mxu0 0.0
    %1154 = vmatpush1.xpose.msra.mxu0 0.0
    %1155 = vmatprep.subr.mxu0 0.0
    %1156 = vmatpush1.xpose.msra.mxu0 0.0
    %1157 = vmatprep.subr.mxu0 0.0
    %1158 = vmatpush1.xpose.msra.mxu0 0.0
    %1159 = vmatprep.subr.mxu0 0.0
    %1160 = vmatpush1.xpose.msra.mxu0 0.0
    %1161 = vmatprep.subr.mxu0 0.0
    %1162 = vmatpush1.xpose.msra.mxu0 0.0
    %1163 = vmatprep.subr.mxu0 0.0
    %1164 = vmatpush1.xpose.msra.mxu0 0.0
    %1165 = vmatprep.subr.mxu0 0.0
    %1166 = vmatpush1.xpose.msra.mxu0 0.0
    %1167 = vmatprep.subr.mxu0 0.0
    %1168 = vmatpush1.xpose.msra.mxu0 0.0
    %1169 = vmatprep.subr.mxu0 0.0
    %1170 = vmatpush1.xpose.msra.mxu0 0.0
    %1171 = vmatprep.subr.mxu0 0.0
    %1172 = vmatpush1.xpose.msra.mxu0 0.0
    %1173 = vmatprep.subr.mxu0 0.0
    %1174 = vmatpush1.xpose.msra.mxu0 0.0
    %1175 = vmatprep.subr.mxu0 0.0
    %1176 = vmatpush1.xpose.msra.mxu0 0.0
    %1177 = vmatprep.subr.mxu0 0.0
    %1178 = vmatpush1.xpose.msra.mxu0 0.0
    %1179 = vmatprep.subr.mxu0 0.0
    %1180 = vmatpush1.xpose.msra.mxu0 0.0
    %1181 = vmatprep.subr.mxu0 0.0
    %1182 = vmatpush1.xpose.msra.mxu0 0.0
    %1183 = vmatprep.subr.mxu0 0.0
    %1184 = vmatpush1.xpose.msra.mxu0 %v1002
    %1185 = vmatprep.subr.mxu0 0.0
    %1186 = vmatpush2.xpose.msra.mxu0 0.0
    %1187 = vmatprep.subr.mxu0 0.0
    %1188 = vmatpush2.xpose.msra.mxu0 0.0
    %1189 = vmatprep.subr.mxu0 0.0
    %1190 = vmatpush2.xpose.msra.mxu0 0.0
    %1191 = vmatprep.subr.mxu0 0.0
    %1192 = vmatpush2.xpose.msra.mxu0 0.0
    %1193 = vmatprep.subr.mxu0 0.0
    %1194 = vmatpush2.xpose.msra.mxu0 0.0
    %1195 = vmatprep.subr.mxu0 0.0
    %1196 = vmatpush2.xpose.msra.mxu0 0.0
    %1197 = vmatprep.subr.mxu0 0.0
    %1198 = vmatpush2.xpose.msra.mxu0 0.0
    %1199 = vmatprep.subr.mxu0 0.0
    %1200 = vmatpush2.xpose.msra.mxu0 0.0
    %1201 = vmatprep.subr.mxu0 0.0
    %1202 = vmatpush2.xpose.msra.mxu0 0.0
    %1203 = vmatprep.subr.mxu0 0.0
    %1204 = vmatpush2.xpose.msra.mxu0 0.0
    %1205 = vmatprep.subr.mxu0 0.0
    %1206 = vmatpush2.xpose.msra.mxu0 0.0
    %1207 = vmatprep.subr.mxu0 0.0
    %1208 = vmatpush2.xpose.msra.mxu0 0.0
    %1209 = vmatprep.subr.mxu0 0.0
    %1210 = vmatpush2.xpose.msra.mxu0 0.0
    %1211 = vmatprep.subr.mxu0 0.0
    %1212 = vmatpush2.xpose.msra.mxu0 0.0
    %1213 = vmatprep.subr.mxu0 0.0
    %1214 = vmatpush2.xpose.msra.mxu0 0.0
    %1215 = vmatprep.subr.mxu0 0.0
    %1216 = vmatpush2.xpose.msra.mxu0 0.0
    %1217 = vmatprep.mubr.f32.mxu0 0.0
    %1218 = vmatmul.mubr.f32.gmra.mxu0 %v1151
    %v1219 = vpop.f32.mrf.mxu0
    %v1220 = vadd.f32 0.0, %v1219
    %v1221 = vpop.f32.mrf.mxu0
    %1222 = vdwg.mxu0
    %v1224 = vsel %vm997, %v980, 0
    %1226 = vmatprep.subr.mxu0 0.0
    %1227 = vmatpush1.xpose.msra.mxu0 0.0
    %1228 = vmatprep.subr.mxu0 0.0
    %1229 = vmatpush1.xpose.msra.mxu0 0.0
    %1230 = vmatprep.subr.mxu0 0.0
    %1231 = vmatpush1.xpose.msra.mxu0 0.0
    %1232 = vmatprep.subr.mxu0 0.0
    %1233 = vmatpush1.xpose.msra.mxu0 0.0
    %1234 = vmatprep.subr.mxu0 0.0
    %1235 = vmatpush1.xpose.msra.mxu0 0.0
    %1236 = vmatprep.subr.mxu0 0.0
    %1237 = vmatpush1.xpose.msra.mxu0 0.0
    %1238 = vmatprep.subr.mxu0 0.0
    %1239 = vmatpush1.xpose.msra.mxu0 0.0
    %1240 = vmatprep.subr.mxu0 0.0
    %1241 = vmatpush1.xpose.msra.mxu0 0.0
    %1242 = vmatprep.subr.mxu0 0.0
    %1243 = vmatpush1.xpose.msra.mxu0 0.0
    %1244 = vmatprep.subr.mxu0 0.0
    %1245 = vmatpush1.xpose.msra.mxu0 0.0
    %1246 = vmatprep.subr.mxu0 0.0
    %1247 = vmatpush1.xpose.msra.mxu0 0.0
    %1248 = vmatprep.subr.mxu0 0.0
    %1249 = vmatpush1.xpose.msra.mxu0 0.0
    %1250 = vmatprep.subr.mxu0 0.0
    %1251 = vmatpush1.xpose.msra.mxu0 0.0
    %1252 = vmatprep.subr.mxu0 0.0
    %1253 = vmatpush1.xpose.msra.mxu0 0.0
    %1254 = vmatprep.subr.mxu0 0.0
    %1255 = vmatpush1.xpose.msra.mxu0 0.0
    %1256 = vmatprep.subr.mxu0 0.0
    %1257 = vmatpush1.xpose.msra.mxu0 %v1078
    %1258 = vmatprep.subr.mxu0 0.0
    %1259 = vmatpush2.xpose.msra.mxu0 0.0
    %1260 = vmatprep.subr.mxu0 0.0
    %1261 = vmatpush2.xpose.msra.mxu0 0.0
    %1262 = vmatprep.subr.mxu0 0.0
    %1263 = vmatpush2.xpose.msra.mxu0 0.0
    %1264 = vmatprep.subr.mxu0 0.0
    %1265 = vmatpush2.xpose.msra.mxu0 0.0
    %1266 = vmatprep.subr.mxu0 0.0
    %1267 = vmatpush2.xpose.msra.mxu0 0.0
    %1268 = vmatprep.subr.mxu0 0.0
    %1269 = vmatpush2.xpose.msra.mxu0 0.0
    %1270 = vmatprep.subr.mxu0 0.0
    %1271 = vmatpush2.xpose.msra.mxu0 0.0
    %1272 = vmatprep.subr.mxu0 0.0
    %1273 = vmatpush2.xpose.msra.mxu0 0.0
    %1274 = vmatprep.subr.mxu0 0.0
    %1275 = vmatpush2.xpose.msra.mxu0 0.0
    %1276 = vmatprep.subr.mxu0 0.0
    %1277 = vmatpush2.xpose.msra.mxu0 0.0
    %1278 = vmatprep.subr.mxu0 0.0
    %1279 = vmatpush2.xpose.msra.mxu0 0.0
    %1280 = vmatprep.subr.mxu0 0.0
    %1281 = vmatpush2.xpose.msra.mxu0 0.0
    %1282 = vmatprep.subr.mxu0 0.0
    %1283 = vmatpush2.xpose.msra.mxu0 0.0
    %1284 = vmatprep.subr.mxu0 0.0
    %1285 = vmatpush2.xpose.msra.mxu0 0.0
    %1286 = vmatprep.subr.mxu0 0.0
    %1287 = vmatpush2.xpose.msra.mxu0 0.0
    %1288 = vmatprep.subr.mxu0 0.0
    %1289 = vmatpush2.xpose.msra.mxu0 0.0
    %1290 = vmatprep.mubr.f32.mxu0 0.0
    %1291 = vmatmul.mubr.f32.gmra.mxu0 %v1224
    %v1292 = vpop.f32.mrf.mxu0
    %v1293 = vadd.f32 0.0, %v1292
    %v1294 = vpop.f32.mrf.mxu0
    %1295 = vdwg.mxu0
    %v1297 = vsel %vm997, %v981, 0
    %1299 = vmatprep.subr.mxu0 0.0
    %1300 = vmatpush1.xpose.msra.mxu0 0.0
    %1301 = vmatprep.subr.mxu0 0.0
    %1302 = vmatpush1.xpose.msra.mxu0 0.0
    %1303 = vmatprep.subr.mxu0 0.0
    %1304 = vmatpush1.xpose.msra.mxu0 0.0
    %1305 = vmatprep.subr.mxu0 0.0
    %1306 = vmatpush1.xpose.msra.mxu0 0.0
    %1307 = vmatprep.subr.mxu0 0.0
    %1308 = vmatpush1.xpose.msra.mxu0 0.0
    %1309 = vmatprep.subr.mxu0 0.0
    %1310 = vmatpush1.xpose.msra.mxu0 0.0
    %1311 = vmatprep.subr.mxu0 0.0
    %1312 = vmatpush1.xpose.msra.mxu0 0.0
    %1313 = vmatprep.subr.mxu0 0.0
    %1314 = vmatpush1.xpose.msra.mxu0 0.0
    %1315 = vmatprep.subr.mxu0 0.0
    %1316 = vmatpush1.xpose.msra.mxu0 0.0
    %1317 = vmatprep.subr.mxu0 0.0
    %1318 = vmatpush1.xpose.msra.mxu0 0.0
    %1319 = vmatprep.subr.mxu0 0.0
    %1320 = vmatpush1.xpose.msra.mxu0 0.0
    %1321 = vmatprep.subr.mxu0 0.0
    %1322 = vmatpush1.xpose.msra.mxu0 0.0
    %1323 = vmatprep.subr.mxu0 0.0
    %1324 = vmatpush1.xpose.msra.mxu0 0.0
    %1325 = vmatprep.subr.mxu0 0.0
    %1326 = vmatpush1.xpose.msra.mxu0 0.0
    %1327 = vmatprep.subr.mxu0 0.0
    %1328 = vmatpush1.xpose.msra.mxu0 0.0
    %1329 = vmatprep.subr.mxu0 0.0
    %1330 = vmatpush1.xpose.msra.mxu0 %v1002
    %1331 = vmatprep.subr.mxu0 0.0
    %1332 = vmatpush2.xpose.msra.mxu0 0.0
    %1333 = vmatprep.subr.mxu0 0.0
    %1334 = vmatpush2.xpose.msra.mxu0 0.0
    %1335 = vmatprep.subr.mxu0 0.0
    %1336 = vmatpush2.xpose.msra.mxu0 0.0
    %1337 = vmatprep.subr.mxu0 0.0
    %1338 = vmatpush2.xpose.msra.mxu0 0.0
    %1339 = vmatprep.subr.mxu0 0.0
    %1340 = vmatpush2.xpose.msra.mxu0 0.0
    %1341 = vmatprep.subr.mxu0 0.0
    %1342 = vmatpush2.xpose.msra.mxu0 0.0
    %1343 = vmatprep.subr.mxu0 0.0
    %1344 = vmatpush2.xpose.msra.mxu0 0.0
    %1345 = vmatprep.subr.mxu0 0.0
    %1346 = vmatpush2.xpose.msra.mxu0 0.0
    %1347 = vmatprep.subr.mxu0 0.0
    %1348 = vmatpush2.xpose.msra.mxu0 0.0
    %1349 = vmatprep.subr.mxu0 0.0
    %1350 = vmatpush2.xpose.msra.mxu0 0.0
    %1351 = vmatprep.subr.mxu0 0.0
    %1352 = vmatpush2.xpose.msra.mxu0 0.0
    %1353 = vmatprep.subr.mxu0 0.0
    %1354 = vmatpush2.xpose.msra.mxu0 0.0
    %1355 = vmatprep.subr.mxu0 0.0
    %1356 = vmatpush2.xpose.msra.mxu0 0.0
    %1357 = vmatprep.subr.mxu0 0.0
    %1358 = vmatpush2.xpose.msra.mxu0 0.0
    %1359 = vmatprep.subr.mxu0 0.0
    %1360 = vmatpush2.xpose.msra.mxu0 0.0
    %1361 = vmatprep.subr.mxu0 0.0
    %1362 = vmatpush2.xpose.msra.mxu0 0.0
    %1363 = vmatprep.mubr.f32.mxu0 0.0
    %1364 = vmatmul.mubr.f32.gmra.mxu0 %v1297
    %v1365 = vpop.f32.mrf.mxu0
    %v1366 = vadd.f32 0.0, %v1365
    %v1367 = vpop.f32.mrf.mxu0
    %1368 = vdwg.mxu0
    %v1370 = vsel %vm997, %v982, 0
    %1372 = vmatprep.subr.mxu0 0.0
    %1373 = vmatpush1.xpose.msra.mxu0 0.0
    %1374 = vmatprep.subr.mxu0 0.0
    %1375 = vmatpush1.xpose.msra.mxu0 0.0
    %1376 = vmatprep.subr.mxu0 0.0
    %1377 = vmatpush1.xpose.msra.mxu0 0.0
    %1378 = vmatprep.subr.mxu0 0.0
    %1379 = vmatpush1.xpose.msra.mxu0 0.0
    %1380 = vmatprep.subr.mxu0 0.0
    %1381 = vmatpush1.xpose.msra.mxu0 0.0
    %1382 = vmatprep.subr.mxu0 0.0
    %1383 = vmatpush1.xpose.msra.mxu0 0.0
    %1384 = vmatprep.subr.mxu0 0.0
    %1385 = vmatpush1.xpose.msra.mxu0 0.0
    %1386 = vmatprep.subr.mxu0 0.0
    %1387 = vmatpush1.xpose.msra.mxu0 0.0
    %1388 = vmatprep.subr.mxu0 0.0
    %1389 = vmatpush1.xpose.msra.mxu0 0.0
    %1390 = vmatprep.subr.mxu0 0.0
    %1391 = vmatpush1.xpose.msra.mxu0 0.0
    %1392 = vmatprep.subr.mxu0 0.0
    %1393 = vmatpush1.xpose.msra.mxu0 0.0
    %1394 = vmatprep.subr.mxu0 0.0
    %1395 = vmatpush1.xpose.msra.mxu0 0.0
    %1396 = vmatprep.subr.mxu0 0.0
    %1397 = vmatpush1.xpose.msra.mxu0 0.0
    %1398 = vmatprep.subr.mxu0 0.0
    %1399 = vmatpush1.xpose.msra.mxu0 0.0
    %1400 = vmatprep.subr.mxu0 0.0
    %1401 = vmatpush1.xpose.msra.mxu0 0.0
    %1402 = vmatprep.subr.mxu0 0.0
    %1403 = vmatpush1.xpose.msra.mxu0 %v1078
    %1404 = vmatprep.subr.mxu0 0.0
    %1405 = vmatpush2.xpose.msra.mxu0 0.0
    %1406 = vmatprep.subr.mxu0 0.0
    %1407 = vmatpush2.xpose.msra.mxu0 0.0
    %1408 = vmatprep.subr.mxu0 0.0
    %1409 = vmatpush2.xpose.msra.mxu0 0.0
    %1410 = vmatprep.subr.mxu0 0.0
    %1411 = vmatpush2.xpose.msra.mxu0 0.0
    %1412 = vmatprep.subr.mxu0 0.0
    %1413 = vmatpush2.xpose.msra.mxu0 0.0
    %1414 = vmatprep.subr.mxu0 0.0
    %1415 = vmatpush2.xpose.msra.mxu0 0.0
    %1416 = vmatprep.subr.mxu0 0.0
    %1417 = vmatpush2.xpose.msra.mxu0 0.0
    %1418 = vmatprep.subr.mxu0 0.0
    %1419 = vmatpush2.xpose.msra.mxu0 0.0
    %1420 = vmatprep.subr.mxu0 0.0
    %1421 = vmatpush2.xpose.msra.mxu0 0.0
    %1422 = vmatprep.subr.mxu0 0.0
    %1423 = vmatpush2.xpose.msra.mxu0 0.0
    %1424 = vmatprep.subr.mxu0 0.0
    %1425 = vmatpush2.xpose.msra.mxu0 0.0
    %1426 = vmatprep.subr.mxu0 0.0
    %1427 = vmatpush2.xpose.msra.mxu0 0.0
    %1428 = vmatprep.subr.mxu0 0.0
    %1429 = vmatpush2.xpose.msra.mxu0 0.0
    %1430 = vmatprep.subr.mxu0 0.0
    %1431 = vmatpush2.xpose.msra.mxu0 0.0
    %1432 = vmatprep.subr.mxu0 0.0
    %1433 = vmatpush2.xpose.msra.mxu0 0.0
    %1434 = vmatprep.subr.mxu0 0.0
    %1435 = vmatpush2.xpose.msra.mxu0 0.0
    %1436 = vmatprep.mubr.f32.mxu0 0.0
    %1437 = vmatmul.mubr.f32.gmra.mxu0 %v1370
    %v1438 = vpop.f32.mrf.mxu0
    %v1439 = vadd.f32 0.0, %v1438
    %v1440 = vpop.f32.mrf.mxu0
    %1441 = vdwg.mxu0
    %v1443 = vsel %vm997, %v983, 0
    %1445 = vmatprep.subr.mxu0 0.0
    %1446 = vmatpush1.xpose.msra.mxu0 0.0
    %1447 = vmatprep.subr.mxu0 0.0
    %1448 = vmatpush1.xpose.msra.mxu0 0.0
    %1449 = vmatprep.subr.mxu0 0.0
    %1450 = vmatpush1.xpose.msra.mxu0 0.0
    %1451 = vmatprep.subr.mxu0 0.0
    %1452 = vmatpush1.xpose.msra.mxu0 0.0
    %1453 = vmatprep.subr.mxu0 0.0
    %1454 = vmatpush1.xpose.msra.mxu0 0.0
    %1455 = vmatprep.subr.mxu0 0.0
    %1456 = vmatpush1.xpose.msra.mxu0 0.0
    %1457 = vmatprep.subr.mxu0 0.0
    %1458 = vmatpush1.xpose.msra.mxu0 0.0
    %1459 = vmatprep.subr.mxu0 0.0
    %1460 = vmatpush1.xpose.msra.mxu0 0.0
    %1461 = vmatprep.subr.mxu0 0.0
    %1462 = vmatpush1.xpose.msra.mxu0 0.0
    %1463 = vmatprep.subr.mxu0 0.0
    %1464 = vmatpush1.xpose.msra.mxu0 0.0
    %1465 = vmatprep.subr.mxu0 0.0
    %1466 = vmatpush1.xpose.msra.mxu0 0.0
    %1467 = vmatprep.subr.mxu0 0.0
    %1468 = vmatpush1.xpose.msra.mxu0 0.0
    %1469 = vmatprep.subr.mxu0 0.0
    %1470 = vmatpush1.xpose.msra.mxu0 0.0
    %1471 = vmatprep.subr.mxu0 0.0
    %1472 = vmatpush1.xpose.msra.mxu0 0.0
    %1473 = vmatprep.subr.mxu0 0.0
    %1474 = vmatpush1.xpose.msra.mxu0 0.0
    %1475 = vmatprep.subr.mxu0 0.0
    %1476 = vmatpush1.xpose.msra.mxu0 %v1002
    %1477 = vmatprep.subr.mxu0 0.0
    %1478 = vmatpush2.xpose.msra.mxu0 0.0
    %1479 = vmatprep.subr.mxu0 0.0
    %1480 = vmatpush2.xpose.msra.mxu0 0.0
    %1481 = vmatprep.subr.mxu0 0.0
    %1482 = vmatpush2.xpose.msra.mxu0 0.0
    %1483 = vmatprep.subr.mxu0 0.0
    %1484 = vmatpush2.xpose.msra.mxu0 0.0
    %1485 = vmatprep.subr.mxu0 0.0
    %1486 = vmatpush2.xpose.msra.mxu0 0.0
    %1487 = vmatprep.subr.mxu0 0.0
    %1488 = vmatpush2.xpose.msra.mxu0 0.0
    %1489 = vmatprep.subr.mxu0 0.0
    %1490 = vmatpush2.xpose.msra.mxu0 0.0
    %1491 = vmatprep.subr.mxu0 0.0
    %1492 = vmatpush2.xpose.msra.mxu0 0.0
    %1493 = vmatprep.subr.mxu0 0.0
    %1494 = vmatpush2.xpose.msra.mxu0 0.0
    %1495 = vmatprep.subr.mxu0 0.0
    %1496 = vmatpush2.xpose.msra.mxu0 0.0
    %1497 = vmatprep.subr.mxu0 0.0
    %1498 = vmatpush2.xpose.msra.mxu0 0.0
    %1499 = vmatprep.subr.mxu0 0.0
    %1500 = vmatpush2.xpose.msra.mxu0 0.0
    %1501 = vmatprep.subr.mxu0 0.0
    %1502 = vmatpush2.xpose.msra.mxu0 0.0
    %1503 = vmatprep.subr.mxu0 0.0
    %1504 = vmatpush2.xpose.msra.mxu0 0.0
    %1505 = vmatprep.subr.mxu0 0.0
    %1506 = vmatpush2.xpose.msra.mxu0 0.0
    %1507 = vmatprep.subr.mxu0 0.0
    %1508 = vmatpush2.xpose.msra.mxu0 0.0
    %1509 = vmatprep.mubr.f32.mxu0 0.0
    %1510 = vmatmul.mubr.f32.gmra.mxu0 %v1443
    %v1511 = vpop.f32.mrf.mxu0
    %v1512 = vadd.f32 0.0, %v1511
    %v1513 = vpop.f32.mrf.mxu0
    %1514 = vdwg.mxu0
    %v1516 = vsel %vm997, %v984, 0
    %1518 = vmatprep.subr.mxu0 0.0
    %1519 = vmatpush1.xpose.msra.mxu0 0.0
    %1520 = vmatprep.subr.mxu0 0.0
    %1521 = vmatpush1.xpose.msra.mxu0 0.0
    %1522 = vmatprep.subr.mxu0 0.0
    %1523 = vmatpush1.xpose.msra.mxu0 0.0
    %1524 = vmatprep.subr.mxu0 0.0
    %1525 = vmatpush1.xpose.msra.mxu0 0.0
    %1526 = vmatprep.subr.mxu0 0.0
    %1527 = vmatpush1.xpose.msra.mxu0 0.0
    %1528 = vmatprep.subr.mxu0 0.0
    %1529 = vmatpush1.xpose.msra.mxu0 0.0
    %1530 = vmatprep.subr.mxu0 0.0
    %1531 = vmatpush1.xpose.msra.mxu0 0.0
    %1532 = vmatprep.subr.mxu0 0.0
    %1533 = vmatpush1.xpose.msra.mxu0 0.0
    %1534 = vmatprep.subr.mxu0 0.0
    %1535 = vmatpush1.xpose.msra.mxu0 0.0
    %1536 = vmatprep.subr.mxu0 0.0
    %1537 = vmatpush1.xpose.msra.mxu0 0.0
    %1538 = vmatprep.subr.mxu0 0.0
    %1539 = vmatpush1.xpose.msra.mxu0 0.0
    %1540 = vmatprep.subr.mxu0 0.0
    %1541 = vmatpush1.xpose.msra.mxu0 0.0
    %1542 = vmatprep.subr.mxu0 0.0
    %1543 = vmatpush1.xpose.msra.mxu0 0.0
    %1544 = vmatprep.subr.mxu0 0.0
    %1545 = vmatpush1.xpose.msra.mxu0 0.0
    %1546 = vmatprep.subr.mxu0 0.0
    %1547 = vmatpush1.xpose.msra.mxu0 0.0
    %1548 = vmatprep.subr.mxu0 0.0
    %1549 = vmatpush1.xpose.msra.mxu0 %v1078
    %1550 = vmatprep.subr.mxu0 0.0
    %1551 = vmatpush2.xpose.msra.mxu0 0.0
    %1552 = vmatprep.subr.mxu0 0.0
    %1553 = vmatpush2.xpose.msra.mxu0 0.0
    %1554 = vmatprep.subr.mxu0 0.0
    %1555 = vmatpush2.xpose.msra.mxu0 0.0
    %1556 = vmatprep.subr.mxu0 0.0
    %1557 = vmatpush2.xpose.msra.mxu0 0.0
    %1558 = vmatprep.subr.mxu0 0.0
    %1559 = vmatpush2.xpose.msra.mxu0 0.0
    %1560 = vmatprep.subr.mxu0 0.0
    %1561 = vmatpush2.xpose.msra.mxu0 0.0
    %1562 = vmatprep.subr.mxu0 0.0
    %1563 = vmatpush2.xpose.msra.mxu0 0.0
    %1564 = vmatprep.subr.mxu0 0.0
    %1565 = vmatpush2.xpose.msra.mxu0 0.0
    %1566 = vmatprep.subr.mxu0 0.0
    %1567 = vmatpush2.xpose.msra.mxu0 0.0
    %1568 = vmatprep.subr.mxu0 0.0
    %1569 = vmatpush2.xpose.msra.mxu0 0.0
    %1570 = vmatprep.subr.mxu0 0.0
    %1571 = vmatpush2.xpose.msra.mxu0 0.0
    %1572 = vmatprep.subr.mxu0 0.0
    %1573 = vmatpush2.xpose.msra.mxu0 0.0
    %1574 = vmatprep.subr.mxu0 0.0
    %1575 = vmatpush2.xpose.msra.mxu0 0.0
    %1576 = vmatprep.subr.mxu0 0.0
    %1577 = vmatpush2.xpose.msra.mxu0 0.0
    %1578 = vmatprep.subr.mxu0 0.0
    %1579 = vmatpush2.xpose.msra.mxu0 0.0
    %1580 = vmatprep.subr.mxu0 0.0
    %1581 = vmatpush2.xpose.msra.mxu0 0.0
    %1582 = vmatprep.mubr.f32.mxu0 0.0
    %1583 = vmatmul.mubr.f32.gmra.mxu0 %v1516
    %v1584 = vpop.f32.mrf.mxu0
    %v1585 = vadd.f32 0.0, %v1584
    %v1586 = vpop.f32.mrf.mxu0
    %1587 = vdwg.mxu0
    %v1589 = vsel %vm997, %v985, 0
    %v1592 = vsel %vm997, %v995, 0
    %1594 = vmatprep.subr.mxu0 0.0
    %1595 = vmatpush1.xpose.msra.mxu0 0.0
    %1596 = vmatprep.subr.mxu0 0.0
    %1597 = vmatpush1.xpose.msra.mxu0 0.0
    %1598 = vmatprep.subr.mxu0 0.0
    %1599 = vmatpush1.xpose.msra.mxu0 0.0
    %1600 = vmatprep.subr.mxu0 0.0
    %1601 = vmatpush1.xpose.msra.mxu0 0.0
    %1602 = vmatprep.subr.mxu0 0.0
    %1603 = vmatpush1.xpose.msra.mxu0 0.0
    %1604 = vmatprep.subr.mxu0 0.0
    %1605 = vmatpush1.xpose.msra.mxu0 0.0
    %1606 = vmatprep.subr.mxu0 0.0
    %1607 = vmatpush1.xpose.msra.mxu0 0.0
    %1608 = vmatprep.subr.mxu0 0.0
    %1609 = vmatpush1.xpose.msra.mxu0 0.0
    %1610 = vmatprep.subr.mxu0 0.0
    %1611 = vmatpush1.xpose.msra.mxu0 0.0
    %1612 = vmatprep.subr.mxu0 0.0
    %1613 = vmatpush1.xpose.msra.mxu0 0.0
    %1614 = vmatprep.subr.mxu0 0.0
    %1615 = vmatpush1.xpose.msra.mxu0 0.0
    %1616 = vmatprep.subr.mxu0 0.0
    %1617 = vmatpush1.xpose.msra.mxu0 0.0
    %1618 = vmatprep.subr.mxu0 0.0
    %1619 = vmatpush1.xpose.msra.mxu0 0.0
    %1620 = vmatprep.subr.mxu0 0.0
    %1621 = vmatpush1.xpose.msra.mxu0 0.0
    %1622 = vmatprep.subr.mxu0 0.0
    %1623 = vmatpush1.xpose.msra.mxu0 0.0
    %1624 = vmatprep.subr.mxu0 0.0
    %1625 = vmatpush1.xpose.msra.mxu0 %v1592
    %1626 = vmatprep.subr.mxu0 0.0
    %1627 = vmatpush2.xpose.msra.mxu0 0.0
    %1628 = vmatprep.subr.mxu0 0.0
    %1629 = vmatpush2.xpose.msra.mxu0 0.0
    %1630 = vmatprep.subr.mxu0 0.0
    %1631 = vmatpush2.xpose.msra.mxu0 0.0
    %1632 = vmatprep.subr.mxu0 0.0
    %1633 = vmatpush2.xpose.msra.mxu0 0.0
    %1634 = vmatprep.subr.mxu0 0.0
    %1635 = vmatpush2.xpose.msra.mxu0 0.0
    %1636 = vmatprep.subr.mxu0 0.0
    %1637 = vmatpush2.xpose.msra.mxu0 0.0
    %1638 = vmatprep.subr.mxu0 0.0
    %1639 = vmatpush2.xpose.msra.mxu0 0.0
    %1640 = vmatprep.subr.mxu0 0.0
    %1641 = vmatpush2.xpose.msra.mxu0 0.0
    %1642 = vmatprep.subr.mxu0 0.0
    %1643 = vmatpush2.xpose.msra.mxu0 0.0
    %1644 = vmatprep.subr.mxu0 0.0
    %1645 = vmatpush2.xpose.msra.mxu0 0.0
    %1646 = vmatprep.subr.mxu0 0.0
    %1647 = vmatpush2.xpose.msra.mxu0 0.0
    %1648 = vmatprep.subr.mxu0 0.0
    %1649 = vmatpush2.xpose.msra.mxu0 0.0
    %1650 = vmatprep.subr.mxu0 0.0
    %1651 = vmatpush2.xpose.msra.mxu0 0.0
    %1652 = vmatprep.subr.mxu0 0.0
    %1653 = vmatpush2.xpose.msra.mxu0 0.0
    %1654 = vmatprep.subr.mxu0 0.0
    %1655 = vmatpush2.xpose.msra.mxu0 0.0
    %1656 = vmatprep.subr.mxu0 0.0
    %1657 = vmatpush2.xpose.msra.mxu0 0.0
    %1658 = vmatprep.mubr.f32.mxu0 0.0
    %1659 = vmatmul.mubr.f32.gmra.mxu0 %v1589
    %v1660 = vpop.f32.mrf.mxu0
    %v1661 = vadd.f32 0.0, %v1660
    %v1662 = vpop.f32.mrf.mxu0
    %1663 = vdwg.mxu0
    %v1665 = vsel %vm997, %v986, 0
    %v1668 = vsel %vm997, %v996, 0
    %1670 = vmatprep.subr.mxu0 0.0
    %1671 = vmatpush1.xpose.msra.mxu0 0.0
    %1672 = vmatprep.subr.mxu0 0.0
    %1673 = vmatpush1.xpose.msra.mxu0 0.0
    %1674 = vmatprep.subr.mxu0 0.0
    %1675 = vmatpush1.xpose.msra.mxu0 0.0
    %1676 = vmatprep.subr.mxu0 0.0
    %1677 = vmatpush1.xpose.msra.mxu0 0.0
    %1678 = vmatprep.subr.mxu0 0.0
    %1679 = vmatpush1.xpose.msra.mxu0 0.0
    %1680 = vmatprep.subr.mxu0 0.0
    %1681 = vmatpush1.xpose.msra.mxu0 0.0
    %1682 = vmatprep.subr.mxu0 0.0
    %1683 = vmatpush1.xpose.msra.mxu0 0.0
    %1684 = vmatprep.subr.mxu0 0.0
    %1685 = vmatpush1.xpose.msra.mxu0 0.0
    %1686 = vmatprep.subr.mxu0 0.0
    %1687 = vmatpush1.xpose.msra.mxu0 0.0
    %1688 = vmatprep.subr.mxu0 0.0
    %1689 = vmatpush1.xpose.msra.mxu0 0.0
    %1690 = vmatprep.subr.mxu0 0.0
    %1691 = vmatpush1.xpose.msra.mxu0 0.0
    %1692 = vmatprep.subr.mxu0 0.0
    %1693 = vmatpush1.xpose.msra.mxu0 0.0
    %1694 = vmatprep.subr.mxu0 0.0
    %1695 = vmatpush1.xpose.msra.mxu0 0.0
    %1696 = vmatprep.subr.mxu0 0.0
    %1697 = vmatpush1.xpose.msra.mxu0 0.0
    %1698 = vmatprep.subr.mxu0 0.0
    %1699 = vmatpush1.xpose.msra.mxu0 0.0
    %1700 = vmatprep.subr.mxu0 0.0
    %1701 = vmatpush1.xpose.msra.mxu0 %v1668
    %1702 = vmatprep.subr.mxu0 0.0
    %1703 = vmatpush2.xpose.msra.mxu0 0.0
    %1704 = vmatprep.subr.mxu0 0.0
    %1705 = vmatpush2.xpose.msra.mxu0 0.0
    %1706 = vmatprep.subr.mxu0 0.0
    %1707 = vmatpush2.xpose.msra.mxu0 0.0
    %1708 = vmatprep.subr.mxu0 0.0
    %1709 = vmatpush2.xpose.msra.mxu0 0.0
    %1710 = vmatprep.subr.mxu0 0.0
    %1711 = vmatpush2.xpose.msra.mxu0 0.0
    %1712 = vmatprep.subr.mxu0 0.0
    %1713 = vmatpush2.xpose.msra.mxu0 0.0
    %1714 = vmatprep.subr.mxu0 0.0
    %1715 = vmatpush2.xpose.msra.mxu0 0.0
    %1716 = vmatprep.subr.mxu0 0.0
    %1717 = vmatpush2.xpose.msra.mxu0 0.0
    %1718 = vmatprep.subr.mxu0 0.0
    %1719 = vmatpush2.xpose.msra.mxu0 0.0
    %1720 = vmatprep.subr.mxu0 0.0
    %1721 = vmatpush2.xpose.msra.mxu0 0.0
    %1722 = vmatprep.subr.mxu0 0.0
    %1723 = vmatpush2.xpose.msra.mxu0 0.0
    %1724 = vmatprep.subr.mxu0 0.0
    %1725 = vmatpush2.xpose.msra.mxu0 0.0
    %1726 = vmatprep.subr.mxu0 0.0
    %1727 = vmatpush2.xpose.msra.mxu0 0.0
    %1728 = vmatprep.subr.mxu0 0.0
    %1729 = vmatpush2.xpose.msra.mxu0 0.0
    %1730 = vmatprep.subr.mxu0 0.0
    %1731 = vmatpush2.xpose.msra.mxu0 0.0
    %1732 = vmatprep.subr.mxu0 0.0
    %1733 = vmatpush2.xpose.msra.mxu0 0.0
    %1734 = vmatprep.mubr.f32.mxu0 0.0
    %1735 = vmatmul.mubr.f32.gmra.mxu0 %v1665
    %v1736 = vpop.f32.mrf.mxu0
    %v1737 = vadd.f32 0.0, %v1736
    %v1738 = vpop.f32.mrf.mxu0
    %1739 = vdwg.mxu0
    %v1741 = vsel %vm997, %v987, 0
    %1743 = vmatprep.subr.mxu0 0.0
    %1744 = vmatpush1.xpose.msra.mxu0 0.0
    %1745 = vmatprep.subr.mxu0 0.0
    %1746 = vmatpush1.xpose.msra.mxu0 0.0
    %1747 = vmatprep.subr.mxu0 0.0
    %1748 = vmatpush1.xpose.msra.mxu0 0.0
    %1749 = vmatprep.subr.mxu0 0.0
    %1750 = vmatpush1.xpose.msra.mxu0 0.0
    %1751 = vmatprep.subr.mxu0 0.0
    %1752 = vmatpush1.xpose.msra.mxu0 0.0
    %1753 = vmatprep.subr.mxu0 0.0
    %1754 = vmatpush1.xpose.msra.mxu0 0.0
    %1755 = vmatprep.subr.mxu0 0.0
    %1756 = vmatpush1.xpose.msra.mxu0 0.0
    %1757 = vmatprep.subr.mxu0 0.0
    %1758 = vmatpush1.xpose.msra.mxu0 0.0
    %1759 = vmatprep.subr.mxu0 0.0
    %1760 = vmatpush1.xpose.msra.mxu0 0.0
    %1761 = vmatprep.subr.mxu0 0.0
    %1762 = vmatpush1.xpose.msra.mxu0 0.0
    %1763 = vmatprep.subr.mxu0 0.0
    %1764 = vmatpush1.xpose.msra.mxu0 0.0
    %1765 = vmatprep.subr.mxu0 0.0
    %1766 = vmatpush1.xpose.msra.mxu0 0.0
    %1767 = vmatprep.subr.mxu0 0.0
    %1768 = vmatpush1.xpose.msra.mxu0 0.0
    %1769 = vmatprep.subr.mxu0 0.0
    %1770 = vmatpush1.xpose.msra.mxu0 0.0
    %1771 = vmatprep.subr.mxu0 0.0
    %1772 = vmatpush1.xpose.msra.mxu0 0.0
    %1773 = vmatprep.subr.mxu0 0.0
    %1774 = vmatpush1.xpose.msra.mxu0 %v1592
    %1775 = vmatprep.subr.mxu0 0.0
    %1776 = vmatpush2.xpose.msra.mxu0 0.0
    %1777 = vmatprep.subr.mxu0 0.0
    %1778 = vmatpush2.xpose.msra.mxu0 0.0
    %1779 = vmatprep.subr.mxu0 0.0
    %1780 = vmatpush2.xpose.msra.mxu0 0.0
    %1781 = vmatprep.subr.mxu0 0.0
    %1782 = vmatpush2.xpose.msra.mxu0 0.0
    %1783 = vmatprep.subr.mxu0 0.0
    %1784 = vmatpush2.xpose.msra.mxu0 0.0
    %1785 = vmatprep.subr.mxu0 0.0
    %1786 = vmatpush2.xpose.msra.mxu0 0.0
    %1787 = vmatprep.subr.mxu0 0.0
    %1788 = vmatpush2.xpose.msra.mxu0 0.0
    %1789 = vmatprep.subr.mxu0 0.0
    %1790 = vmatpush2.xpose.msra.mxu0 0.0
    %1791 = vmatprep.subr.mxu0 0.0
    %1792 = vmatpush2.xpose.msra.mxu0 0.0
    %1793 = vmatprep.subr.mxu0 0.0
    %1794 = vmatpush2.xpose.msra.mxu0 0.0
    %1795 = vmatprep.subr.mxu0 0.0
    %1796 = vmatpush2.xpose.msra.mxu0 0.0
    %1797 = vmatprep.subr.mxu0 0.0
    %1798 = vmatpush2.xpose.msra.mxu0 0.0
    %1799 = vmatprep.subr.mxu0 0.0
    %1800 = vmatpush2.xpose.msra.mxu0 0.0
    %1801 = vmatprep.subr.mxu0 0.0
    %1802 = vmatpush2.xpose.msra.mxu0 0.0
    %1803 = vmatprep.subr.mxu0 0.0
    %1804 = vmatpush2.xpose.msra.mxu0 0.0
    %1805 = vmatprep.subr.mxu0 0.0
    %1806 = vmatpush2.xpose.msra.mxu0 0.0
    %1807 = vmatprep.mubr.f32.mxu0 0.0
    %1808 = vmatmul.mubr.f32.gmra.mxu0 %v1741
    %v1809 = vpop.f32.mrf.mxu0
    %v1810 = vadd.f32 0.0, %v1809
    %v1811 = vpop.f32.mrf.mxu0
    %1812 = vdwg.mxu0
    %v1814 = vsel %vm997, %v988, 0
    %1816 = vmatprep.subr.mxu0 0.0
    %1817 = vmatpush1.xpose.msra.mxu0 0.0
    %1818 = vmatprep.subr.mxu0 0.0
    %1819 = vmatpush1.xpose.msra.mxu0 0.0
    %1820 = vmatprep.subr.mxu0 0.0
    %1821 = vmatpush1.xpose.msra.mxu0 0.0
    %1822 = vmatprep.subr.mxu0 0.0
    %1823 = vmatpush1.xpose.msra.mxu0 0.0
    %1824 = vmatprep.subr.mxu0 0.0
    %1825 = vmatpush1.xpose.msra.mxu0 0.0
    %1826 = vmatprep.subr.mxu0 0.0
    %1827 = vmatpush1.xpose.msra.mxu0 0.0
    %1828 = vmatprep.subr.mxu0 0.0
    %1829 = vmatpush1.xpose.msra.mxu0 0.0
    %1830 = vmatprep.subr.mxu0 0.0
    %1831 = vmatpush1.xpose.msra.mxu0 0.0
    %1832 = vmatprep.subr.mxu0 0.0
    %1833 = vmatpush1.xpose.msra.mxu0 0.0
    %1834 = vmatprep.subr.mxu0 0.0
    %1835 = vmatpush1.xpose.msra.mxu0 0.0
    %1836 = vmatprep.subr.mxu0 0.0
    %1837 = vmatpush1.xpose.msra.mxu0 0.0
    %1838 = vmatprep.subr.mxu0 0.0
    %1839 = vmatpush1.xpose.msra.mxu0 0.0
    %1840 = vmatprep.subr.mxu0 0.0
    %1841 = vmatpush1.xpose.msra.mxu0 0.0
    %1842 = vmatprep.subr.mxu0 0.0
    %1843 = vmatpush1.xpose.msra.mxu0 0.0
    %1844 = vmatprep.subr.mxu0 0.0
    %1845 = vmatpush1.xpose.msra.mxu0 0.0
    %1846 = vmatprep.subr.mxu0 0.0
    %1847 = vmatpush1.xpose.msra.mxu0 %v1668
    %1848 = vmatprep.subr.mxu0 0.0
    %1849 = vmatpush2.xpose.msra.mxu0 0.0
    %1850 = vmatprep.subr.mxu0 0.0
    %1851 = vmatpush2.xpose.msra.mxu0 0.0
    %1852 = vmatprep.subr.mxu0 0.0
    %1853 = vmatpush2.xpose.msra.mxu0 0.0
    %1854 = vmatprep.subr.mxu0 0.0
    %1855 = vmatpush2.xpose.msra.mxu0 0.0
    %1856 = vmatprep.subr.mxu0 0.0
    %1857 = vmatpush2.xpose.msra.mxu0 0.0
    %1858 = vmatprep.subr.mxu0 0.0
    %1859 = vmatpush2.xpose.msra.mxu0 0.0
    %1860 = vmatprep.subr.mxu0 0.0
    %1861 = vmatpush2.xpose.msra.mxu0 0.0
    %1862 = vmatprep.subr.mxu0 0.0
    %1863 = vmatpush2.xpose.msra.mxu0 0.0
    %1864 = vmatprep.subr.mxu0 0.0
    %1865 = vmatpush2.xpose.msra.mxu0 0.0
    %1866 = vmatprep.subr.mxu0 0.0
    %1867 = vmatpush2.xpose.msra.mxu0 0.0
    %1868 = vmatprep.subr.mxu0 0.0
    %1869 = vmatpush2.xpose.msra.mxu0 0.0
    %1870 = vmatprep.subr.mxu0 0.0
    %1871 = vmatpush2.xpose.msra.mxu0 0.0
    %1872 = vmatprep.subr.mxu0 0.0
    %1873 = vmatpush2.xpose.msra.mxu0 0.0
    %1874 = vmatprep.subr.mxu0 0.0
    %1875 = vmatpush2.xpose.msra.mxu0 0.0
    %1876 = vmatprep.subr.mxu0 0.0
    %1877 = vmatpush2.xpose.msra.mxu0 0.0
    %1878 = vmatprep.subr.mxu0 0.0
    %1879 = vmatpush2.xpose.msra.mxu0 0.0
    %1880 = vmatprep.mubr.f32.mxu0 0.0
    %1881 = vmatmul.mubr.f32.gmra.mxu0 %v1814
    %v1882 = vpop.f32.mrf.mxu0
    %v1883 = vadd.f32 0.0, %v1882
    %v1884 = vpop.f32.mrf.mxu0
    %1885 = vdwg.mxu0
    %v1887 = vsel %vm997, %v989, 0
    %1889 = vmatprep.subr.mxu0 0.0
    %1890 = vmatpush1.xpose.msra.mxu0 0.0
    %1891 = vmatprep.subr.mxu0 0.0
    %1892 = vmatpush1.xpose.msra.mxu0 0.0
    %1893 = vmatprep.subr.mxu0 0.0
    %1894 = vmatpush1.xpose.msra.mxu0 0.0
    %1895 = vmatprep.subr.mxu0 0.0
    %1896 = vmatpush1.xpose.msra.mxu0 0.0
    %1897 = vmatprep.subr.mxu0 0.0
    %1898 = vmatpush1.xpose.msra.mxu0 0.0
    %1899 = vmatprep.subr.mxu0 0.0
    %1900 = vmatpush1.xpose.msra.mxu0 0.0
    %1901 = vmatprep.subr.mxu0 0.0
    %1902 = vmatpush1.xpose.msra.mxu0 0.0
    %1903 = vmatprep.subr.mxu0 0.0
    %1904 = vmatpush1.xpose.msra.mxu0 0.0
    %1905 = vmatprep.subr.mxu0 0.0
    %1906 = vmatpush1.xpose.msra.mxu0 0.0
    %1907 = vmatprep.subr.mxu0 0.0
    %1908 = vmatpush1.xpose.msra.mxu0 0.0
    %1909 = vmatprep.subr.mxu0 0.0
    %1910 = vmatpush1.xpose.msra.mxu0 0.0
    %1911 = vmatprep.subr.mxu0 0.0
    %1912 = vmatpush1.xpose.msra.mxu0 0.0
    %1913 = vmatprep.subr.mxu0 0.0
    %1914 = vmatpush1.xpose.msra.mxu0 0.0
    %1915 = vmatprep.subr.mxu0 0.0
    %1916 = vmatpush1.xpose.msra.mxu0 0.0
    %1917 = vmatprep.subr.mxu0 0.0
    %1918 = vmatpush1.xpose.msra.mxu0 0.0
    %1919 = vmatprep.subr.mxu0 0.0
    %1920 = vmatpush1.xpose.msra.mxu0 %v1592
    %1921 = vmatprep.subr.mxu0 0.0
    %1922 = vmatpush2.xpose.msra.mxu0 0.0
    %1923 = vmatprep.subr.mxu0 0.0
    %1924 = vmatpush2.xpose.msra.mxu0 0.0
    %1925 = vmatprep.subr.mxu0 0.0
    %1926 = vmatpush2.xpose.msra.mxu0 0.0
    %1927 = vmatprep.subr.mxu0 0.0
    %1928 = vmatpush2.xpose.msra.mxu0 0.0
    %1929 = vmatprep.subr.mxu0 0.0
    %1930 = vmatpush2.xpose.msra.mxu0 0.0
    %1931 = vmatprep.subr.mxu0 0.0
    %1932 = vmatpush2.xpose.msra.mxu0 0.0
    %1933 = vmatprep.subr.mxu0 0.0
    %1934 = vmatpush2.xpose.msra.mxu0 0.0
    %1935 = vmatprep.subr.mxu0 0.0
    %1936 = vmatpush2.xpose.msra.mxu0 0.0
    %1937 = vmatprep.subr.mxu0 0.0
    %1938 = vmatpush2.xpose.msra.mxu0 0.0
    %1939 = vmatprep.subr.mxu0 0.0
    %1940 = vmatpush2.xpose.msra.mxu0 0.0
    %1941 = vmatprep.subr.mxu0 0.0
    %1942 = vmatpush2.xpose.msra.mxu0 0.0
    %1943 = vmatprep.subr.mxu0 0.0
    %1944 = vmatpush2.xpose.msra.mxu0 0.0
    %1945 = vmatprep.subr.mxu0 0.0
    %1946 = vmatpush2.xpose.msra.mxu0 0.0
    %1947 = vmatprep.subr.mxu0 0.0
    %1948 = vmatpush2.xpose.msra.mxu0 0.0
    %1949 = vmatprep.subr.mxu0 0.0
    %1950 = vmatpush2.xpose.msra.mxu0 0.0
    %1951 = vmatprep.subr.mxu0 0.0
    %1952 = vmatpush2.xpose.msra.mxu0 0.0
    %1953 = vmatprep.mubr.f32.mxu0 0.0
    %1954 = vmatmul.mubr.f32.gmra.mxu0 %v1887
    %v1955 = vpop.f32.mrf.mxu0
    %v1956 = vadd.f32 0.0, %v1955
    %v1957 = vpop.f32.mrf.mxu0
    %1958 = vdwg.mxu0
    %v1960 = vsel %vm997, %v990, 0
    %1962 = vmatprep.subr.mxu0 0.0
    %1963 = vmatpush1.xpose.msra.mxu0 0.0
    %1964 = vmatprep.subr.mxu0 0.0
    %1965 = vmatpush1.xpose.msra.mxu0 0.0
    %1966 = vmatprep.subr.mxu0 0.0
    %1967 = vmatpush1.xpose.msra.mxu0 0.0
    %1968 = vmatprep.subr.mxu0 0.0
    %1969 = vmatpush1.xpose.msra.mxu0 0.0
    %1970 = vmatprep.subr.mxu0 0.0
    %1971 = vmatpush1.xpose.msra.mxu0 0.0
    %1972 = vmatprep.subr.mxu0 0.0
    %1973 = vmatpush1.xpose.msra.mxu0 0.0
    %1974 = vmatprep.subr.mxu0 0.0
    %1975 = vmatpush1.xpose.msra.mxu0 0.0
    %1976 = vmatprep.subr.mxu0 0.0
    %1977 = vmatpush1.xpose.msra.mxu0 0.0
    %1978 = vmatprep.subr.mxu0 0.0
    %1979 = vmatpush1.xpose.msra.mxu0 0.0
    %1980 = vmatprep.subr.mxu0 0.0
    %1981 = vmatpush1.xpose.msra.mxu0 0.0
    %1982 = vmatprep.subr.mxu0 0.0
    %1983 = vmatpush1.xpose.msra.mxu0 0.0
    %1984 = vmatprep.subr.mxu0 0.0
    %1985 = vmatpush1.xpose.msra.mxu0 0.0
    %1986 = vmatprep.subr.mxu0 0.0
    %1987 = vmatpush1.xpose.msra.mxu0 0.0
    %1988 = vmatprep.subr.mxu0 0.0
    %1989 = vmatpush1.xpose.msra.mxu0 0.0
    %1990 = vmatprep.subr.mxu0 0.0
    %1991 = vmatpush1.xpose.msra.mxu0 0.0
    %1992 = vmatprep.subr.mxu0 0.0
    %1993 = vmatpush1.xpose.msra.mxu0 %v1668
    %1994 = vmatprep.subr.mxu0 0.0
    %1995 = vmatpush2.xpose.msra.mxu0 0.0
    %1996 = vmatprep.subr.mxu0 0.0
    %1997 = vmatpush2.xpose.msra.mxu0 0.0
    %1998 = vmatprep.subr.mxu0 0.0
    %1999 = vmatpush2.xpose.msra.mxu0 0.0
    %2000 = vmatprep.subr.mxu0 0.0
    %2001 = vmatpush2.xpose.msra.mxu0 0.0
    %2002 = vmatprep.subr.mxu0 0.0
    %2003 = vmatpush2.xpose.msra.mxu0 0.0
    %2004 = vmatprep.subr.mxu0 0.0
    %2005 = vmatpush2.xpose.msra.mxu0 0.0
    %2006 = vmatprep.subr.mxu0 0.0
    %2007 = vmatpush2.xpose.msra.mxu0 0.0
    %2008 = vmatprep.subr.mxu0 0.0
    %2009 = vmatpush2.xpose.msra.mxu0 0.0
    %2010 = vmatprep.subr.mxu0 0.0
    %2011 = vmatpush2.xpose.msra.mxu0 0.0
    %2012 = vmatprep.subr.mxu0 0.0
    %2013 = vmatpush2.xpose.msra.mxu0 0.0
    %2014 = vmatprep.subr.mxu0 0.0
    %2015 = vmatpush2.xpose.msra.mxu0 0.0
    %2016 = vmatprep.subr.mxu0 0.0
    %2017 = vmatpush2.xpose.msra.mxu0 0.0
    %2018 = vmatprep.subr.mxu0 0.0
    %2019 = vmatpush2.xpose.msra.mxu0 0.0
    %2020 = vmatprep.subr.mxu0 0.0
    %2021 = vmatpush2.xpose.msra.mxu0 0.0
    %2022 = vmatprep.subr.mxu0 0.0
    %2023 = vmatpush2.xpose.msra.mxu0 0.0
    %2024 = vmatprep.subr.mxu0 0.0
    %2025 = vmatpush2.xpose.msra.mxu0 0.0
    %2026 = vmatprep.mubr.f32.mxu0 0.0
    %2027 = vmatmul.mubr.f32.gmra.mxu0 %v1960
    %v2028 = vpop.f32.mrf.mxu0
    %v2029 = vadd.f32 0.0, %v2028
    %v2030 = vpop.f32.mrf.mxu0
    %2031 = vdwg.mxu0
    %v2033 = vsel %vm997, %v991, 0
    %2035 = vmatprep.subr.mxu0 0.0
    %2036 = vmatpush1.xpose.msra.mxu0 0.0
    %2037 = vmatprep.subr.mxu0 0.0
    %2038 = vmatpush1.xpose.msra.mxu0 0.0
    %2039 = vmatprep.subr.mxu0 0.0
    %2040 = vmatpush1.xpose.msra.mxu0 0.0
    %2041 = vmatprep.subr.mxu0 0.0
    %2042 = vmatpush1.xpose.msra.mxu0 0.0
    %2043 = vmatprep.subr.mxu0 0.0
    %2044 = vmatpush1.xpose.msra.mxu0 0.0
    %2045 = vmatprep.subr.mxu0 0.0
    %2046 = vmatpush1.xpose.msra.mxu0 0.0
    %2047 = vmatprep.subr.mxu0 0.0
    %2048 = vmatpush1.xpose.msra.mxu0 0.0
    %2049 = vmatprep.subr.mxu0 0.0
    %2050 = vmatpush1.xpose.msra.mxu0 0.0
    %2051 = vmatprep.subr.mxu0 0.0
    %2052 = vmatpush1.xpose.msra.mxu0 0.0
    %2053 = vmatprep.subr.mxu0 0.0
    %2054 = vmatpush1.xpose.msra.mxu0 0.0
    %2055 = vmatprep.subr.mxu0 0.0
    %2056 = vmatpush1.xpose.msra.mxu0 0.0
    %2057 = vmatprep.subr.mxu0 0.0
    %2058 = vmatpush1.xpose.msra.mxu0 0.0
    %2059 = vmatprep.subr.mxu0 0.0
    %2060 = vmatpush1.xpose.msra.mxu0 0.0
    %2061 = vmatprep.subr.mxu0 0.0
    %2062 = vmatpush1.xpose.msra.mxu0 0.0
    %2063 = vmatprep.subr.mxu0 0.0
    %2064 = vmatpush1.xpose.msra.mxu0 0.0
    %2065 = vmatprep.subr.mxu0 0.0
    %2066 = vmatpush1.xpose.msra.mxu0 %v1592
    %2067 = vmatprep.subr.mxu0 0.0
    %2068 = vmatpush2.xpose.msra.mxu0 0.0
    %2069 = vmatprep.subr.mxu0 0.0
    %2070 = vmatpush2.xpose.msra.mxu0 0.0
    %2071 = vmatprep.subr.mxu0 0.0
    %2072 = vmatpush2.xpose.msra.mxu0 0.0
    %2073 = vmatprep.subr.mxu0 0.0
    %2074 = vmatpush2.xpose.msra.mxu0 0.0
    %2075 = vmatprep.subr.mxu0 0.0
    %2076 = vmatpush2.xpose.msra.mxu0 0.0
    %2077 = vmatprep.subr.mxu0 0.0
    %2078 = vmatpush2.xpose.msra.mxu0 0.0
    %2079 = vmatprep.subr.mxu0 0.0
    %2080 = vmatpush2.xpose.msra.mxu0 0.0
    %2081 = vmatprep.subr.mxu0 0.0
    %2082 = vmatpush2.xpose.msra.mxu0 0.0
    %2083 = vmatprep.subr.mxu0 0.0
    %2084 = vmatpush2.xpose.msra.mxu0 0.0
    %2085 = vmatprep.subr.mxu0 0.0
    %2086 = vmatpush2.xpose.msra.mxu0 0.0
    %2087 = vmatprep.subr.mxu0 0.0
    %2088 = vmatpush2.xpose.msra.mxu0 0.0
    %2089 = vmatprep.subr.mxu0 0.0
    %2090 = vmatpush2.xpose.msra.mxu0 0.0
    %2091 = vmatprep.subr.mxu0 0.0
    %2092 = vmatpush2.xpose.msra.mxu0 0.0
    %2093 = vmatprep.subr.mxu0 0.0
    %2094 = vmatpush2.xpose.msra.mxu0 0.0
    %2095 = vmatprep.subr.mxu0 0.0
    %2096 = vmatpush2.xpose.msra.mxu0 0.0
    %2097 = vmatprep.subr.mxu0 0.0
    %2098 = vmatpush2.xpose.msra.mxu0 0.0
    %2099 = vmatprep.mubr.f32.mxu0 0.0
    %2100 = vmatmul.mubr.f32.gmra.mxu0 %v2033
    %v2101 = vpop.f32.mrf.mxu0
    %v2102 = vadd.f32 0.0, %v2101
    %v2103 = vpop.f32.mrf.mxu0
    %2104 = vdwg.mxu0
    %v2106 = vsel %vm997, %v992, 0
    %2108 = vmatprep.subr.mxu0 0.0
    %2109 = vmatpush1.xpose.msra.mxu0 0.0
    %2110 = vmatprep.subr.mxu0 0.0
    %2111 = vmatpush1.xpose.msra.mxu0 0.0
    %2112 = vmatprep.subr.mxu0 0.0
    %2113 = vmatpush1.xpose.msra.mxu0 0.0
    %2114 = vmatprep.subr.mxu0 0.0
    %2115 = vmatpush1.xpose.msra.mxu0 0.0
    %2116 = vmatprep.subr.mxu0 0.0
    %2117 = vmatpush1.xpose.msra.mxu0 0.0
    %2118 = vmatprep.subr.mxu0 0.0
    %2119 = vmatpush1.xpose.msra.mxu0 0.0
    %2120 = vmatprep.subr.mxu0 0.0
    %2121 = vmatpush1.xpose.msra.mxu0 0.0
    %2122 = vmatprep.subr.mxu0 0.0
    %2123 = vmatpush1.xpose.msra.mxu0 0.0
    %2124 = vmatprep.subr.mxu0 0.0
    %2125 = vmatpush1.xpose.msra.mxu0 0.0
    %2126 = vmatprep.subr.mxu0 0.0
    %2127 = vmatpush1.xpose.msra.mxu0 0.0
    %2128 = vmatprep.subr.mxu0 0.0
    %2129 = vmatpush1.xpose.msra.mxu0 0.0
    %2130 = vmatprep.subr.mxu0 0.0
    %2131 = vmatpush1.xpose.msra.mxu0 0.0
    %2132 = vmatprep.subr.mxu0 0.0
    %2133 = vmatpush1.xpose.msra.mxu0 0.0
    %2134 = vmatprep.subr.mxu0 0.0
    %2135 = vmatpush1.xpose.msra.mxu0 0.0
    %2136 = vmatprep.subr.mxu0 0.0
    %2137 = vmatpush1.xpose.msra.mxu0 0.0
    %2138 = vmatprep.subr.mxu0 0.0
    %2139 = vmatpush1.xpose.msra.mxu0 %v1668
    %2140 = vmatprep.subr.mxu0 0.0
    %2141 = vmatpush2.xpose.msra.mxu0 0.0
    %2142 = vmatprep.subr.mxu0 0.0
    %2143 = vmatpush2.xpose.msra.mxu0 0.0
    %2144 = vmatprep.subr.mxu0 0.0
    %2145 = vmatpush2.xpose.msra.mxu0 0.0
    %2146 = vmatprep.subr.mxu0 0.0
    %2147 = vmatpush2.xpose.msra.mxu0 0.0
    %2148 = vmatprep.subr.mxu0 0.0
    %2149 = vmatpush2.xpose.msra.mxu0 0.0
    %2150 = vmatprep.subr.mxu0 0.0
    %2151 = vmatpush2.xpose.msra.mxu0 0.0
    %2152 = vmatprep.subr.mxu0 0.0
    %2153 = vmatpush2.xpose.msra.mxu0 0.0
    %2154 = vmatprep.subr.mxu0 0.0
    %2155 = vmatpush2.xpose.msra.mxu0 0.0
    %2156 = vmatprep.subr.mxu0 0.0
    %2157 = vmatpush2.xpose.msra.mxu0 0.0
    %2158 = vmatprep.subr.mxu0 0.0
    %2159 = vmatpush2.xpose.msra.mxu0 0.0
    %2160 = vmatprep.subr.mxu0 0.0
    %2161 = vmatpush2.xpose.msra.mxu0 0.0
    %2162 = vmatprep.subr.mxu0 0.0
    %2163 = vmatpush2.xpose.msra.mxu0 0.0
    %2164 = vmatprep.subr.mxu0 0.0
    %2165 = vmatpush2.xpose.msra.mxu0 0.0
    %2166 = vmatprep.subr.mxu0 0.0
    %2167 = vmatpush2.xpose.msra.mxu0 0.0
    %2168 = vmatprep.subr.mxu0 0.0
    %2169 = vmatpush2.xpose.msra.mxu0 0.0
    %2170 = vmatprep.subr.mxu0 0.0
    %2171 = vmatpush2.xpose.msra.mxu0 0.0
    %2172 = vmatprep.mubr.f32.mxu0 0.0
    %2173 = vmatmul.mubr.f32.gmra.mxu0 %v2106
    %v2174 = vpop.f32.mrf.mxu0
    %v2175 = vadd.f32 0.0, %v2174
    %v2176 = vpop.f32.mrf.mxu0
    %2177 = vdwg.mxu0
    %vm2178 = vcmask 64512
    %v2179 = vsel %vm2178, %v1071, -inf
    %2180 = vmax.xlane.f32.xlu0 %v2179
    %v2181 = vpop.xlane.xlu0 %2180
    %v2182 = vsel %vm2178, %v1147, -inf
    %2183 = vmax.xlane.f32.xlu0 %v2182
    %v2184 = vpop.xlane.xlu0 %2183
    %v2185 = vsel %vm2178, %v1220, -inf
    %2186 = vmax.xlane.f32.xlu0 %v2185
    %v2187 = vpop.xlane.xlu0 %2186
    %v2188 = vsel %vm2178, %v1293, -inf
    %2189 = vmax.xlane.f32.xlu0 %v2188
    %v2190 = vpop.xlane.xlu0 %2189
    %v2191 = vsel %vm2178, %v1366, -inf
    %2192 = vmax.xlane.f32.xlu0 %v2191
    %v2193 = vpop.xlane.xlu0 %2192
    %v2194 = vsel %vm2178, %v1439, -inf
    %2195 = vmax.xlane.f32.xlu0 %v2194
    %v2196 = vpop.xlane.xlu0 %2195
    %v2197 = vsel %vm2178, %v1512, -inf
    %2198 = vmax.xlane.f32.xlu0 %v2197
    %v2199 = vpop.xlane.xlu0 %2198
    %v2200 = vsel %vm2178, %v1585, -inf
    %2201 = vmax.xlane.f32.xlu0 %v2200
    %v2202 = vpop.xlane.xlu0 %2201
    %v2203 = vsel %vm2178, %v1661, -inf
    %2204 = vmax.xlane.f32.xlu0 %v2203
    %v2205 = vpop.xlane.xlu0 %2204
    %v2206 = vsel %vm2178, %v1737, -inf
    %2207 = vmax.xlane.f32.xlu0 %v2206
    %v2208 = vpop.xlane.xlu0 %2207
    %v2209 = vsel %vm2178, %v1810, -inf
    %2210 = vmax.xlane.f32.xlu0 %v2209
    %v2211 = vpop.xlane.xlu0 %2210
    %v2212 = vsel %vm2178, %v1883, -inf
    %2213 = vmax.xlane.f32.xlu0 %v2212
    %v2214 = vpop.xlane.xlu0 %2213
    %v2215 = vsel %vm2178, %v1956, -inf
    %2216 = vmax.xlane.f32.xlu0 %v2215
    %v2217 = vpop.xlane.xlu0 %2216
    %v2218 = vsel %vm2178, %v2029, -inf
    %2219 = vmax.xlane.f32.xlu0 %v2218
    %v2220 = vpop.xlane.xlu0 %2219
    %v2221 = vsel %vm2178, %v2102, -inf
    %2222 = vmax.xlane.f32.xlu0 %v2221
    %v2223 = vpop.xlane.xlu0 %2222
    %v2224 = vsel %vm2178, %v2175, -inf
    %2225 = vmax.xlane.f32.xlu0 %v2224
    %v2226 = vpop.xlane.xlu0 %2225
    %v2227 = vsub.f32 %v1071, %v2181
    %v2228 = vsub.f32 %v1147, %v2184
    %v2229 = vsub.f32 %v1220, %v2187
    %v2230 = vsub.f32 %v1293, %v2190
    %v2231 = vsub.f32 %v1366, %v2193
    %v2232 = vsub.f32 %v1439, %v2196
    %v2233 = vsub.f32 %v1512, %v2199
    %v2234 = vsub.f32 %v1585, %v2202
    %v2235 = vsub.f32 %v1661, %v2205
    %v2236 = vsub.f32 %v1737, %v2208
    %v2237 = vsub.f32 %v1810, %v2211
    %v2238 = vsub.f32 %v1883, %v2214
    %v2239 = vsub.f32 %v1956, %v2217
    %v2240 = vsub.f32 %v2029, %v2220
    %v2241 = vsub.f32 %v2102, %v2223
    %v2242 = vsub.f32 %v2175, %v2226
    %v2243 = vmul.f32 %v2227, 1.442695
    %v2244 = vpow.pop %v2243
    %v2245 = vmul.f32 %v2228, 1.442695
    %v2246 = vpow.pop %v2245
    %v2247 = vmul.f32 %v2229, 1.442695
    %v2248 = vpow.pop %v2247
    %v2249 = vmul.f32 %v2230, 1.442695
    %v2250 = vpow.pop %v2249
    %v2251 = vmul.f32 %v2231, 1.442695
    %v2252 = vpow.pop %v2251
    %v2253 = vmul.f32 %v2232, 1.442695
    %v2254 = vpow.pop %v2253
    %v2255 = vmul.f32 %v2233, 1.442695
    %v2256 = vpow.pop %v2255
    %v2257 = vmul.f32 %v2234, 1.442695
    %v2258 = vpow.pop %v2257
    %v2259 = vmul.f32 %v2235, 1.442695
    %v2260 = vpow.pop %v2259
    %v2261 = vmul.f32 %v2236, 1.442695
    %v2262 = vpow.pop %v2261
    %v2263 = vmul.f32 %v2237, 1.442695
    %v2264 = vpow.pop %v2263
    %v2265 = vmul.f32 %v2238, 1.442695
    %v2266 = vpow.pop %v2265
    %v2267 = vmul.f32 %v2239, 1.442695
    %v2268 = vpow.pop %v2267
    %v2269 = vmul.f32 %v2240, 1.442695
    %v2270 = vpow.pop %v2269
    %v2271 = vmul.f32 %v2241, 1.442695
    %v2272 = vpow.pop %v2271
    %v2273 = vmul.f32 %v2242, 1.442695
    %v2274 = vpow.pop %v2273
    %v2275 = vsel %vm2178, %v2244, 0.0
    %2276 = vadd.xlane.f32.xlu0 %v2275
    %v2277 = vpop.xlane.xlu0 %2276
    %v2278 = vsel %vm2178, %v2246, 0.0
    %2279 = vadd.xlane.f32.xlu0 %v2278
    %v2280 = vpop.xlane.xlu0 %2279
    %v2281 = vsel %vm2178, %v2248, 0.0
    %2282 = vadd.xlane.f32.xlu0 %v2281
    %v2283 = vpop.xlane.xlu0 %2282
    %v2284 = vsel %vm2178, %v2250, 0.0
    %2285 = vadd.xlane.f32.xlu0 %v2284
    %v2286 = vpop.xlane.xlu0 %2285
    %v2287 = vsel %vm2178, %v2252, 0.0
    %2288 = vadd.xlane.f32.xlu0 %v2287
    %v2289 = vpop.xlane.xlu0 %2288
    %v2290 = vsel %vm2178, %v2254, 0.0
    %2291 = vadd.xlane.f32.xlu0 %v2290
    %v2292 = vpop.xlane.xlu0 %2291
    %v2293 = vsel %vm2178, %v2256, 0.0
    %2294 = vadd.xlane.f32.xlu0 %v2293
    %v2295 = vpop.xlane.xlu0 %2294
    %v2296 = vsel %vm2178, %v2258, 0.0
    %2297 = vadd.xlane.f32.xlu0 %v2296
    %v2298 = vpop.xlane.xlu0 %2297
    %v2299 = vsel %vm2178, %v2260, 0.0
    %2300 = vadd.xlane.f32.xlu0 %v2299
    %v2301 = vpop.xlane.xlu0 %2300
    %v2302 = vsel %vm2178, %v2262, 0.0
    %2303 = vadd.xlane.f32.xlu0 %v2302
    %v2304 = vpop.xlane.xlu0 %2303
    %v2305 = vsel %vm2178, %v2264, 0.0
    %2306 = vadd.xlane.f32.xlu0 %v2305
    %v2307 = vpop.xlane.xlu0 %2306
    %v2308 = vsel %vm2178, %v2266, 0.0
    %2309 = vadd.xlane.f32.xlu0 %v2308
    %v2310 = vpop.xlane.xlu0 %2309
    %v2311 = vsel %vm2178, %v2268, 0.0
    %2312 = vadd.xlane.f32.xlu0 %v2311
    %v2313 = vpop.xlane.xlu0 %2312
    %v2314 = vsel %vm2178, %v2270, 0.0
    %2315 = vadd.xlane.f32.xlu0 %v2314
    %v2316 = vpop.xlane.xlu0 %2315
    %v2317 = vsel %vm2178, %v2272, 0.0
    %2318 = vadd.xlane.f32.xlu0 %v2317
    %v2319 = vpop.xlane.xlu0 %2318
    %v2320 = vsel %vm2178, %v2274, 0.0
    %2321 = vadd.xlane.f32.xlu0 %v2320
    %v2322 = vpop.xlane.xlu0 %2321
    %v2323 = vrcp.pop %v2277
    %v2324 = vrcp.pop %v2280
    %v2325 = vrcp.pop %v2283
    %v2326 = vrcp.pop %v2286
    %v2327 = vrcp.pop %v2289
    %v2328 = vrcp.pop %v2292
    %v2329 = vrcp.pop %v2295
    %v2330 = vrcp.pop %v2298
    %v2331 = vrcp.pop %v2301
    %v2332 = vrcp.pop %v2304
    %v2333 = vrcp.pop %v2307
    %v2334 = vrcp.pop %v2310
    %v2335 = vrcp.pop %v2313
    %v2336 = vrcp.pop %v2316
    %v2337 = vrcp.pop %v2319
    %v2338 = vrcp.pop %v2322
    %v2339 = vmul.f32 %v2244, %v2323
    %v2340 = vmul.f32 %v2246, %v2324
    %v2341 = vmul.f32 %v2248, %v2325
    %v2342 = vmul.f32 %v2250, %v2326
    %v2343 = vmul.f32 %v2252, %v2327
    %v2344 = vmul.f32 %v2254, %v2328
    %v2345 = vmul.f32 %v2256, %v2329
    %v2346 = vmul.f32 %v2258, %v2330
    %v2347 = vmul.f32 %v2260, %v2331
    %v2348 = vmul.f32 %v2262, %v2332
    %v2349 = vmul.f32 %v2264, %v2333
    %v2350 = vmul.f32 %v2266, %v2334
    %v2351 = vmul.f32 %v2268, %v2335
    %v2352 = vmul.f32 %v2270, %v2336
    %v2353 = vmul.f32 %v2272, %v2337
    %v2354 = vmul.f32 %v2274, %v2338
    %v2356 = vsel %vm2178, %v2339, 0
    %2358 = vmatprep.subr.mxu0 0.0
    %2359 = vmatpush1.msra.mxu0 0.0
    %2360 = vmatprep.subr.mxu0 0.0
    %2361 = vmatpush1.msra.mxu0 0.0
    %2362 = vmatprep.subr.mxu0 0.0
    %2363 = vmatpush1.msra.mxu0 0.0
    %2364 = vmatprep.subr.mxu0 0.0
    %2365 = vmatpush1.msra.mxu0 0.0
    %2366 = vmatprep.subr.mxu0 0.0
    %2367 = vmatpush1.msra.mxu0 0.0
    %2368 = vmatprep.subr.mxu0 0.0
    %2369 = vmatpush1.msra.mxu0 0.0
    %2370 = vmatprep.subr.mxu0 0.0
    %2371 = vmatpush1.msra.mxu0 0.0
    %2372 = vmatprep.subr.mxu0 0.0
    %2373 = vmatpush1.msra.mxu0 0.0
    %2374 = vmatprep.subr.mxu0 0.0
    %2375 = vmatpush1.msra.mxu0 0.0
    %2376 = vmatprep.subr.mxu0 0.0
    %2377 = vmatpush1.msra.mxu0 0.0
    %2378 = vmatprep.subr.mxu0 0.0
    %2379 = vmatpush1.msra.mxu0 0.0
    %2380 = vmatprep.subr.mxu0 0.0
    %2381 = vmatpush1.msra.mxu0 0.0
    %2382 = vmatprep.subr.mxu0 0.0
    %2383 = vmatpush1.msra.mxu0 0.0
    %2384 = vmatprep.subr.mxu0 0.0
    %2385 = vmatpush1.msra.mxu0 0.0
    %2386 = vmatprep.subr.mxu0 0.0
    %2387 = vmatpush1.msra.mxu0 0.0
    %2388 = vmatprep.subr.mxu0 0.0
    %2389 = vmatpush1.msra.mxu0 %v894
    %2390 = vmatprep.subr.mxu0 0.0
    %2391 = vmatpush2.msra.mxu0 0.0
    %2392 = vmatprep.subr.mxu0 0.0
    %2393 = vmatpush2.msra.mxu0 0.0
    %2394 = vmatprep.subr.mxu0 0.0
    %2395 = vmatpush2.msra.mxu0 0.0
    %2396 = vmatprep.subr.mxu0 0.0
    %2397 = vmatpush2.msra.mxu0 0.0
    %2398 = vmatprep.subr.mxu0 0.0
    %2399 = vmatpush2.msra.mxu0 0.0
    %2400 = vmatprep.subr.mxu0 0.0
    %2401 = vmatpush2.msra.mxu0 0.0
    %2402 = vmatprep.subr.mxu0 0.0
    %2403 = vmatpush2.msra.mxu0 0.0
    %2404 = vmatprep.subr.mxu0 0.0
    %2405 = vmatpush2.msra.mxu0 0.0
    %2406 = vmatprep.subr.mxu0 0.0
    %2407 = vmatpush2.msra.mxu0 0.0
    %2408 = vmatprep.subr.mxu0 0.0
    %2409 = vmatpush2.msra.mxu0 0.0
    %2410 = vmatprep.subr.mxu0 0.0
    %2411 = vmatpush2.msra.mxu0 0.0
    %2412 = vmatprep.subr.mxu0 0.0
    %2413 = vmatpush2.msra.mxu0 0.0
    %2414 = vmatprep.subr.mxu0 0.0
    %2415 = vmatpush2.msra.mxu0 0.0
    %2416 = vmatprep.subr.mxu0 0.0
    %2417 = vmatpush2.msra.mxu0 0.0
    %2418 = vmatprep.subr.mxu0 0.0
    %2419 = vmatpush2.msra.mxu0 0.0
    %2420 = vmatprep.subr.mxu0 0.0
    %2421 = vmatpush2.msra.mxu0 0.0
    %2422 = vmatprep.mubr.f32.mxu0 0.0
    %2423 = vmatmul.mubr.f32.gmra.mxu0 %v2356
    %v2424 = vpop.f32.mrf.mxu0
    %v2425 = vadd.f32 0.0, %v2424
    %v2426 = vpop.f32.mrf.mxu0
    %2427 = vdwg.mxu0
    %v2429 = vsel %vm2178, %v2340, 0
    %2431 = vmatprep.subr.mxu0 0.0
    %2432 = vmatpush1.msra.mxu0 0.0
    %2433 = vmatprep.subr.mxu0 0.0
    %2434 = vmatpush1.msra.mxu0 0.0
    %2435 = vmatprep.subr.mxu0 0.0
    %2436 = vmatpush1.msra.mxu0 0.0
    %2437 = vmatprep.subr.mxu0 0.0
    %2438 = vmatpush1.msra.mxu0 0.0
    %2439 = vmatprep.subr.mxu0 0.0
    %2440 = vmatpush1.msra.mxu0 0.0
    %2441 = vmatprep.subr.mxu0 0.0
    %2442 = vmatpush1.msra.mxu0 0.0
    %2443 = vmatprep.subr.mxu0 0.0
    %2444 = vmatpush1.msra.mxu0 0.0
    %2445 = vmatprep.subr.mxu0 0.0
    %2446 = vmatpush1.msra.mxu0 0.0
    %2447 = vmatprep.subr.mxu0 0.0
    %2448 = vmatpush1.msra.mxu0 0.0
    %2449 = vmatprep.subr.mxu0 0.0
    %2450 = vmatpush1.msra.mxu0 0.0
    %2451 = vmatprep.subr.mxu0 0.0
    %2452 = vmatpush1.msra.mxu0 0.0
    %2453 = vmatprep.subr.mxu0 0.0
    %2454 = vmatpush1.msra.mxu0 0.0
    %2455 = vmatprep.subr.mxu0 0.0
    %2456 = vmatpush1.msra.mxu0 0.0
    %2457 = vmatprep.subr.mxu0 0.0
    %2458 = vmatpush1.msra.mxu0 0.0
    %2459 = vmatprep.subr.mxu0 0.0
    %2460 = vmatpush1.msra.mxu0 0.0
    %2461 = vmatprep.subr.mxu0 0.0
    %2462 = vmatpush1.msra.mxu0 %v899
    %2463 = vmatprep.subr.mxu0 0.0
    %2464 = vmatpush2.msra.mxu0 0.0
    %2465 = vmatprep.subr.mxu0 0.0
    %2466 = vmatpush2.msra.mxu0 0.0
    %2467 = vmatprep.subr.mxu0 0.0
    %2468 = vmatpush2.msra.mxu0 0.0
    %2469 = vmatprep.subr.mxu0 0.0
    %2470 = vmatpush2.msra.mxu0 0.0
    %2471 = vmatprep.subr.mxu0 0.0
    %2472 = vmatpush2.msra.mxu0 0.0
    %2473 = vmatprep.subr.mxu0 0.0
    %2474 = vmatpush2.msra.mxu0 0.0
    %2475 = vmatprep.subr.mxu0 0.0
    %2476 = vmatpush2.msra.mxu0 0.0
    %2477 = vmatprep.subr.mxu0 0.0
    %2478 = vmatpush2.msra.mxu0 0.0
    %2479 = vmatprep.subr.mxu0 0.0
    %2480 = vmatpush2.msra.mxu0 0.0
    %2481 = vmatprep.subr.mxu0 0.0
    %2482 = vmatpush2.msra.mxu0 0.0
    %2483 = vmatprep.subr.mxu0 0.0
    %2484 = vmatpush2.msra.mxu0 0.0
    %2485 = vmatprep.subr.mxu0 0.0
    %2486 = vmatpush2.msra.mxu0 0.0
    %2487 = vmatprep.subr.mxu0 0.0
    %2488 = vmatpush2.msra.mxu0 0.0
    %2489 = vmatprep.subr.mxu0 0.0
    %2490 = vmatpush2.msra.mxu0 0.0
    %2491 = vmatprep.subr.mxu0 0.0
    %2492 = vmatpush2.msra.mxu0 0.0
    %2493 = vmatprep.subr.mxu0 0.0
    %2494 = vmatpush2.msra.mxu0 0.0
    %2495 = vmatprep.mubr.f32.mxu0 0.0
    %2496 = vmatmul.mubr.f32.gmra.mxu0 %v2429
    %v2497 = vpop.f32.mrf.mxu0
    %v2498 = vadd.f32 0.0, %v2497
    %v2499 = vpop.f32.mrf.mxu0
    %2500 = vdwg.mxu0
    %v2502 = vsel %vm2178, %v2341, 0
    %2504 = vmatprep.subr.mxu0 0.0
    %2505 = vmatpush1.msra.mxu0 0.0
    %2506 = vmatprep.subr.mxu0 0.0
    %2507 = vmatpush1.msra.mxu0 0.0
    %2508 = vmatprep.subr.mxu0 0.0
    %2509 = vmatpush1.msra.mxu0 0.0
    %2510 = vmatprep.subr.mxu0 0.0
    %2511 = vmatpush1.msra.mxu0 0.0
    %2512 = vmatprep.subr.mxu0 0.0
    %2513 = vmatpush1.msra.mxu0 0.0
    %2514 = vmatprep.subr.mxu0 0.0
    %2515 = vmatpush1.msra.mxu0 0.0
    %2516 = vmatprep.subr.mxu0 0.0
    %2517 = vmatpush1.msra.mxu0 0.0
    %2518 = vmatprep.subr.mxu0 0.0
    %2519 = vmatpush1.msra.mxu0 0.0
    %2520 = vmatprep.subr.mxu0 0.0
    %2521 = vmatpush1.msra.mxu0 0.0
    %2522 = vmatprep.subr.mxu0 0.0
    %2523 = vmatpush1.msra.mxu0 0.0
    %2524 = vmatprep.subr.mxu0 0.0
    %2525 = vmatpush1.msra.mxu0 0.0
    %2526 = vmatprep.subr.mxu0 0.0
    %2527 = vmatpush1.msra.mxu0 0.0
    %2528 = vmatprep.subr.mxu0 0.0
    %2529 = vmatpush1.msra.mxu0 0.0
    %2530 = vmatprep.subr.mxu0 0.0
    %2531 = vmatpush1.msra.mxu0 0.0
    %2532 = vmatprep.subr.mxu0 0.0
    %2533 = vmatpush1.msra.mxu0 0.0
    %2534 = vmatprep.subr.mxu0 0.0
    %2535 = vmatpush1.msra.mxu0 %v894
    %2536 = vmatprep.subr.mxu0 0.0
    %2537 = vmatpush2.msra.mxu0 0.0
    %2538 = vmatprep.subr.mxu0 0.0
    %2539 = vmatpush2.msra.mxu0 0.0
    %2540 = vmatprep.subr.mxu0 0.0
    %2541 = vmatpush2.msra.mxu0 0.0
    %2542 = vmatprep.subr.mxu0 0.0
    %2543 = vmatpush2.msra.mxu0 0.0
    %2544 = vmatprep.subr.mxu0 0.0
    %2545 = vmatpush2.msra.mxu0 0.0
    %2546 = vmatprep.subr.mxu0 0.0
    %2547 = vmatpush2.msra.mxu0 0.0
    %2548 = vmatprep.subr.mxu0 0.0
    %2549 = vmatpush2.msra.mxu0 0.0
    %2550 = vmatprep.subr.mxu0 0.0
    %2551 = vmatpush2.msra.mxu0 0.0
    %2552 = vmatprep.subr.mxu0 0.0
    %2553 = vmatpush2.msra.mxu0 0.0
    %2554 = vmatprep.subr.mxu0 0.0
    %2555 = vmatpush2.msra.mxu0 0.0
    %2556 = vmatprep.subr.mxu0 0.0
    %2557 = vmatpush2.msra.mxu0 0.0
    %2558 = vmatprep.subr.mxu0 0.0
    %2559 = vmatpush2.msra.mxu0 0.0
    %2560 = vmatprep.subr.mxu0 0.0
    %2561 = vmatpush2.msra.mxu0 0.0
    %2562 = vmatprep.subr.mxu0 0.0
    %2563 = vmatpush2.msra.mxu0 0.0
    %2564 = vmatprep.subr.mxu0 0.0
    %2565 = vmatpush2.msra.mxu0 0.0
    %2566 = vmatprep.subr.mxu0 0.0
    %2567 = vmatpush2.msra.mxu0 0.0
    %2568 = vmatprep.mubr.f32.mxu0 0.0
    %2569 = vmatmul.mubr.f32.gmra.mxu0 %v2502
    %v2570 = vpop.f32.mrf.mxu0
    %v2571 = vadd.f32 0.0, %v2570
    %v2572 = vpop.f32.mrf.mxu0
    %2573 = vdwg.mxu0
    %v2575 = vsel %vm2178, %v2342, 0
    %2577 = vmatprep.subr.mxu0 0.0
    %2578 = vmatpush1.msra.mxu0 0.0
    %2579 = vmatprep.subr.mxu0 0.0
    %2580 = vmatpush1.msra.mxu0 0.0
    %2581 = vmatprep.subr.mxu0 0.0
    %2582 = vmatpush1.msra.mxu0 0.0
    %2583 = vmatprep.subr.mxu0 0.0
    %2584 = vmatpush1.msra.mxu0 0.0
    %2585 = vmatprep.subr.mxu0 0.0
    %2586 = vmatpush1.msra.mxu0 0.0
    %2587 = vmatprep.subr.mxu0 0.0
    %2588 = vmatpush1.msra.mxu0 0.0
    %2589 = vmatprep.subr.mxu0 0.0
    %2590 = vmatpush1.msra.mxu0 0.0
    %2591 = vmatprep.subr.mxu0 0.0
    %2592 = vmatpush1.msra.mxu0 0.0
    %2593 = vmatprep.subr.mxu0 0.0
    %2594 = vmatpush1.msra.mxu0 0.0
    %2595 = vmatprep.subr.mxu0 0.0
    %2596 = vmatpush1.msra.mxu0 0.0
    %2597 = vmatprep.subr.mxu0 0.0
    %2598 = vmatpush1.msra.mxu0 0.0
    %2599 = vmatprep.subr.mxu0 0.0
    %2600 = vmatpush1.msra.mxu0 0.0
    %2601 = vmatprep.subr.mxu0 0.0
    %2602 = vmatpush1.msra.mxu0 0.0
    %2603 = vmatprep.subr.mxu0 0.0
    %2604 = vmatpush1.msra.mxu0 0.0
    %2605 = vmatprep.subr.mxu0 0.0
    %2606 = vmatpush1.msra.mxu0 0.0
    %2607 = vmatprep.subr.mxu0 0.0
    %2608 = vmatpush1.msra.mxu0 %v899
    %2609 = vmatprep.subr.mxu0 0.0
    %2610 = vmatpush2.msra.mxu0 0.0
    %2611 = vmatprep.subr.mxu0 0.0
    %2612 = vmatpush2.msra.mxu0 0.0
    %2613 = vmatprep.subr.mxu0 0.0
    %2614 = vmatpush2.msra.mxu0 0.0
    %2615 = vmatprep.subr.mxu0 0.0
    %2616 = vmatpush2.msra.mxu0 0.0
    %2617 = vmatprep.subr.mxu0 0.0
    %2618 = vmatpush2.msra.mxu0 0.0
    %2619 = vmatprep.subr.mxu0 0.0
    %2620 = vmatpush2.msra.mxu0 0.0
    %2621 = vmatprep.subr.mxu0 0.0
    %2622 = vmatpush2.msra.mxu0 0.0
    %2623 = vmatprep.subr.mxu0 0.0
    %2624 = vmatpush2.msra.mxu0 0.0
    %2625 = vmatprep.subr.mxu0 0.0
    %2626 = vmatpush2.msra.mxu0 0.0
    %2627 = vmatprep.subr.mxu0 0.0
    %2628 = vmatpush2.msra.mxu0 0.0
    %2629 = vmatprep.subr.mxu0 0.0
    %2630 = vmatpush2.msra.mxu0 0.0
    %2631 = vmatprep.subr.mxu0 0.0
    %2632 = vmatpush2.msra.mxu0 0.0
    %2633 = vmatprep.subr.mxu0 0.0
    %2634 = vmatpush2.msra.mxu0 0.0
    %2635 = vmatprep.subr.mxu0 0.0
    %2636 = vmatpush2.msra.mxu0 0.0
    %2637 = vmatprep.subr.mxu0 0.0
    %2638 = vmatpush2.msra.mxu0 0.0
    %2639 = vmatprep.subr.mxu0 0.0
    %2640 = vmatpush2.msra.mxu0 0.0
    %2641 = vmatprep.mubr.f32.mxu0 0.0
    %2642 = vmatmul.mubr.f32.gmra.mxu0 %v2575
    %v2643 = vpop.f32.mrf.mxu0
    %v2644 = vadd.f32 0.0, %v2643
    %v2645 = vpop.f32.mrf.mxu0
    %2646 = vdwg.mxu0
    %v2648 = vsel %vm2178, %v2343, 0
    %2650 = vmatprep.subr.mxu0 0.0
    %2651 = vmatpush1.msra.mxu0 0.0
    %2652 = vmatprep.subr.mxu0 0.0
    %2653 = vmatpush1.msra.mxu0 0.0
    %2654 = vmatprep.subr.mxu0 0.0
    %2655 = vmatpush1.msra.mxu0 0.0
    %2656 = vmatprep.subr.mxu0 0.0
    %2657 = vmatpush1.msra.mxu0 0.0
    %2658 = vmatprep.subr.mxu0 0.0
    %2659 = vmatpush1.msra.mxu0 0.0
    %2660 = vmatprep.subr.mxu0 0.0
    %2661 = vmatpush1.msra.mxu0 0.0
    %2662 = vmatprep.subr.mxu0 0.0
    %2663 = vmatpush1.msra.mxu0 0.0
    %2664 = vmatprep.subr.mxu0 0.0
    %2665 = vmatpush1.msra.mxu0 0.0
    %2666 = vmatprep.subr.mxu0 0.0
    %2667 = vmatpush1.msra.mxu0 0.0
    %2668 = vmatprep.subr.mxu0 0.0
    %2669 = vmatpush1.msra.mxu0 0.0
    %2670 = vmatprep.subr.mxu0 0.0
    %2671 = vmatpush1.msra.mxu0 0.0
    %2672 = vmatprep.subr.mxu0 0.0
    %2673 = vmatpush1.msra.mxu0 0.0
    %2674 = vmatprep.subr.mxu0 0.0
    %2675 = vmatpush1.msra.mxu0 0.0
    %2676 = vmatprep.subr.mxu0 0.0
    %2677 = vmatpush1.msra.mxu0 0.0
    %2678 = vmatprep.subr.mxu0 0.0
    %2679 = vmatpush1.msra.mxu0 0.0
    %2680 = vmatprep.subr.mxu0 0.0
    %2681 = vmatpush1.msra.mxu0 %v894
    %2682 = vmatprep.subr.mxu0 0.0
    %2683 = vmatpush2.msra.mxu0 0.0
    %2684 = vmatprep.subr.mxu0 0.0
    %2685 = vmatpush2.msra.mxu0 0.0
    %2686 = vmatprep.subr.mxu0 0.0
    %2687 = vmatpush2.msra.mxu0 0.0
    %2688 = vmatprep.subr.mxu0 0.0
    %2689 = vmatpush2.msra.mxu0 0.0
    %2690 = vmatprep.subr.mxu0 0.0
    %2691 = vmatpush2.msra.mxu0 0.0
    %2692 = vmatprep.subr.mxu0 0.0
    %2693 = vmatpush2.msra.mxu0 0.0
    %2694 = vmatprep.subr.mxu0 0.0
    %2695 = vmatpush2.msra.mxu0 0.0
    %2696 = vmatprep.subr.mxu0 0.0
    %2697 = vmatpush2.msra.mxu0 0.0
    %2698 = vmatprep.subr.mxu0 0.0
    %2699 = vmatpush2.msra.mxu0 0.0
    %2700 = vmatprep.subr.mxu0 0.0
    %2701 = vmatpush2.msra.mxu0 0.0
    %2702 = vmatprep.subr.mxu0 0.0
    %2703 = vmatpush2.msra.mxu0 0.0
    %2704 = vmatprep.subr.mxu0 0.0
    %2705 = vmatpush2.msra.mxu0 0.0
    %2706 = vmatprep.subr.mxu0 0.0
    %2707 = vmatpush2.msra.mxu0 0.0
    %2708 = vmatprep.subr.mxu0 0.0
    %2709 = vmatpush2.msra.mxu0 0.0
    %2710 = vmatprep.subr.mxu0 0.0
    %2711 = vmatpush2.msra.mxu0 0.0
    %2712 = vmatprep.subr.mxu0 0.0
    %2713 = vmatpush2.msra.mxu0 0.0
    %2714 = vmatprep.mubr.f32.mxu0 0.0
    %2715 = vmatmul.mubr.f32.gmra.mxu0 %v2648
    %v2716 = vpop.f32.mrf.mxu0
    %v2717 = vadd.f32 0.0, %v2716
    %v2718 = vpop.f32.mrf.mxu0
    %2719 = vdwg.mxu0
    %v2721 = vsel %vm2178, %v2344, 0
    %2723 = vmatprep.subr.mxu0 0.0
    %2724 = vmatpush1.msra.mxu0 0.0
    %2725 = vmatprep.subr.mxu0 0.0
    %2726 = vmatpush1.msra.mxu0 0.0
    %2727 = vmatprep.subr.mxu0 0.0
    %2728 = vmatpush1.msra.mxu0 0.0
    %2729 = vmatprep.subr.mxu0 0.0
    %2730 = vmatpush1.msra.mxu0 0.0
    %2731 = vmatprep.subr.mxu0 0.0
    %2732 = vmatpush1.msra.mxu0 0.0
    %2733 = vmatprep.subr.mxu0 0.0
    %2734 = vmatpush1.msra.mxu0 0.0
    %2735 = vmatprep.subr.mxu0 0.0
    %2736 = vmatpush1.msra.mxu0 0.0
    %2737 = vmatprep.subr.mxu0 0.0
    %2738 = vmatpush1.msra.mxu0 0.0
    %2739 = vmatprep.subr.mxu0 0.0
    %2740 = vmatpush1.msra.mxu0 0.0
    %2741 = vmatprep.subr.mxu0 0.0
    %2742 = vmatpush1.msra.mxu0 0.0
    %2743 = vmatprep.subr.mxu0 0.0
    %2744 = vmatpush1.msra.mxu0 0.0
    %2745 = vmatprep.subr.mxu0 0.0
    %2746 = vmatpush1.msra.mxu0 0.0
    %2747 = vmatprep.subr.mxu0 0.0
    %2748 = vmatpush1.msra.mxu0 0.0
    %2749 = vmatprep.subr.mxu0 0.0
    %2750 = vmatpush1.msra.mxu0 0.0
    %2751 = vmatprep.subr.mxu0 0.0
    %2752 = vmatpush1.msra.mxu0 0.0
    %2753 = vmatprep.subr.mxu0 0.0
    %2754 = vmatpush1.msra.mxu0 %v899
    %2755 = vmatprep.subr.mxu0 0.0
    %2756 = vmatpush2.msra.mxu0 0.0
    %2757 = vmatprep.subr.mxu0 0.0
    %2758 = vmatpush2.msra.mxu0 0.0
    %2759 = vmatprep.subr.mxu0 0.0
    %2760 = vmatpush2.msra.mxu0 0.0
    %2761 = vmatprep.subr.mxu0 0.0
    %2762 = vmatpush2.msra.mxu0 0.0
    %2763 = vmatprep.subr.mxu0 0.0
    %2764 = vmatpush2.msra.mxu0 0.0
    %2765 = vmatprep.subr.mxu0 0.0
    %2766 = vmatpush2.msra.mxu0 0.0
    %2767 = vmatprep.subr.mxu0 0.0
    %2768 = vmatpush2.msra.mxu0 0.0
    %2769 = vmatprep.subr.mxu0 0.0
    %2770 = vmatpush2.msra.mxu0 0.0
    %2771 = vmatprep.subr.mxu0 0.0
    %2772 = vmatpush2.msra.mxu0 0.0
    %2773 = vmatprep.subr.mxu0 0.0
    %2774 = vmatpush2.msra.mxu0 0.0
    %2775 = vmatprep.subr.mxu0 0.0
    %2776 = vmatpush2.msra.mxu0 0.0
    %2777 = vmatprep.subr.mxu0 0.0
    %2778 = vmatpush2.msra.mxu0 0.0
    %2779 = vmatprep.subr.mxu0 0.0
    %2780 = vmatpush2.msra.mxu0 0.0
    %2781 = vmatprep.subr.mxu0 0.0
    %2782 = vmatpush2.msra.mxu0 0.0
    %2783 = vmatprep.subr.mxu0 0.0
    %2784 = vmatpush2.msra.mxu0 0.0
    %2785 = vmatprep.subr.mxu0 0.0
    %2786 = vmatpush2.msra.mxu0 0.0
    %2787 = vmatprep.mubr.f32.mxu0 0.0
    %2788 = vmatmul.mubr.f32.gmra.mxu0 %v2721
    %v2789 = vpop.f32.mrf.mxu0
    %v2790 = vadd.f32 0.0, %v2789
    %v2791 = vpop.f32.mrf.mxu0
    %2792 = vdwg.mxu0
    %v2794 = vsel %vm2178, %v2345, 0
    %2796 = vmatprep.subr.mxu0 0.0
    %2797 = vmatpush1.msra.mxu0 0.0
    %2798 = vmatprep.subr.mxu0 0.0
    %2799 = vmatpush1.msra.mxu0 0.0
    %2800 = vmatprep.subr.mxu0 0.0
    %2801 = vmatpush1.msra.mxu0 0.0
    %2802 = vmatprep.subr.mxu0 0.0
    %2803 = vmatpush1.msra.mxu0 0.0
    %2804 = vmatprep.subr.mxu0 0.0
    %2805 = vmatpush1.msra.mxu0 0.0
    %2806 = vmatprep.subr.mxu0 0.0
    %2807 = vmatpush1.msra.mxu0 0.0
    %2808 = vmatprep.subr.mxu0 0.0
    %2809 = vmatpush1.msra.mxu0 0.0
    %2810 = vmatprep.subr.mxu0 0.0
    %2811 = vmatpush1.msra.mxu0 0.0
    %2812 = vmatprep.subr.mxu0 0.0
    %2813 = vmatpush1.msra.mxu0 0.0
    %2814 = vmatprep.subr.mxu0 0.0
    %2815 = vmatpush1.msra.mxu0 0.0
    %2816 = vmatprep.subr.mxu0 0.0
    %2817 = vmatpush1.msra.mxu0 0.0
    %2818 = vmatprep.subr.mxu0 0.0
    %2819 = vmatpush1.msra.mxu0 0.0
    %2820 = vmatprep.subr.mxu0 0.0
    %2821 = vmatpush1.msra.mxu0 0.0
    %2822 = vmatprep.subr.mxu0 0.0
    %2823 = vmatpush1.msra.mxu0 0.0
    %2824 = vmatprep.subr.mxu0 0.0
    %2825 = vmatpush1.msra.mxu0 0.0
    %2826 = vmatprep.subr.mxu0 0.0
    %2827 = vmatpush1.msra.mxu0 %v894
    %2828 = vmatprep.subr.mxu0 0.0
    %2829 = vmatpush2.msra.mxu0 0.0
    %2830 = vmatprep.subr.mxu0 0.0
    %2831 = vmatpush2.msra.mxu0 0.0
    %2832 = vmatprep.subr.mxu0 0.0
    %2833 = vmatpush2.msra.mxu0 0.0
    %2834 = vmatprep.subr.mxu0 0.0
    %2835 = vmatpush2.msra.mxu0 0.0
    %2836 = vmatprep.subr.mxu0 0.0
    %2837 = vmatpush2.msra.mxu0 0.0
    %2838 = vmatprep.subr.mxu0 0.0
    %2839 = vmatpush2.msra.mxu0 0.0
    %2840 = vmatprep.subr.mxu0 0.0
    %2841 = vmatpush2.msra.mxu0 0.0
    %2842 = vmatprep.subr.mxu0 0.0
    %2843 = vmatpush2.msra.mxu0 0.0
    %2844 = vmatprep.subr.mxu0 0.0
    %2845 = vmatpush2.msra.mxu0 0.0
    %2846 = vmatprep.subr.mxu0 0.0
    %2847 = vmatpush2.msra.mxu0 0.0
    %2848 = vmatprep.subr.mxu0 0.0
    %2849 = vmatpush2.msra.mxu0 0.0
    %2850 = vmatprep.subr.mxu0 0.0
    %2851 = vmatpush2.msra.mxu0 0.0
    %2852 = vmatprep.subr.mxu0 0.0
    %2853 = vmatpush2.msra.mxu0 0.0
    %2854 = vmatprep.subr.mxu0 0.0
    %2855 = vmatpush2.msra.mxu0 0.0
    %2856 = vmatprep.subr.mxu0 0.0
    %2857 = vmatpush2.msra.mxu0 0.0
    %2858 = vmatprep.subr.mxu0 0.0
    %2859 = vmatpush2.msra.mxu0 0.0
    %2860 = vmatprep.mubr.f32.mxu0 0.0
    %2861 = vmatmul.mubr.f32.gmra.mxu0 %v2794
    %v2862 = vpop.f32.mrf.mxu0
    %v2863 = vadd.f32 0.0, %v2862
    %v2864 = vpop.f32.mrf.mxu0
    %2865 = vdwg.mxu0
    %v2867 = vsel %vm2178, %v2346, 0
    %2869 = vmatprep.subr.mxu0 0.0
    %2870 = vmatpush1.msra.mxu0 0.0
    %2871 = vmatprep.subr.mxu0 0.0
    %2872 = vmatpush1.msra.mxu0 0.0
    %2873 = vmatprep.subr.mxu0 0.0
    %2874 = vmatpush1.msra.mxu0 0.0
    %2875 = vmatprep.subr.mxu0 0.0
    %2876 = vmatpush1.msra.mxu0 0.0
    %2877 = vmatprep.subr.mxu0 0.0
    %2878 = vmatpush1.msra.mxu0 0.0
    %2879 = vmatprep.subr.mxu0 0.0
    %2880 = vmatpush1.msra.mxu0 0.0
    %2881 = vmatprep.subr.mxu0 0.0
    %2882 = vmatpush1.msra.mxu0 0.0
    %2883 = vmatprep.subr.mxu0 0.0
    %2884 = vmatpush1.msra.mxu0 0.0
    %2885 = vmatprep.subr.mxu0 0.0
    %2886 = vmatpush1.msra.mxu0 0.0
    %2887 = vmatprep.subr.mxu0 0.0
    %2888 = vmatpush1.msra.mxu0 0.0
    %2889 = vmatprep.subr.mxu0 0.0
    %2890 = vmatpush1.msra.mxu0 0.0
    %2891 = vmatprep.subr.mxu0 0.0
    %2892 = vmatpush1.msra.mxu0 0.0
    %2893 = vmatprep.subr.mxu0 0.0
    %2894 = vmatpush1.msra.mxu0 0.0
    %2895 = vmatprep.subr.mxu0 0.0
    %2896 = vmatpush1.msra.mxu0 0.0
    %2897 = vmatprep.subr.mxu0 0.0
    %2898 = vmatpush1.msra.mxu0 0.0
    %2899 = vmatprep.subr.mxu0 0.0
    %2900 = vmatpush1.msra.mxu0 %v899
    %2901 = vmatprep.subr.mxu0 0.0
    %2902 = vmatpush2.msra.mxu0 0.0
    %2903 = vmatprep.subr.mxu0 0.0
    %2904 = vmatpush2.msra.mxu0 0.0
    %2905 = vmatprep.subr.mxu0 0.0
    %2906 = vmatpush2.msra.mxu0 0.0
    %2907 = vmatprep.subr.mxu0 0.0
    %2908 = vmatpush2.msra.mxu0 0.0
    %2909 = vmatprep.subr.mxu0 0.0
    %2910 = vmatpush2.msra.mxu0 0.0
    %2911 = vmatprep.subr.mxu0 0.0
    %2912 = vmatpush2.msra.mxu0 0.0
    %2913 = vmatprep.subr.mxu0 0.0
    %2914 = vmatpush2.msra.mxu0 0.0
    %2915 = vmatprep.subr.mxu0 0.0
    %2916 = vmatpush2.msra.mxu0 0.0
    %2917 = vmatprep.subr.mxu0 0.0
    %2918 = vmatpush2.msra.mxu0 0.0
    %2919 = vmatprep.subr.mxu0 0.0
    %2920 = vmatpush2.msra.mxu0 0.0
    %2921 = vmatprep.subr.mxu0 0.0
    %2922 = vmatpush2.msra.mxu0 0.0
    %2923 = vmatprep.subr.mxu0 0.0
    %2924 = vmatpush2.msra.mxu0 0.0
    %2925 = vmatprep.subr.mxu0 0.0
    %2926 = vmatpush2.msra.mxu0 0.0
    %2927 = vmatprep.subr.mxu0 0.0
    %2928 = vmatpush2.msra.mxu0 0.0
    %2929 = vmatprep.subr.mxu0 0.0
    %2930 = vmatpush2.msra.mxu0 0.0
    %2931 = vmatprep.subr.mxu0 0.0
    %2932 = vmatpush2.msra.mxu0 0.0
    %2933 = vmatprep.mubr.f32.mxu0 0.0
    %2934 = vmatmul.mubr.f32.gmra.mxu0 %v2867
    %v2935 = vpop.f32.mrf.mxu0
    %v2936 = vadd.f32 0.0, %v2935
    %v2937 = vpop.f32.mrf.mxu0
    %2938 = vdwg.mxu0
    %v2940 = vsel %vm2178, %v2347, 0
    %2942 = vmatprep.subr.mxu0 0.0
    %2943 = vmatpush1.msra.mxu0 0.0
    %2944 = vmatprep.subr.mxu0 0.0
    %2945 = vmatpush1.msra.mxu0 0.0
    %2946 = vmatprep.subr.mxu0 0.0
    %2947 = vmatpush1.msra.mxu0 0.0
    %2948 = vmatprep.subr.mxu0 0.0
    %2949 = vmatpush1.msra.mxu0 0.0
    %2950 = vmatprep.subr.mxu0 0.0
    %2951 = vmatpush1.msra.mxu0 0.0
    %2952 = vmatprep.subr.mxu0 0.0
    %2953 = vmatpush1.msra.mxu0 0.0
    %2954 = vmatprep.subr.mxu0 0.0
    %2955 = vmatpush1.msra.mxu0 0.0
    %2956 = vmatprep.subr.mxu0 0.0
    %2957 = vmatpush1.msra.mxu0 0.0
    %2958 = vmatprep.subr.mxu0 0.0
    %2959 = vmatpush1.msra.mxu0 0.0
    %2960 = vmatprep.subr.mxu0 0.0
    %2961 = vmatpush1.msra.mxu0 0.0
    %2962 = vmatprep.subr.mxu0 0.0
    %2963 = vmatpush1.msra.mxu0 0.0
    %2964 = vmatprep.subr.mxu0 0.0
    %2965 = vmatpush1.msra.mxu0 0.0
    %2966 = vmatprep.subr.mxu0 0.0
    %2967 = vmatpush1.msra.mxu0 0.0
    %2968 = vmatprep.subr.mxu0 0.0
    %2969 = vmatpush1.msra.mxu0 0.0
    %2970 = vmatprep.subr.mxu0 0.0
    %2971 = vmatpush1.msra.mxu0 0.0
    %2972 = vmatprep.subr.mxu0 0.0
    %2973 = vmatpush1.msra.mxu0 %v969
    %2974 = vmatprep.subr.mxu0 0.0
    %2975 = vmatpush2.msra.mxu0 0.0
    %2976 = vmatprep.subr.mxu0 0.0
    %2977 = vmatpush2.msra.mxu0 0.0
    %2978 = vmatprep.subr.mxu0 0.0
    %2979 = vmatpush2.msra.mxu0 0.0
    %2980 = vmatprep.subr.mxu0 0.0
    %2981 = vmatpush2.msra.mxu0 0.0
    %2982 = vmatprep.subr.mxu0 0.0
    %2983 = vmatpush2.msra.mxu0 0.0
    %2984 = vmatprep.subr.mxu0 0.0
    %2985 = vmatpush2.msra.mxu0 0.0
    %2986 = vmatprep.subr.mxu0 0.0
    %2987 = vmatpush2.msra.mxu0 0.0
    %2988 = vmatprep.subr.mxu0 0.0
    %2989 = vmatpush2.msra.mxu0 0.0
    %2990 = vmatprep.subr.mxu0 0.0
    %2991 = vmatpush2.msra.mxu0 0.0
    %2992 = vmatprep.subr.mxu0 0.0
    %2993 = vmatpush2.msra.mxu0 0.0
    %2994 = vmatprep.subr.mxu0 0.0
    %2995 = vmatpush2.msra.mxu0 0.0
    %2996 = vmatprep.subr.mxu0 0.0
    %2997 = vmatpush2.msra.mxu0 0.0
    %2998 = vmatprep.subr.mxu0 0.0
    %2999 = vmatpush2.msra.mxu0 0.0
    %3000 = vmatprep.subr.mxu0 0.0
    %3001 = vmatpush2.msra.mxu0 0.0
    %3002 = vmatprep.subr.mxu0 0.0
    %3003 = vmatpush2.msra.mxu0 0.0
    %3004 = vmatprep.subr.mxu0 0.0
    %3005 = vmatpush2.msra.mxu0 0.0
    %3006 = vmatprep.mubr.f32.mxu0 0.0
    %3007 = vmatmul.mubr.f32.gmra.mxu0 %v2940
    %v3008 = vpop.f32.mrf.mxu0
    %v3009 = vadd.f32 0.0, %v3008
    %v3010 = vpop.f32.mrf.mxu0
    %3011 = vdwg.mxu0
    %v3013 = vsel %vm2178, %v2348, 0
    %3015 = vmatprep.subr.mxu0 0.0
    %3016 = vmatpush1.msra.mxu0 0.0
    %3017 = vmatprep.subr.mxu0 0.0
    %3018 = vmatpush1.msra.mxu0 0.0
    %3019 = vmatprep.subr.mxu0 0.0
    %3020 = vmatpush1.msra.mxu0 0.0
    %3021 = vmatprep.subr.mxu0 0.0
    %3022 = vmatpush1.msra.mxu0 0.0
    %3023 = vmatprep.subr.mxu0 0.0
    %3024 = vmatpush1.msra.mxu0 0.0
    %3025 = vmatprep.subr.mxu0 0.0
    %3026 = vmatpush1.msra.mxu0 0.0
    %3027 = vmatprep.subr.mxu0 0.0
    %3028 = vmatpush1.msra.mxu0 0.0
    %3029 = vmatprep.subr.mxu0 0.0
    %3030 = vmatpush1.msra.mxu0 0.0
    %3031 = vmatprep.subr.mxu0 0.0
    %3032 = vmatpush1.msra.mxu0 0.0
    %3033 = vmatprep.subr.mxu0 0.0
    %3034 = vmatpush1.msra.mxu0 0.0
    %3035 = vmatprep.subr.mxu0 0.0
    %3036 = vmatpush1.msra.mxu0 0.0
    %3037 = vmatprep.subr.mxu0 0.0
    %3038 = vmatpush1.msra.mxu0 0.0
    %3039 = vmatprep.subr.mxu0 0.0
    %3040 = vmatpush1.msra.mxu0 0.0
    %3041 = vmatprep.subr.mxu0 0.0
    %3042 = vmatpush1.msra.mxu0 0.0
    %3043 = vmatprep.subr.mxu0 0.0
    %3044 = vmatpush1.msra.mxu0 0.0
    %3045 = vmatprep.subr.mxu0 0.0
    %3046 = vmatpush1.msra.mxu0 %v974
    %3047 = vmatprep.subr.mxu0 0.0
    %3048 = vmatpush2.msra.mxu0 0.0
    %3049 = vmatprep.subr.mxu0 0.0
    %3050 = vmatpush2.msra.mxu0 0.0
    %3051 = vmatprep.subr.mxu0 0.0
    %3052 = vmatpush2.msra.mxu0 0.0
    %3053 = vmatprep.subr.mxu0 0.0
    %3054 = vmatpush2.msra.mxu0 0.0
    %3055 = vmatprep.subr.mxu0 0.0
    %3056 = vmatpush2.msra.mxu0 0.0
    %3057 = vmatprep.subr.mxu0 0.0
    %3058 = vmatpush2.msra.mxu0 0.0
    %3059 = vmatprep.subr.mxu0 0.0
    %3060 = vmatpush2.msra.mxu0 0.0
    %3061 = vmatprep.subr.mxu0 0.0
    %3062 = vmatpush2.msra.mxu0 0.0
    %3063 = vmatprep.subr.mxu0 0.0
    %3064 = vmatpush2.msra.mxu0 0.0
    %3065 = vmatprep.subr.mxu0 0.0
    %3066 = vmatpush2.msra.mxu0 0.0
    %3067 = vmatprep.subr.mxu0 0.0
    %3068 = vmatpush2.msra.mxu0 0.0
    %3069 = vmatprep.subr.mxu0 0.0
    %3070 = vmatpush2.msra.mxu0 0.0
    %3071 = vmatprep.subr.mxu0 0.0
    %3072 = vmatpush2.msra.mxu0 0.0
    %3073 = vmatprep.subr.mxu0 0.0
    %3074 = vmatpush2.msra.mxu0 0.0
    %3075 = vmatprep.subr.mxu0 0.0
    %3076 = vmatpush2.msra.mxu0 0.0
    %3077 = vmatprep.subr.mxu0 0.0
    %3078 = vmatpush2.msra.mxu0 0.0
    %3079 = vmatprep.mubr.f32.mxu0 0.0
    %3080 = vmatmul.mubr.f32.gmra.mxu0 %v3013
    %v3081 = vpop.f32.mrf.mxu0
    %v3082 = vadd.f32 0.0, %v3081
    %v3083 = vpop.f32.mrf.mxu0
    %3084 = vdwg.mxu0
    %v3086 = vsel %vm2178, %v2349, 0
    %3088 = vmatprep.subr.mxu0 0.0
    %3089 = vmatpush1.msra.mxu0 0.0
    %3090 = vmatprep.subr.mxu0 0.0
    %3091 = vmatpush1.msra.mxu0 0.0
    %3092 = vmatprep.subr.mxu0 0.0
    %3093 = vmatpush1.msra.mxu0 0.0
    %3094 = vmatprep.subr.mxu0 0.0
    %3095 = vmatpush1.msra.mxu0 0.0
    %3096 = vmatprep.subr.mxu0 0.0
    %3097 = vmatpush1.msra.mxu0 0.0
    %3098 = vmatprep.subr.mxu0 0.0
    %3099 = vmatpush1.msra.mxu0 0.0
    %3100 = vmatprep.subr.mxu0 0.0
    %3101 = vmatpush1.msra.mxu0 0.0
    %3102 = vmatprep.subr.mxu0 0.0
    %3103 = vmatpush1.msra.mxu0 0.0
    %3104 = vmatprep.subr.mxu0 0.0
    %3105 = vmatpush1.msra.mxu0 0.0
    %3106 = vmatprep.subr.mxu0 0.0
    %3107 = vmatpush1.msra.mxu0 0.0
    %3108 = vmatprep.subr.mxu0 0.0
    %3109 = vmatpush1.msra.mxu0 0.0
    %3110 = vmatprep.subr.mxu0 0.0
    %3111 = vmatpush1.msra.mxu0 0.0
    %3112 = vmatprep.subr.mxu0 0.0
    %3113 = vmatpush1.msra.mxu0 0.0
    %3114 = vmatprep.subr.mxu0 0.0
    %3115 = vmatpush1.msra.mxu0 0.0
    %3116 = vmatprep.subr.mxu0 0.0
    %3117 = vmatpush1.msra.mxu0 0.0
    %3118 = vmatprep.subr.mxu0 0.0
    %3119 = vmatpush1.msra.mxu0 %v969
    %3120 = vmatprep.subr.mxu0 0.0
    %3121 = vmatpush2.msra.mxu0 0.0
    %3122 = vmatprep.subr.mxu0 0.0
    %3123 = vmatpush2.msra.mxu0 0.0
    %3124 = vmatprep.subr.mxu0 0.0
    %3125 = vmatpush2.msra.mxu0 0.0
    %3126 = vmatprep.subr.mxu0 0.0
    %3127 = vmatpush2.msra.mxu0 0.0
    %3128 = vmatprep.subr.mxu0 0.0
    %3129 = vmatpush2.msra.mxu0 0.0
    %3130 = vmatprep.subr.mxu0 0.0
    %3131 = vmatpush2.msra.mxu0 0.0
    %3132 = vmatprep.subr.mxu0 0.0
    %3133 = vmatpush2.msra.mxu0 0.0
    %3134 = vmatprep.subr.mxu0 0.0
    %3135 = vmatpush2.msra.mxu0 0.0
    %3136 = vmatprep.subr.mxu0 0.0
    %3137 = vmatpush2.msra.mxu0 0.0
    %3138 = vmatprep.subr.mxu0 0.0
    %3139 = vmatpush2.msra.mxu0 0.0
    %3140 = vmatprep.subr.mxu0 0.0
    %3141 = vmatpush2.msra.mxu0 0.0
    %3142 = vmatprep.subr.mxu0 0.0
    %3143 = vmatpush2.msra.mxu0 0.0
    %3144 = vmatprep.subr.mxu0 0.0
    %3145 = vmatpush2.msra.mxu0 0.0
    %3146 = vmatprep.subr.mxu0 0.0
    %3147 = vmatpush2.msra.mxu0 0.0
    %3148 = vmatprep.subr.mxu0 0.0
    %3149 = vmatpush2.msra.mxu0 0.0
    %3150 = vmatprep.subr.mxu0 0.0
    %3151 = vmatpush2.msra.mxu0 0.0
    %3152 = vmatprep.mubr.f32.mxu0 0.0
    %3153 = vmatmul.mubr.f32.gmra.mxu0 %v3086
    %v3154 = vpop.f32.mrf.mxu0
    %v3155 = vadd.f32 0.0, %v3154
    %v3156 = vpop.f32.mrf.mxu0
    %3157 = vdwg.mxu0
    %v3159 = vsel %vm2178, %v2350, 0
    %3161 = vmatprep.subr.mxu0 0.0
    %3162 = vmatpush1.msra.mxu0 0.0
    %3163 = vmatprep.subr.mxu0 0.0
    %3164 = vmatpush1.msra.mxu0 0.0
    %3165 = vmatprep.subr.mxu0 0.0
    %3166 = vmatpush1.msra.mxu0 0.0
    %3167 = vmatprep.subr.mxu0 0.0
    %3168 = vmatpush1.msra.mxu0 0.0
    %3169 = vmatprep.subr.mxu0 0.0
    %3170 = vmatpush1.msra.mxu0 0.0
    %3171 = vmatprep.subr.mxu0 0.0
    %3172 = vmatpush1.msra.mxu0 0.0
    %3173 = vmatprep.subr.mxu0 0.0
    %3174 = vmatpush1.msra.mxu0 0.0
    %3175 = vmatprep.subr.mxu0 0.0
    %3176 = vmatpush1.msra.mxu0 0.0
    %3177 = vmatprep.subr.mxu0 0.0
    %3178 = vmatpush1.msra.mxu0 0.0
    %3179 = vmatprep.subr.mxu0 0.0
    %3180 = vmatpush1.msra.mxu0 0.0
    %3181 = vmatprep.subr.mxu0 0.0
    %3182 = vmatpush1.msra.mxu0 0.0
    %3183 = vmatprep.subr.mxu0 0.0
    %3184 = vmatpush1.msra.mxu0 0.0
    %3185 = vmatprep.subr.mxu0 0.0
    %3186 = vmatpush1.msra.mxu0 0.0
    %3187 = vmatprep.subr.mxu0 0.0
    %3188 = vmatpush1.msra.mxu0 0.0
    %3189 = vmatprep.subr.mxu0 0.0
    %3190 = vmatpush1.msra.mxu0 0.0
    %3191 = vmatprep.subr.mxu0 0.0
    %3192 = vmatpush1.msra.mxu0 %v974
    %3193 = vmatprep.subr.mxu0 0.0
    %3194 = vmatpush2.msra.mxu0 0.0
    %3195 = vmatprep.subr.mxu0 0.0
    %3196 = vmatpush2.msra.mxu0 0.0
    %3197 = vmatprep.subr.mxu0 0.0
    %3198 = vmatpush2.msra.mxu0 0.0
    %3199 = vmatprep.subr.mxu0 0.0
    %3200 = vmatpush2.msra.mxu0 0.0
    %3201 = vmatprep.subr.mxu0 0.0
    %3202 = vmatpush2.msra.mxu0 0.0
    %3203 = vmatprep.subr.mxu0 0.0
    %3204 = vmatpush2.msra.mxu0 0.0
    %3205 = vmatprep.subr.mxu0 0.0
    %3206 = vmatpush2.msra.mxu0 0.0
    %3207 = vmatprep.subr.mxu0 0.0
    %3208 = vmatpush2.msra.mxu0 0.0
    %3209 = vmatprep.subr.mxu0 0.0
    %3210 = vmatpush2.msra.mxu0 0.0
    %3211 = vmatprep.subr.mxu0 0.0
    %3212 = vmatpush2.msra.mxu0 0.0
    %3213 = vmatprep.subr.mxu0 0.0
    %3214 = vmatpush2.msra.mxu0 0.0
    %3215 = vmatprep.subr.mxu0 0.0
    %3216 = vmatpush2.msra.mxu0 0.0
    %3217 = vmatprep.subr.mxu0 0.0
    %3218 = vmatpush2.msra.mxu0 0.0
    %3219 = vmatprep.subr.mxu0 0.0
    %3220 = vmatpush2.msra.mxu0 0.0
    %3221 = vmatprep.subr.mxu0 0.0
    %3222 = vmatpush2.msra.mxu0 0.0
    %3223 = vmatprep.subr.mxu0 0.0
    %3224 = vmatpush2.msra.mxu0 0.0
    %3225 = vmatprep.mubr.f32.mxu0 0.0
    %3226 = vmatmul.mubr.f32.gmra.mxu0 %v3159
    %v3227 = vpop.f32.mrf.mxu0
    %v3228 = vadd.f32 0.0, %v3227
    %v3229 = vpop.f32.mrf.mxu0
    %3230 = vdwg.mxu0
    %v3232 = vsel %vm2178, %v2351, 0
    %3234 = vmatprep.subr.mxu0 0.0
    %3235 = vmatpush1.msra.mxu0 0.0
    %3236 = vmatprep.subr.mxu0 0.0
    %3237 = vmatpush1.msra.mxu0 0.0
    %3238 = vmatprep.subr.mxu0 0.0
    %3239 = vmatpush1.msra.mxu0 0.0
    %3240 = vmatprep.subr.mxu0 0.0
    %3241 = vmatpush1.msra.mxu0 0.0
    %3242 = vmatprep.subr.mxu0 0.0
    %3243 = vmatpush1.msra.mxu0 0.0
    %3244 = vmatprep.subr.mxu0 0.0
    %3245 = vmatpush1.msra.mxu0 0.0
    %3246 = vmatprep.subr.mxu0 0.0
    %3247 = vmatpush1.msra.mxu0 0.0
    %3248 = vmatprep.subr.mxu0 0.0
    %3249 = vmatpush1.msra.mxu0 0.0
    %3250 = vmatprep.subr.mxu0 0.0
    %3251 = vmatpush1.msra.mxu0 0.0
    %3252 = vmatprep.subr.mxu0 0.0
    %3253 = vmatpush1.msra.mxu0 0.0
    %3254 = vmatprep.subr.mxu0 0.0
    %3255 = vmatpush1.msra.mxu0 0.0
    %3256 = vmatprep.subr.mxu0 0.0
    %3257 = vmatpush1.msra.mxu0 0.0
    %3258 = vmatprep.subr.mxu0 0.0
    %3259 = vmatpush1.msra.mxu0 0.0
    %3260 = vmatprep.subr.mxu0 0.0
    %3261 = vmatpush1.msra.mxu0 0.0
    %3262 = vmatprep.subr.mxu0 0.0
    %3263 = vmatpush1.msra.mxu0 0.0
    %3264 = vmatprep.subr.mxu0 0.0
    %3265 = vmatpush1.msra.mxu0 %v969
    %3266 = vmatprep.subr.mxu0 0.0
    %3267 = vmatpush2.msra.mxu0 0.0
    %3268 = vmatprep.subr.mxu0 0.0
    %3269 = vmatpush2.msra.mxu0 0.0
    %3270 = vmatprep.subr.mxu0 0.0
    %3271 = vmatpush2.msra.mxu0 0.0
    %3272 = vmatprep.subr.mxu0 0.0
    %3273 = vmatpush2.msra.mxu0 0.0
    %3274 = vmatprep.subr.mxu0 0.0
    %3275 = vmatpush2.msra.mxu0 0.0
    %3276 = vmatprep.subr.mxu0 0.0
    %3277 = vmatpush2.msra.mxu0 0.0
    %3278 = vmatprep.subr.mxu0 0.0
    %3279 = vmatpush2.msra.mxu0 0.0
    %3280 = vmatprep.subr.mxu0 0.0
    %3281 = vmatpush2.msra.mxu0 0.0
    %3282 = vmatprep.subr.mxu0 0.0
    %3283 = vmatpush2.msra.mxu0 0.0
    %3284 = vmatprep.subr.mxu0 0.0
    %3285 = vmatpush2.msra.mxu0 0.0
    %3286 = vmatprep.subr.mxu0 0.0
    %3287 = vmatpush2.msra.mxu0 0.0
    %3288 = vmatprep.subr.mxu0 0.0
    %3289 = vmatpush2.msra.mxu0 0.0
    %3290 = vmatprep.subr.mxu0 0.0
    %3291 = vmatpush2.msra.mxu0 0.0
    %3292 = vmatprep.subr.mxu0 0.0
    %3293 = vmatpush2.msra.mxu0 0.0
    %3294 = vmatprep.subr.mxu0 0.0
    %3295 = vmatpush2.msra.mxu0 0.0
    %3296 = vmatprep.subr.mxu0 0.0
    %3297 = vmatpush2.msra.mxu0 0.0
    %3298 = vmatprep.mubr.f32.mxu0 0.0
    %3299 = vmatmul.mubr.f32.gmra.mxu0 %v3232
    %v3300 = vpop.f32.mrf.mxu0
    %v3301 = vadd.f32 0.0, %v3300
    %v3302 = vpop.f32.mrf.mxu0
    %3303 = vdwg.mxu0
    %v3305 = vsel %vm2178, %v2352, 0
    %3307 = vmatprep.subr.mxu0 0.0
    %3308 = vmatpush1.msra.mxu0 0.0
    %3309 = vmatprep.subr.mxu0 0.0
    %3310 = vmatpush1.msra.mxu0 0.0
    %3311 = vmatprep.subr.mxu0 0.0
    %3312 = vmatpush1.msra.mxu0 0.0
    %3313 = vmatprep.subr.mxu0 0.0
    %3314 = vmatpush1.msra.mxu0 0.0
    %3315 = vmatprep.subr.mxu0 0.0
    %3316 = vmatpush1.msra.mxu0 0.0
    %3317 = vmatprep.subr.mxu0 0.0
    %3318 = vmatpush1.msra.mxu0 0.0
    %3319 = vmatprep.subr.mxu0 0.0
    %3320 = vmatpush1.msra.mxu0 0.0
    %3321 = vmatprep.subr.mxu0 0.0
    %3322 = vmatpush1.msra.mxu0 0.0
    %3323 = vmatprep.subr.mxu0 0.0
    %3324 = vmatpush1.msra.mxu0 0.0
    %3325 = vmatprep.subr.mxu0 0.0
    %3326 = vmatpush1.msra.mxu0 0.0
    %3327 = vmatprep.subr.mxu0 0.0
    %3328 = vmatpush1.msra.mxu0 0.0
    %3329 = vmatprep.subr.mxu0 0.0
    %3330 = vmatpush1.msra.mxu0 0.0
    %3331 = vmatprep.subr.mxu0 0.0
    %3332 = vmatpush1.msra.mxu0 0.0
    %3333 = vmatprep.subr.mxu0 0.0
    %3334 = vmatpush1.msra.mxu0 0.0
    %3335 = vmatprep.subr.mxu0 0.0
    %3336 = vmatpush1.msra.mxu0 0.0
    %3337 = vmatprep.subr.mxu0 0.0
    %3338 = vmatpush1.msra.mxu0 %v974
    %3339 = vmatprep.subr.mxu0 0.0
    %3340 = vmatpush2.msra.mxu0 0.0
    %3341 = vmatprep.subr.mxu0 0.0
    %3342 = vmatpush2.msra.mxu0 0.0
    %3343 = vmatprep.subr.mxu0 0.0
    %3344 = vmatpush2.msra.mxu0 0.0
    %3345 = vmatprep.subr.mxu0 0.0
    %3346 = vmatpush2.msra.mxu0 0.0
    %3347 = vmatprep.subr.mxu0 0.0
    %3348 = vmatpush2.msra.mxu0 0.0
    %3349 = vmatprep.subr.mxu0 0.0
    %3350 = vmatpush2.msra.mxu0 0.0
    %3351 = vmatprep.subr.mxu0 0.0
    %3352 = vmatpush2.msra.mxu0 0.0
    %3353 = vmatprep.subr.mxu0 0.0
    %3354 = vmatpush2.msra.mxu0 0.0
    %3355 = vmatprep.subr.mxu0 0.0
    %3356 = vmatpush2.msra.mxu0 0.0
    %3357 = vmatprep.subr.mxu0 0.0
    %3358 = vmatpush2.msra.mxu0 0.0
    %3359 = vmatprep.subr.mxu0 0.0
    %3360 = vmatpush2.msra.mxu0 0.0
    %3361 = vmatprep.subr.mxu0 0.0
    %3362 = vmatpush2.msra.mxu0 0.0
    %3363 = vmatprep.subr.mxu0 0.0
    %3364 = vmatpush2.msra.mxu0 0.0
    %3365 = vmatprep.subr.mxu0 0.0
    %3366 = vmatpush2.msra.mxu0 0.0
    %3367 = vmatprep.subr.mxu0 0.0
    %3368 = vmatpush2.msra.mxu0 0.0
    %3369 = vmatprep.subr.mxu0 0.0
    %3370 = vmatpush2.msra.mxu0 0.0
    %3371 = vmatprep.mubr.f32.mxu0 0.0
    %3372 = vmatmul.mubr.f32.gmra.mxu0 %v3305
    %v3373 = vpop.f32.mrf.mxu0
    %v3374 = vadd.f32 0.0, %v3373
    %v3375 = vpop.f32.mrf.mxu0
    %3376 = vdwg.mxu0
    %v3378 = vsel %vm2178, %v2353, 0
    %3380 = vmatprep.subr.mxu0 0.0
    %3381 = vmatpush1.msra.mxu0 0.0
    %3382 = vmatprep.subr.mxu0 0.0
    %3383 = vmatpush1.msra.mxu0 0.0
    %3384 = vmatprep.subr.mxu0 0.0
    %3385 = vmatpush1.msra.mxu0 0.0
    %3386 = vmatprep.subr.mxu0 0.0
    %3387 = vmatpush1.msra.mxu0 0.0
    %3388 = vmatprep.subr.mxu0 0.0
    %3389 = vmatpush1.msra.mxu0 0.0
    %3390 = vmatprep.subr.mxu0 0.0
    %3391 = vmatpush1.msra.mxu0 0.0
    %3392 = vmatprep.subr.mxu0 0.0
    %3393 = vmatpush1.msra.mxu0 0.0
    %3394 = vmatprep.subr.mxu0 0.0
    %3395 = vmatpush1.msra.mxu0 0.0
    %3396 = vmatprep.subr.mxu0 0.0
    %3397 = vmatpush1.msra.mxu0 0.0
    %3398 = vmatprep.subr.mxu0 0.0
    %3399 = vmatpush1.msra.mxu0 0.0
    %3400 = vmatprep.subr.mxu0 0.0
    %3401 = vmatpush1.msra.mxu0 0.0
    %3402 = vmatprep.subr.mxu0 0.0
    %3403 = vmatpush1.msra.mxu0 0.0
    %3404 = vmatprep.subr.mxu0 0.0
    %3405 = vmatpush1.msra.mxu0 0.0
    %3406 = vmatprep.subr.mxu0 0.0
    %3407 = vmatpush1.msra.mxu0 0.0
    %3408 = vmatprep.subr.mxu0 0.0
    %3409 = vmatpush1.msra.mxu0 0.0
    %3410 = vmatprep.subr.mxu0 0.0
    %3411 = vmatpush1.msra.mxu0 %v969
    %3412 = vmatprep.subr.mxu0 0.0
    %3413 = vmatpush2.msra.mxu0 0.0
    %3414 = vmatprep.subr.mxu0 0.0
    %3415 = vmatpush2.msra.mxu0 0.0
    %3416 = vmatprep.subr.mxu0 0.0
    %3417 = vmatpush2.msra.mxu0 0.0
    %3418 = vmatprep.subr.mxu0 0.0
    %3419 = vmatpush2.msra.mxu0 0.0
    %3420 = vmatprep.subr.mxu0 0.0
    %3421 = vmatpush2.msra.mxu0 0.0
    %3422 = vmatprep.subr.mxu0 0.0
    %3423 = vmatpush2.msra.mxu0 0.0
    %3424 = vmatprep.subr.mxu0 0.0
    %3425 = vmatpush2.msra.mxu0 0.0
    %3426 = vmatprep.subr.mxu0 0.0
    %3427 = vmatpush2.msra.mxu0 0.0
    %3428 = vmatprep.subr.mxu0 0.0
    %3429 = vmatpush2.msra.mxu0 0.0
    %3430 = vmatprep.subr.mxu0 0.0
    %3431 = vmatpush2.msra.mxu0 0.0
    %3432 = vmatprep.subr.mxu0 0.0
    %3433 = vmatpush2.msra.mxu0 0.0
    %3434 = vmatprep.subr.mxu0 0.0
    %3435 = vmatpush2.msra.mxu0 0.0
    %3436 = vmatprep.subr.mxu0 0.0
    %3437 = vmatpush2.msra.mxu0 0.0
    %3438 = vmatprep.subr.mxu0 0.0
    %3439 = vmatpush2.msra.mxu0 0.0
    %3440 = vmatprep.subr.mxu0 0.0
    %3441 = vmatpush2.msra.mxu0 0.0
    %3442 = vmatprep.subr.mxu0 0.0
    %3443 = vmatpush2.msra.mxu0 0.0
    %3444 = vmatprep.mubr.f32.mxu0 0.0
    %3445 = vmatmul.mubr.f32.gmra.mxu0 %v3378
    %v3446 = vpop.f32.mrf.mxu0
    %v3447 = vadd.f32 0.0, %v3446
    %v3448 = vpop.f32.mrf.mxu0
    %3449 = vdwg.mxu0
    %v3451 = vsel %vm2178, %v2354, 0
    %3453 = vmatprep.subr.mxu0 0.0
    %3454 = vmatpush1.msra.mxu0 0.0
    %3455 = vmatprep.subr.mxu0 0.0
    %3456 = vmatpush1.msra.mxu0 0.0
    %3457 = vmatprep.subr.mxu0 0.0
    %3458 = vmatpush1.msra.mxu0 0.0
    %3459 = vmatprep.subr.mxu0 0.0
    %3460 = vmatpush1.msra.mxu0 0.0
    %3461 = vmatprep.subr.mxu0 0.0
    %3462 = vmatpush1.msra.mxu0 0.0
    %3463 = vmatprep.subr.mxu0 0.0
    %3464 = vmatpush1.msra.mxu0 0.0
    %3465 = vmatprep.subr.mxu0 0.0
    %3466 = vmatpush1.msra.mxu0 0.0
    %3467 = vmatprep.subr.mxu0 0.0
    %3468 = vmatpush1.msra.mxu0 0.0
    %3469 = vmatprep.subr.mxu0 0.0
    %3470 = vmatpush1.msra.mxu0 0.0
    %3471 = vmatprep.subr.mxu0 0.0
    %3472 = vmatpush1.msra.mxu0 0.0
    %3473 = vmatprep.subr.mxu0 0.0
    %3474 = vmatpush1.msra.mxu0 0.0
    %3475 = vmatprep.subr.mxu0 0.0
    %3476 = vmatpush1.msra.mxu0 0.0
    %3477 = vmatprep.subr.mxu0 0.0
    %3478 = vmatpush1.msra.mxu0 0.0
    %3479 = vmatprep.subr.mxu0 0.0
    %3480 = vmatpush1.msra.mxu0 0.0
    %3481 = vmatprep.subr.mxu0 0.0
    %3482 = vmatpush1.msra.mxu0 0.0
    %3483 = vmatprep.subr.mxu0 0.0
    %3484 = vmatpush1.msra.mxu0 %v974
    %3485 = vmatprep.subr.mxu0 0.0
    %3486 = vmatpush2.msra.mxu0 0.0
    %3487 = vmatprep.subr.mxu0 0.0
    %3488 = vmatpush2.msra.mxu0 0.0
    %3489 = vmatprep.subr.mxu0 0.0
    %3490 = vmatpush2.msra.mxu0 0.0
    %3491 = vmatprep.subr.mxu0 0.0
    %3492 = vmatpush2.msra.mxu0 0.0
    %3493 = vmatprep.subr.mxu0 0.0
    %3494 = vmatpush2.msra.mxu0 0.0
    %3495 = vmatprep.subr.mxu0 0.0
    %3496 = vmatpush2.msra.mxu0 0.0
    %3497 = vmatprep.subr.mxu0 0.0
    %3498 = vmatpush2.msra.mxu0 0.0
    %3499 = vmatprep.subr.mxu0 0.0
    %3500 = vmatpush2.msra.mxu0 0.0
    %3501 = vmatprep.subr.mxu0 0.0
    %3502 = vmatpush2.msra.mxu0 0.0
    %3503 = vmatprep.subr.mxu0 0.0
    %3504 = vmatpush2.msra.mxu0 0.0
    %3505 = vmatprep.subr.mxu0 0.0
    %3506 = vmatpush2.msra.mxu0 0.0
    %3507 = vmatprep.subr.mxu0 0.0
    %3508 = vmatpush2.msra.mxu0 0.0
    %3509 = vmatprep.subr.mxu0 0.0
    %3510 = vmatpush2.msra.mxu0 0.0
    %3511 = vmatprep.subr.mxu0 0.0
    %3512 = vmatpush2.msra.mxu0 0.0
    %3513 = vmatprep.subr.mxu0 0.0
    %3514 = vmatpush2.msra.mxu0 0.0
    %3515 = vmatprep.subr.mxu0 0.0
    %3516 = vmatpush2.msra.mxu0 0.0
    %3517 = vmatprep.mubr.f32.mxu0 0.0
    %3518 = vmatmul.mubr.f32.gmra.mxu0 %v3451
    %v3519 = vpop.f32.mrf.mxu0
    %v3520 = vadd.f32 0.0, %v3519
    %v3521 = vpop.f32.mrf.mxu0
    %3522 = vdwg.mxu0
    %3525 = vrot.lane.b32.xlu0 %v2571, 64
    %v3526 = vpop.permute.xlu0 %3525
    %3527 = vrot.lane.b32.xlu0 %v2644, 64
    %v3528 = vpop.permute.xlu0 %3527
    %3533 = vrot.lane.b32.xlu0 %v2863, 64
    %v3534 = vpop.permute.xlu0 %3533
    %3535 = vrot.lane.b32.xlu0 %v2936, 64
    %v3536 = vpop.permute.xlu0 %3535
    %3541 = vrot.lane.b32.xlu0 %v3155, 64
    %v3542 = vpop.permute.xlu0 %3541
    %3543 = vrot.lane.b32.xlu0 %v3228, 64
    %v3544 = vpop.permute.xlu0 %3543
    %3549 = vrot.lane.b32.xlu0 %v3447, 64
    %v3550 = vpop.permute.xlu0 %3549
    %3551 = vrot.lane.b32.xlu0 %v3520, 64
    %v3552 = vpop.permute.xlu0 %3551
    %v3555 = vsel %vm997, %v2425, %v3526
    %v3556 = vsel %vm997, %v2498, %v3528
    %v3557 = vsel %vm997, %v2717, %v3534
    %v3558 = vsel %vm997, %v2790, %v3536
    %v3559 = vsel %vm997, %v3009, %v3542
    %v3560 = vsel %vm997, %v3082, %v3544
    %v3561 = vsel %vm997, %v3301, %v3550
    %v3562 = vsel %vm997, %v3374, %v3552
    %v3563 = vld [vmem:[%s2] sm:$0xff]
    %v3564 = vld [vmem:[%s2 + $0x8] sm:$0xff]
    %v3565 = vld [vmem:[%s2 + $0x10] sm:$0xff]
    %v3566 = vld [vmem:[%s2 + $0x18] sm:$0xff]
    %v3567 = vld [vmem:[%s2 + $0x20] sm:$0xff]
    %v3568 = vld [vmem:[%s2 + $0x28] sm:$0xff]
    %v3569 = vld [vmem:[%s2 + $0x30] sm:$0xff]
    %v3570 = vld [vmem:[%s2 + $0x38] sm:$0xff]
    %v3571 = vld [vmem:[%s2 + $0x40] sm:$0xff]
    %v3572 = vld [vmem:[%s2 + $0x48] sm:$0xff]
    %v3573 = vld [vmem:[%s2 + $0x50] sm:$0xff]
    %v3574 = vld [vmem:[%s2 + $0x58] sm:$0xff]
    %v3575 = vld [vmem:[%s2 + $0x60] sm:$0xff]
    %v3576 = vld [vmem:[%s2 + $0x68] sm:$0xff]
    %v3577 = vld [vmem:[%s2 + $0x70] sm:$0xff]
    %v3578 = vld [vmem:[%s2 + $0x78] sm:$0xff]
    %v3579 = vld [vmem:[%s2 + $0x80] sm:$0xff]
    %v3580 = vld [vmem:[%s2 + $0x88] sm:$0xff]
    %v3581 = vld [vmem:[%s2 + $0x90] sm:$0xff]
    %v3582 = vld [vmem:[%s2 + $0x98] sm:$0xff]
    %v3583 = vld [vmem:[%s2 + $0xa0] sm:$0xff]
    %v3584 = vld [vmem:[%s2 + $0xa8] sm:$0xff]
    %v3585 = vld [vmem:[%s2 + $0xb0] sm:$0xff]
    %v3586 = vld [vmem:[%s2 + $0xb8] sm:$0xff]
    %v3587 = vld [vmem:[%s2 + $0xc0] sm:$0xff]
    %v3588 = vld [vmem:[%s2 + $0xc8] sm:$0xff]
    %v3589 = vld [vmem:[%s2 + $0xd0] sm:$0xff]
    %v3590 = vld [vmem:[%s2 + $0xd8] sm:$0xff]
    %v3591 = vld [vmem:[%s2 + $0xe0] sm:$0xff]
    %v3592 = vld [vmem:[%s2 + $0xe8] sm:$0xff]
    %v3593 = vld [vmem:[%s2 + $0xf0] sm:$0xff]
    %v3594 = vld [vmem:[%s2 + $0xf8] sm:$0xff]
    %v3595 = vld [vmem:[%s2 + $0x100] sm:$0xff]
    %v3596 = vld [vmem:[%s2 + $0x108] sm:$0xff]
    %v3597 = vld [vmem:[%s2 + $0x110] sm:$0xff]
    %v3598 = vld [vmem:[%s2 + $0x118] sm:$0xff]
    %v3599 = vld [vmem:[%s2 + $0x120] sm:$0xff]
    %v3600 = vld [vmem:[%s2 + $0x128] sm:$0xff]
    %v3601 = vld [vmem:[%s2 + $0x130] sm:$0xff]
    %v3602 = vld [vmem:[%s2 + $0x138] sm:$0xff]
    %v3603 = vld [vmem:[%s2 + $0x140] sm:$0xff]
    %v3604 = vld [vmem:[%s2 + $0x148] sm:$0xff]
    %v3605 = vld [vmem:[%s2 + $0x150] sm:$0xff]
    %v3606 = vld [vmem:[%s2 + $0x158] sm:$0xff]
    %v3607 = vld [vmem:[%s2 + $0x160] sm:$0xff]
    %v3608 = vld [vmem:[%s2 + $0x168] sm:$0xff]
    %v3609 = vld [vmem:[%s2 + $0x170] sm:$0xff]
    %v3610 = vld [vmem:[%s2 + $0x178] sm:$0xff]
    %v3611 = vld [vmem:[%s2 + $0x180] sm:$0xff]
    %v3612 = vld [vmem:[%s2 + $0x188] sm:$0xff]
    %v3613 = vld [vmem:[%s2 + $0x190] sm:$0xff]
    %v3614 = vld [vmem:[%s2 + $0x198] sm:$0xff]
    %v3615 = vld [vmem:[%s2 + $0x1a0] sm:$0xff]
    %v3616 = vld [vmem:[%s2 + $0x1a8] sm:$0xff]
    %v3617 = vld [vmem:[%s2 + $0x1b0] sm:$0xff]
    %v3618 = vld [vmem:[%s2 + $0x1b8] sm:$0xff]
    %v3619 = vld [vmem:[%s2 + $0x1c0] sm:$0xff]
    %v3620 = vld [vmem:[%s2 + $0x1c8] sm:$0xff]
    %v3621 = vld [vmem:[%s2 + $0x1d0] sm:$0xff]
    %v3622 = vld [vmem:[%s2 + $0x1d8] sm:$0xff]
    %v3623 = vld [vmem:[%s2 + $0x1e0] sm:$0xff]
    %v3624 = vld [vmem:[%s2 + $0x1e8] sm:$0xff]
    %v3625 = vld [vmem:[%s2 + $0x1f0] sm:$0xff]
    %v3626 = vld [vmem:[%s2 + $0x1f8] sm:$0xff]
    %3627 = vmatprep.subr.mxu0 0.0
    %3628 = vmatpush1.msra.mxu0 %v3578
    %3629 = vmatprep.subr.mxu0 0.0
    %3630 = vmatpush1.msra.mxu0 %v3577
    %3631 = vmatprep.subr.mxu0 0.0
    %3632 = vmatpush1.msra.mxu0 %v3576
    %3633 = vmatprep.subr.mxu0 0.0
    %3634 = vmatpush1.msra.mxu0 %v3575
    %3635 = vmatprep.subr.mxu0 0.0
    %3636 = vmatpush1.msra.mxu0 %v3574
    %3637 = vmatprep.subr.mxu0 0.0
    %3638 = vmatpush1.msra.mxu0 %v3573
    %3639 = vmatprep.subr.mxu0 0.0
    %3640 = vmatpush1.msra.mxu0 %v3572
    %3641 = vmatprep.subr.mxu0 0.0
    %3642 = vmatpush1.msra.mxu0 %v3571
    %3643 = vmatprep.subr.mxu0 0.0
    %3644 = vmatpush1.msra.mxu0 %v3570
    %3645 = vmatprep.subr.mxu0 0.0
    %3646 = vmatpush1.msra.mxu0 %v3569
    %3647 = vmatprep.subr.mxu0 0.0
    %3648 = vmatpush1.msra.mxu0 %v3568
    %3649 = vmatprep.subr.mxu0 0.0
    %3650 = vmatpush1.msra.mxu0 %v3567
    %3651 = vmatprep.subr.mxu0 0.0
    %3652 = vmatpush1.msra.mxu0 %v3566
    %3653 = vmatprep.subr.mxu0 0.0
    %3654 = vmatpush1.msra.mxu0 %v3565
    %3655 = vmatprep.subr.mxu0 0.0
    %3656 = vmatpush1.msra.mxu0 %v3564
    %3657 = vmatprep.subr.mxu0 0.0
    %3658 = vmatpush1.msra.mxu0 %v3563
    %3659 = vmatprep.subr.mxu0 0.0
    %3660 = vmatpush2.msra.mxu0 %v3594
    %3661 = vmatprep.subr.mxu0 0.0
    %3662 = vmatpush2.msra.mxu0 %v3593
    %3663 = vmatprep.subr.mxu0 0.0
    %3664 = vmatpush2.msra.mxu0 %v3592
    %3665 = vmatprep.subr.mxu0 0.0
    %3666 = vmatpush2.msra.mxu0 %v3591
    %3667 = vmatprep.subr.mxu0 0.0
    %3668 = vmatpush2.msra.mxu0 %v3590
    %3669 = vmatprep.subr.mxu0 0.0
    %3670 = vmatpush2.msra.mxu0 %v3589
    %3671 = vmatprep.subr.mxu0 0.0
    %3672 = vmatpush2.msra.mxu0 %v3588
    %3673 = vmatprep.subr.mxu0 0.0
    %3674 = vmatpush2.msra.mxu0 %v3587
    %3675 = vmatprep.subr.mxu0 0.0
    %3676 = vmatpush2.msra.mxu0 %v3586
    %3677 = vmatprep.subr.mxu0 0.0
    %3678 = vmatpush2.msra.mxu0 %v3585
    %3679 = vmatprep.subr.mxu0 0.0
    %3680 = vmatpush2.msra.mxu0 %v3584
    %3681 = vmatprep.subr.mxu0 0.0
    %3682 = vmatpush2.msra.mxu0 %v3583
    %3683 = vmatprep.subr.mxu0 0.0
    %3684 = vmatpush2.msra.mxu0 %v3582
    %3685 = vmatprep.subr.mxu0 0.0
    %3686 = vmatpush2.msra.mxu0 %v3581
    %3687 = vmatprep.subr.mxu0 0.0
    %3688 = vmatpush2.msra.mxu0 %v3580
    %3689 = vmatprep.subr.mxu0 0.0
    %3690 = vmatpush2.msra.mxu0 %v3579
    %3691 = vmatprep.mubr.f32.mxu0 %v3557
    %3692 = vmatmul.mubr.f32.gmra.mxu0 %v3555
    %v3693 = vpop.f32.mrf.mxu0
    %v3694 = vadd.f32 0.0, %v3693
    %v3695 = vpop.f32.mrf.mxu0
    %3696 = vmatprep.mubr.f32.mxu0 %v3558
    %3697 = vmatmul.mubr.f32.gmra.mxu0 %v3556
    %v3698 = vpop.f32.mrf.mxu0
    %v3699 = vadd.f32 0.0, %v3698
    %v3700 = vpop.f32.mrf.mxu0
    %3701 = vdwg.mxu0
    %3702 = vmatprep.subr.mxu0 0.0
    %3703 = vmatpush1.msra.mxu0 %v3610
    %3704 = vmatprep.subr.mxu0 0.0
    %3705 = vmatpush1.msra.mxu0 %v3609
    %3706 = vmatprep.subr.mxu0 0.0
    %3707 = vmatpush1.msra.mxu0 %v3608
    %3708 = vmatprep.subr.mxu0 0.0
    %3709 = vmatpush1.msra.mxu0 %v3607
    %3710 = vmatprep.subr.mxu0 0.0
    %3711 = vmatpush1.msra.mxu0 %v3606
    %3712 = vmatprep.subr.mxu0 0.0
    %3713 = vmatpush1.msra.mxu0 %v3605
    %3714 = vmatprep.subr.mxu0 0.0
    %3715 = vmatpush1.msra.mxu0 %v3604
    %3716 = vmatprep.subr.mxu0 0.0
    %3717 = vmatpush1.msra.mxu0 %v3603
    %3718 = vmatprep.subr.mxu0 0.0
    %3719 = vmatpush1.msra.mxu0 %v3602
    %3720 = vmatprep.subr.mxu0 0.0
    %3721 = vmatpush1.msra.mxu0 %v3601
    %3722 = vmatprep.subr.mxu0 0.0
    %3723 = vmatpush1.msra.mxu0 %v3600
    %3724 = vmatprep.subr.mxu0 0.0
    %3725 = vmatpush1.msra.mxu0 %v3599
    %3726 = vmatprep.subr.mxu0 0.0
    %3727 = vmatpush1.msra.mxu0 %v3598
    %3728 = vmatprep.subr.mxu0 0.0
    %3729 = vmatpush1.msra.mxu0 %v3597
    %3730 = vmatprep.subr.mxu0 0.0
    %3731 = vmatpush1.msra.mxu0 %v3596
    %3732 = vmatprep.subr.mxu0 0.0
    %3733 = vmatpush1.msra.mxu0 %v3595
    %3734 = vmatprep.subr.mxu0 0.0
    %3735 = vmatpush2.msra.mxu0 %v3626
    %3736 = vmatprep.subr.mxu0 0.0
    %3737 = vmatpush2.msra.mxu0 %v3625
    %3738 = vmatprep.subr.mxu0 0.0
    %3739 = vmatpush2.msra.mxu0 %v3624
    %3740 = vmatprep.subr.mxu0 0.0
    %3741 = vmatpush2.msra.mxu0 %v3623
    %3742 = vmatprep.subr.mxu0 0.0
    %3743 = vmatpush2.msra.mxu0 %v3622
    %3744 = vmatprep.subr.mxu0 0.0
    %3745 = vmatpush2.msra.mxu0 %v3621
    %3746 = vmatprep.subr.mxu0 0.0
    %3747 = vmatpush2.msra.mxu0 %v3620
    %3748 = vmatprep.subr.mxu0 0.0
    %3749 = vmatpush2.msra.mxu0 %v3619
    %3750 = vmatprep.subr.mxu0 0.0
    %3751 = vmatpush2.msra.mxu0 %v3618
    %3752 = vmatprep.subr.mxu0 0.0
    %3753 = vmatpush2.msra.mxu0 %v3617
    %3754 = vmatprep.subr.mxu0 0.0
    %3755 = vmatpush2.msra.mxu0 %v3616
    %3756 = vmatprep.subr.mxu0 0.0
    %3757 = vmatpush2.msra.mxu0 %v3615
    %3758 = vmatprep.subr.mxu0 0.0
    %3759 = vmatpush2.msra.mxu0 %v3614
    %3760 = vmatprep.subr.mxu0 0.0
    %3761 = vmatpush2.msra.mxu0 %v3613
    %3762 = vmatprep.subr.mxu0 0.0
    %3763 = vmatpush2.msra.mxu0 %v3612
    %3764 = vmatprep.subr.mxu0 0.0
    %3765 = vmatpush2.msra.mxu0 %v3611
    %3766 = vmatprep.mubr.f32.mxu0 %v3561
    %3767 = vmatmul.mubr.f32.gmra.mxu0 %v3559
    %v3768 = vpop.f32.mrf.mxu0
    %v3769 = vadd.f32 %v3694, %v3768
    %v3770 = vpop.f32.mrf.mxu0
    %3771 = vmatprep.mubr.f32.mxu0 %v3562
    %3772 = vmatmul.mubr.f32.gmra.mxu0 %v3560
    %v3773 = vpop.f32.mrf.mxu0
    %v3774 = vadd.f32 %v3699, %v3773
    %v3775 = vpop.f32.mrf.mxu0
    %3776 = vdwg.mxu0
    %3777 = vst.msk [vmem:[#allocation2] sm:$0xff] %vm70, %v3769
    %3778 = vst.msk [vmem:[#allocation2 + $0x8] sm:$0xff] %vm70, %v3774
    // Predicated region
    $region18: #{tpu_custom_call.1} parent=1 // pred_check
      _
    $region19: #{tpu_custom_call.1} parent=1 // pred_check_branch
      %3780 = sbr.rel (0) target = $region21
    $region20: #{tpu_custom_call.1} parent=1 // pred_region
      %s3782 = ssub.s32 256, 256
      %3783 = vsyncadd [#allocation3], %s3782
      %s3784 = sshll.u32 [#allocation2], 4
      %s3785 = int_to_ptr.vmem [resolvable:$true] %s3784
      %3790 = dma.vmem_to_hbm [thread:$0]  %s3785, 256, %s4, [#allocation3], 128, 128, 8
    $region21: #{tpu_custom_call.1} parent=1 // pred_fallthru
      _
    // Predicated region
    $region22: #{tpu_custom_call.1} parent=1 // pred_check
      _
    $region23: #{tpu_custom_call.1} parent=1 // pred_check_branch
      %3792 = sbr.rel (0) target = $region25
    $region24: #{tpu_custom_call.1} parent=1 // pred_region
      %3793 = dma.done [#allocation3], 256
    $region25: #{tpu_custom_call.1} parent=1 // pred_fallthru
      _
    %3794 = vsyncpa [#allocation3], 1

</llo_original>
